<compile_context>
chip_gen: v6e
topology: v6e:2x2x1
jax: 0.10.0
libtpu: 0.0.40
codegen_flags: <defaults>
</compile_context>

<pallas_src>
import jax
import jax.numpy as jnp
import numpy as np
from jax.experimental import pallas as pl
from jax.experimental.pallas import tpu as pltpu

_HI = jax.lax.Precision.HIGHEST  # used only in the pure-JAX reference


def _ceil_to(v, m):
    return -(-v // m) * m


# ----------------------------------------------------------------------------
# Fused kernel factory (compile-time constants captured by closure)
# ----------------------------------------------------------------------------
def make_fused_kernel(C, H, W, HWp, depth, halo):
    HW = H * W
    need_valid = (HWp != HW)
    inv_hw = 1.0 / HW
    inv_hw1 = 1.0 / (HW - 1)

    def _sigmoid(z):
        # Exact sigmoid (review: approx reciprocal not worth the accuracy hit).
        return 1.0 / (1.0 + jnp.exp(-z))

    def _dot(w_bf16, z_f32):
        # Weights are already bf16; activations cast at the MXU boundary only.
        return jnp.dot(w_bf16, z_f32.astype(jnp.bfloat16),
                       preferred_element_type=jnp.float32)

    def kernel(x_ref, feat_ref, map_ref,
               wg1_ref, bg1_ref, wg2_ref, bg2_ref,
               wr_ref, wsr_ref, wf_ref, bin_ref,
               wmid_ref, bmid_ref, wout_ref, bout_ref,
               feat_out_ref, out_ref, pad_ref):
        x = x_ref[0]        # (C, HWp)  channels on sublanes, pixels on lanes
        feat = feat_ref[0]  # (C, HWp)
        m = map_ref[0]      # (1, HWp)

        # --- edge / valid masks (per-pixel, f32) ------------------------------
        pcol = jax.lax.broadcasted_iota(jnp.int32, (1, HWp), 1)
        xc = pcol % W
        mask_l = (xc >= 1).astype(jnp.float32)          # taps with dx = -1
        mask_r = (xc <= W - 2).astype(jnp.float32)      # taps with dx = +1
        if need_valid:
            vmask = (pcol < HW).astype(jnp.float32)     # real (non-padded) pixels

        # --- Foreground_Enhancement: torch.std_mean over spatial (unbiased) ---
        mean = jnp.sum(feat, axis=1, keepdims=True) * inv_hw            # (C,1)
        diff = feat - mean
        sq = diff * diff
        if need_valid:
            sq = sq * vmask
        var = jnp.sum(sq, axis=1, keepdims=True) * inv_hw1
        thr = mean - 2.0 * jnp.sqrt(var)                                 # (C,1)

        # --- fused bg/fg gates: 2 matmuls instead of 4 -------------------------
        d0 = thr - feat                                                  # (C,HWp)
        hmid = jnp.maximum(_dot(wg1_ref[...], d0) + bg1_ref[...], 0.0)   # (2C,HWp)
        g = _sigmoid(_dot(wg2_ref[...], hmid) + bg2_ref[...])            # (2C,HWp)
        f_x = x * (1.0 - g[:C] + g[C:])                 # x - bg*x + fg*x

        # --- conv_in: split (no (3C,HW) concat), BN folded into weights --------
        s_x = _sigmoid(m) * x
        h = (_dot(wr_ref[...], x) + _dot(wsr_ref[...], s_x)
             + _dot(wf_ref[...], f_x) + bin_ref[...])                    # (C,HWp)

        # --- conv_mid: depth x 3x3 "same" conv, 9 accumulated small dots -------
        # Zero only the two halo stripes; the interior is rewritten each layer.
        pad_ref[:, pl.ds(0, halo)] = jnp.zeros((C, halo), jnp.float32)
        pad_ref[:, pl.ds(halo + HWp, halo)] = jnp.zeros((C, halo), jnp.float32)
        for d in range(depth):
            hs = h * vmask if need_valid else h          # keep padded lanes zero
            pad_ref[:, pl.ds(halo, HWp)] = hs            # lane-aligned store
            acc = [None, None, None]                     # grouped by column kx
            for k in range(9):
                ky, kx = divmod(k, 3)
                off = halo + (ky - 1) * W + (kx - 1)     # static lane offset
                t = pad_ref[:, pl.ds(off, HWp)]
                pd = _dot(wmid_ref[d, k], t)             # (C,HWp) partial
                acc[kx] = pd if acc[kx] is None else acc[kx] + pd
            h = acc[1] + mask_l * acc[0] + mask_r * acc[2] + bmid_ref[d]

        # --- head: ReLU -> conv_out (1x1 -> 1 ch, BN folded) -> + map ----------
        h = jnp.maximum(h, 0.0)
        feat_out_ref[0] = h                              # module's `x` output
        out_ref[0] = _dot(wout_ref[...], h) + bout_ref[...] + m

    return kernel


# ----------------------------------------------------------------------------
# Wrapper-side parameter preprocessing (exact folds in f32, then bf16 cast)
# ----------------------------------------------------------------------------
def prepare_params(p):
    bf = jnp.bfloat16
    C = p["win"].shape[0]
    depth = p["wmid"].shape[0]

    # Fused foreground/background gates.
    wg1 = jnp.concatenate([p["wb1"], -p["wf1"]], axis=0)              # (2C, C)
    bg1 = jnp.concatenate([p["bb1"], p["bf1"]], axis=0)               # (2C, 1)
    z = jnp.zeros((C, C), jnp.float32)
    wg2 = jnp.concatenate([jnp.concatenate([p["wb2"], z], axis=1),
                           jnp.concatenate([z, p["wf2"]], axis=1)], axis=0)  # (2C,2C)
    bg2 = jnp.concatenate([p["bb2"], p["bf2"]], axis=0)               # (2C, 1)

    # conv_in split + BN scale fold: h = wr@x + wsr@(s*x) + wf@f_x + bin.
    sin = p["sin"]
    win_s = p["win"][:, 0 * C:1 * C] * sin
    win_r = p["win"][:, 1 * C:2 * C] * sin
    win_f = p["win"][:, 2 * C:3 * C] * sin

    # conv_mid: per-tap (C_out, C_in) blocks, BN scale folded into the rows.
    wmid = p["wmid"].reshape(depth, C, 9, C).transpose(0, 2, 1, 3)    # (d,9,Co,Ci)
    wmid = wmid * p["smid"].reshape(depth, 1, C, 1)

    return dict(
        wg1=wg1.astype(bf), bg1=bg1,
        wg2=wg2.astype(bf), bg2=bg2,
        wr=win_r.astype(bf), wsr=(win_s - win_r).astype(bf), wf=win_f.astype(bf),
        bin=p["bin"],
        wmid=wmid.astype(bf), bmid=p["bmid"],
        wout=(p["wout"] * p["sout"]).astype(bf), bout=p["bout"],
    )


# ----------------------------------------------------------------------------
# pallas_call wrapper
# ----------------------------------------------------------------------------
def fore_attention_fused(x_s, feat_s, map_s, wp, h, w):
    n, c, hwp = x_s.shape
    depth = wp["wmid"].shape[0]
    # halo >= W+1 and a multiple of 128: the interior store stays lane-aligned.
    halo = _ceil_to(w + 1, 128)

    kernel = make_fused_kernel(c, h, w, hwp, depth, halo)
    args = (x_s, feat_s, map_s,
            wp["wg1"], wp["bg1"], wp["wg2"], wp["bg2"],
            wp["wr"], wp["wsr"], wp["wf"], wp["bin"],
            wp["wmid"], wp["bmid"], wp["wout"], wp["bout"])

    def data_spec(ch):
        return pl.BlockSpec((1, ch, hwp), lambda nn: (nn, 0, 0))

    def full_spec(a):
        nd = a.ndim
        return pl.BlockSpec(a.shape, lambda nn, _nd=nd: (0,) * _nd)

    in_specs = [data_spec(c), data_spec(c), data_spec(1)] + \
               [full_spec(a) for a in args[3:]]

    # Explicit VMEM budget: double-buffered per-image blocks + pad scratch +
    # resident weights + live temporaries, with 2x headroom (clamped so it is
    # safe on all generations incl. v7x's 64 MiB physical VMEM).
    weight_bytes = sum(int(a.size) * a.dtype.itemsize for a in args[3:])
    est = (2 * (2 * c + 1 + c + 1) * hwp * 4          # pipelined in/out blocks
           + c * (hwp + 2 * halo) * 4                 # pad scratch
           + weight_bytes
           + 24 * c * hwp * 4)                        # live temporaries
    vmem_limit = int(min(max(2 * est, 32 * 1024 * 1024), 56 * 1024 * 1024))

    return pl.pallas_call(
        kernel,
        out_shape=(jax.ShapeDtypeStruct((n, c, hwp), jnp.float32),
                   jax.ShapeDtypeStruct((n, 1, hwp), jnp.float32)),
        grid=(n,),
        in_specs=in_specs,
        out_specs=(data_spec(c), data_spec(1)),
        scratch_shapes=[pltpu.VMEM((c, hwp + 2 * halo), jnp.float32)],
        compiler_params=pltpu.CompilerParams(
            dimension_semantics=("parallel",),
            vmem_limit_bytes=vmem_limit),
    )(*args)


# ----------------------------------------------------------------------------
# Plain-JAX glue
# ----------------------------------------------------------------------------
def bilinear_resize_nchw(x, out_h, out_w):
    """F.interpolate(..., mode='bilinear', align_corners=False) on NCHW."""
    n, c, in_h, in_w = x.shape

    def src_idx(out_size, in_size):
        scale = in_size / out_size
        d = jnp.arange(out_size, dtype=jnp.float32)
        s = jnp.maximum((d + 0.5) * scale - 0.5, 0.0)
        i0 = jnp.minimum(jnp.floor(s).astype(jnp.int32), in_size - 1)
        i1 = jnp.minimum(i0 + 1, in_size - 1)
        w1 = jnp.clip(s - i0.astype(jnp.float32), 0.0, 1.0)
        return i0, i1, w1

    y0, y1, wy = src_idx(out_h, in_h)
    x0, x1, wx = src_idx(out_w, in_w)
    top = x[:, :, y0, :]
    bot = x[:, :, y1, :]

    def horiz(t):
        return t[..., x0] * (1.0 - wx) + t[..., x1] * wx

    return horiz(top) * (1.0 - wy)[None, None, :, None] + \
           horiz(bot) * wy[None, None, :, None]


def fore_attention_forward(x, feat, mp, params):
    n, c, h, w = x.shape
    hw = h * w
    hwp = _ceil_to(hw, 128)               # lane-dense last dim for any H, W
    feat_up = bilinear_resize_nchw(feat, h, w)
    map_up = bilinear_resize_nchw(mp, h, w)
    # NCHW -> (N, C, H*W): pure reshape (no transpose); pixels on lanes,
    # channels on sublanes -> lane-dense kernel layout.
    x_s = x.reshape(n, c, hw)
    feat_s = feat_up.reshape(n, c, hw)
    map_s = map_up.reshape(n, 1, hw)
    if hwp != hw:
        pad = ((0, 0), (0, 0), (0, hwp - hw))
        x_s = jnp.pad(x_s, pad)
        feat_s = jnp.pad(feat_s, pad)
        map_s = jnp.pad(map_s, pad)

    wp = prepare_params(params)
    feat_out_s, out_s = fore_attention_fused(x_s, feat_s, map_s, wp, h, w)
    feat_out = feat_out_s[:, :, :hw].reshape(n, c, h, w)
    out = out_s[:, :, :hw].reshape(n, 1, h, w)
    return feat_out, out


# ----------------------------------------------------------------------------
# Deterministic parameter init (synthetic; matches module shapes, in_channel==channel)
# ----------------------------------------------------------------------------
def init_params(key, channel, depth=3):
    C = channel
    ks = list(jax.random.split(key, 16))

    def nrm(shape):
        return jax.random.normal(ks.pop(), shape, jnp.float32) * 0.1

    eps = 1e-5
    bn_scale = float(1.0 / np.sqrt(1.0 + eps))   # gamma=1, running_var=1
    bn_bias = 0.0                                # beta=0, running_mean=0
    return dict(
        # Foreground_Enhancement: bg_gen / fg_gen (1x1 convs, weights are (out,in))
        wb1=nrm((C, C)), bb1=nrm((C, 1)), wb2=nrm((C, C)), bb2=nrm((C, 1)),
        wf1=nrm((C, C)), bf1=nrm((C, 1)), wf2=nrm((C, C)), bf2=nrm((C, 1)),
        # conv_in: (3C -> C) 1x1 as a single (C, 3C) matrix, channel order [s_x, r_x, f_x]
        win=nrm((C, 3 * C)),
        sin=jnp.full((C, 1), bn_scale, jnp.float32),
        bin=jnp.full((C, 1), bn_bias, jnp.float32),
        # conv_mid: depth x 3x3 conv stored as (C_out, 9*C_in), tap order (ky,kx) major, cin minor
        wmid=nrm((depth, C, 9 * C)),
        smid=jnp.full((depth, C, 1), bn_scale, jnp.float32),
        bmid=jnp.full((depth, C, 1), bn_bias, jnp.float32),
        # conv_out: (C -> 1) 1x1
        wout=nrm((1, C)),
        sout=jnp.full((1, 1), bn_scale, jnp.float32),
        bout=jnp.full((1, 1), bn_bias, jnp.float32),
    )


# ----------------------------------------------------------------------------
# Pure-JAX reference (NCHW, f32 HIGHEST) for correctness check
# ----------------------------------------------------------------------------
def reference_forward(x, feat, mp, p):
    n, c, h, w = x.shape
    feat_up = bilinear_resize_nchw(feat, h, w)
    map_up = bilinear_resize_nchw(mp, h, w)

    def conv1x1(z, wmat, bias=None):
        o = jnp.einsum('oc,nchw->nohw', wmat, z, precision=_HI)
        if bias is not None:
            o = o + bias.reshape(1, -1, 1, 1)
        return o

    mean = jnp.mean(feat_up, axis=(2, 3), keepdims=True)
    var = jnp.sum((feat_up - mean) ** 2, axis=(2, 3), keepdims=True) / (h * w - 1)
    thr = mean - 2.0 * jnp.sqrt(var)

    bg = jax.nn.sigmoid(conv1x1(jnp.maximum(conv1x1(thr - feat_up, p["wb1"], p["bb1"]), 0.0),
                                p["wb2"], p["bb2"]))
    fg = jax.nn.sigmoid(conv1x1(jnp.maximum(conv1x1(feat_up - thr, p["wf1"], p["bf1"]), 0.0),
                                p["wf2"], p["bf2"]))
    f_x = x - bg * x + fg * x

    smap = jax.nn.sigmoid(map_up)
    cat = jnp.concatenate([smap * x, (1.0 - smap) * x, f_x], axis=1)
    hcur = conv1x1(cat, p["win"]) * p["sin"].reshape(1, -1, 1, 1) + p["bin"].reshape(1, -1, 1, 1)

    for d in range(p["wmid"].shape[0]):
        khwio = p["wmid"][d].reshape(c, 3, 3, c).transpose(1, 2, 3, 0)   # (ky,kx,ci,co)
        hcur = jax.lax.conv_general_dilated(
            hcur, khwio, window_strides=(1, 1), padding="SAME",
            dimension_numbers=("NCHW", "HWIO", "NCHW"), precision=_HI)
        hcur = hcur * p["smid"][d].reshape(1, -1, 1, 1) + p["bmid"][d].reshape(1, -1, 1, 1)

    hcur = jnp.maximum(hcur, 0.0)
    out = jnp.einsum('oc,nchw->nohw', p["wout"], hcur, precision=_HI)
    out = out * p["sout"].reshape(1, 1, 1, 1) + p["bout"].reshape(1, 1, 1, 1) + map_up
    return hcur, out


if __name__ == "__main__":
    key = jax.random.PRNGKey(0)
    k1, k2, k3, kp = jax.random.split(key, 4)

    N, C, H, W = 2, 8, 16, 16          # in_channel == channel == 8, depth=3, k=3
    x = jax.random.normal(k1, (N, C, H, W), jnp.float32)
    feat = jax.random.normal(k2, (N, C, H // 2, W // 2), jnp.float32)
    mp = jax.random.normal(k3, (N, 1, H // 2, W // 2), jnp.float32)
    params = init_params(kp, C, depth=3)

    feat_out, out = jax.block_until_ready(
        jax.jit(fore_attention_forward)(x, feat, mp, params))
    ref_feat, ref_out = jax.block_until_ready(reference_forward(x, feat, mp, params))

    assert feat_out.shape == (N, C, H, W) and out.shape == (N, 1, H, W)
    # Tolerance reflects the kernel's bf16 MXU matmuls vs. the f32
    # Precision.HIGHEST pure-JAX reference.
    np.testing.assert_allclose(np.asarray(feat_out), np.asarray(ref_feat),
                               rtol=2e-2, atol=2e-2)
    np.testing.assert_allclose(np.asarray(out), np.asarray(ref_out),
                               rtol=2e-2, atol=2e-2)
    print("KERNEL_OK")
</pallas_src>

<mosaic_0001>
module attributes {stable_mosaic.version = 11 : i64} {
  func.func @kernel(%arg0: i32, %arg1: memref<1x8x256xf32, #tpu.memory_space<vmem>>, %arg2: memref<1x8x256xf32, #tpu.memory_space<vmem>>, %arg3: memref<1x1x256xf32, #tpu.memory_space<vmem>>, %arg4: memref<16x8xbf16, #tpu.memory_space<vmem>>, %arg5: memref<16x1xf32, #tpu.memory_space<vmem>>, %arg6: memref<16x16xbf16, #tpu.memory_space<vmem>>, %arg7: memref<16x1xf32, #tpu.memory_space<vmem>>, %arg8: memref<8x8xbf16, #tpu.memory_space<vmem>>, %arg9: memref<8x8xbf16, #tpu.memory_space<vmem>>, %arg10: memref<8x8xbf16, #tpu.memory_space<vmem>>, %arg11: memref<8x1xf32, #tpu.memory_space<vmem>>, %arg12: memref<3x9x8x8xbf16, #tpu.memory_space<vmem>>, %arg13: memref<3x8x1xf32, #tpu.memory_space<vmem>>, %arg14: memref<1x8xbf16, #tpu.memory_space<vmem>>, %arg15: memref<1x1xf32, #tpu.memory_space<vmem>>, %arg16: memref<1x8x256xf32, #tpu.memory_space<vmem>>, %arg17: memref<1x1x256xf32, #tpu.memory_space<vmem>>, %arg18: memref<8x512xf32, #tpu.memory_space<vmem>>) attributes {dimension_semantics = [#tpu.dimension_semantics<parallel>], iteration_bounds = array<i64: 2>, scalar_prefetch = 0 : i64, scratch_operands = 1 : i64, tpu.core_type = #tpu.core_type<tc>, window_params = [{transform_indices = @transform_0, window_bounds = array<i64: 1, 8, 256>}, {transform_indices = @transform_1, window_bounds = array<i64: 1, 8, 256>}, {transform_indices = @transform_2, window_bounds = array<i64: 1, 1, 256>}, {pipeline_mode = #tpu.pipeline_mode<synchronous>, transform_indices = @transform_3, window_bounds = array<i64: 16, 8>}, {pipeline_mode = #tpu.pipeline_mode<synchronous>, transform_indices = @transform_4, window_bounds = array<i64: 16, 1>}, {pipeline_mode = #tpu.pipeline_mode<synchronous>, transform_indices = @transform_5, window_bounds = array<i64: 16, 16>}, {pipeline_mode = #tpu.pipeline_mode<synchronous>, transform_indices = @transform_6, window_bounds = array<i64: 16, 1>}, {pipeline_mode = #tpu.pipeline_mode<synchronous>, transform_indices = @transform_7, window_bounds = array<i64: 8, 8>}, {pipeline_mode = #tpu.pipeline_mode<synchronous>, transform_indices = @transform_8, window_bounds = array<i64: 8, 8>}, {pipeline_mode = #tpu.pipeline_mode<synchronous>, transform_indices = @transform_9, window_bounds = array<i64: 8, 8>}, {pipeline_mode = #tpu.pipeline_mode<synchronous>, transform_indices = @transform_10, window_bounds = array<i64: 8, 1>}, {pipeline_mode = #tpu.pipeline_mode<synchronous>, transform_indices = @transform_11, window_bounds = array<i64: 3, 9, 8, 8>}, {pipeline_mode = #tpu.pipeline_mode<synchronous>, transform_indices = @transform_12, window_bounds = array<i64: 3, 8, 1>}, {pipeline_mode = #tpu.pipeline_mode<synchronous>, transform_indices = @transform_13, window_bounds = array<i64: 1, 8>}, {pipeline_mode = #tpu.pipeline_mode<synchronous>, transform_indices = @transform_14, window_bounds = array<i64: 1, 1>}, {transform_indices = @transform_15, window_bounds = array<i64: 1, 8, 256>}, {transform_indices = @transform_16, window_bounds = array<i64: 1, 1, 256>}]} {
    %c0 = arith.constant 0 : index
    %c0_0 = arith.constant 0 : index
    %c0_1 = arith.constant 0 : index
    %0 = vector.load %arg1[%c0, %c0_0, %c0_1] : memref<1x8x256xf32, #tpu.memory_space<vmem>>, vector<1x8x256xf32>
    %1 = vector.shape_cast %0 : vector<1x8x256xf32> to vector<8x256xf32>
    %c0_2 = arith.constant 0 : index
    %c0_3 = arith.constant 0 : index
    %c0_4 = arith.constant 0 : index
    %2 = vector.load %arg2[%c0_2, %c0_3, %c0_4] : memref<1x8x256xf32, #tpu.memory_space<vmem>>, vector<1x8x256xf32>
    %3 = vector.shape_cast %2 : vector<1x8x256xf32> to vector<8x256xf32>
    %c0_5 = arith.constant 0 : index
    %c0_6 = arith.constant 0 : index
    %c0_7 = arith.constant 0 : index
    %4 = vector.load %arg3[%c0_5, %c0_6, %c0_7] : memref<1x1x256xf32, #tpu.memory_space<vmem>>, vector<1x1x256xf32>
    %5 = vector.shape_cast %4 : vector<1x1x256xf32> to vector<1x256xf32>
    %6 = tpu.iota {dimensions = array<i32: 1>} : vector<1x256xi32>
    %c16_i32 = arith.constant 16 : i32
    %c0_i32 = arith.constant 0 : i32
    %7 = arith.cmpi eq, %c16_i32, %c0_i32 : i32
    %c1_i32 = arith.constant 1 : i32
    %8 = arith.select %7, %c1_i32, %c16_i32 : i32
    %9 = vector.broadcast %8 : i32 to vector<1x256xi32>
    %10 = arith.remsi %6, %9 : vector<1x256xi32>
    %c0_i32_8 = arith.constant 0 : i32
    %11 = vector.broadcast %c0_i32_8 : i32 to vector<1x256xi32>
    %12 = arith.cmpi ne, %10, %11 : vector<1x256xi32>
    %c0_i32_9 = arith.constant 0 : i32
    %13 = vector.broadcast %c0_i32_9 : i32 to vector<1x256xi32>
    %14 = arith.cmpi slt, %10, %13 : vector<1x256xi32>
    %c0_i32_10 = arith.constant 0 : i32
    %15 = arith.cmpi slt, %8, %c0_i32_10 : i32
    %16 = vector.broadcast %15 : i1 to vector<1x256xi1>
    %17 = vector.broadcast %16 : vector<1x256xi1> to vector<1x256xi1>
    %18 = arith.xori %14, %17 : vector<1x256xi1>
    %19 = arith.andi %18, %12 : vector<1x256xi1>
    %20 = vector.broadcast %8 : i32 to vector<1x256xi32>
    %21 = arith.addi %10, %20 : vector<1x256xi32>
    %22 = arith.select %19, %21, %10 : vector<1x256xi1>, vector<1x256xi32>
    %c1_i32_11 = arith.constant 1 : i32
    %23 = vector.broadcast %c1_i32_11 : i32 to vector<1x256xi32>
    %24 = arith.cmpi sge, %22, %23 : vector<1x256xi32>
    %25 = arith.extui %24 : vector<1x256xi1> to vector<1x256xi32>
    %26 = arith.sitofp %25 : vector<1x256xi32> to vector<1x256xf32>
    %c14_i32 = arith.constant 14 : i32
    %27 = vector.broadcast %c14_i32 : i32 to vector<1x256xi32>
    %28 = arith.cmpi sle, %22, %27 : vector<1x256xi32>
    %29 = arith.extui %28 : vector<1x256xi1> to vector<1x256xi32>
    %30 = arith.sitofp %29 : vector<1x256xi32> to vector<1x256xf32>
    %cst = arith.constant dense<0.000000e+00> : vector<8xf32>
    %31 = vector.multi_reduction <add>, %3, %cst [1] : vector<8x256xf32> to vector<8xf32>
    %32 = vector.shape_cast %31 : vector<8xf32> to vector<8x1xf32>
    %cst_12 = arith.constant 3.906250e-03 : f32
    %33 = vector.broadcast %cst_12 : f32 to vector<8x1xf32>
    %34 = arith.mulf %32, %33 : vector<8x1xf32>
    %35 = vector.broadcast %34 : vector<8x1xf32> to vector<8x256xf32>
    %36 = arith.subf %3, %35 : vector<8x256xf32>
    %37 = arith.mulf %36, %36 : vector<8x256xf32>
    %cst_13 = arith.constant dense<0.000000e+00> : vector<8xf32>
    %38 = vector.multi_reduction <add>, %37, %cst_13 [1] : vector<8x256xf32> to vector<8xf32>
    %39 = vector.shape_cast %38 : vector<8xf32> to vector<8x1xf32>
    %cst_14 = arith.constant 0.00392156886 : f32
    %40 = vector.broadcast %cst_14 : f32 to vector<8x1xf32>
    %41 = arith.mulf %39, %40 : vector<8x1xf32>
    %42 = math.sqrt %41 : vector<8x1xf32>
    %cst_15 = arith.constant 2.000000e+00 : f32
    %43 = vector.broadcast %cst_15 : f32 to vector<8x1xf32>
    %44 = arith.mulf %43, %42 : vector<8x1xf32>
    %45 = arith.subf %34, %44 : vector<8x1xf32>
    %46 = vector.broadcast %45 : vector<8x1xf32> to vector<8x256xf32>
    %47 = arith.subf %46, %3 : vector<8x256xf32>
    %c0_16 = arith.constant 0 : index
    %c0_17 = arith.constant 0 : index
    %48 = vector.load %arg4[%c0_16, %c0_17] : memref<16x8xbf16, #tpu.memory_space<vmem>>, vector<16x8xbf16>
    %49 = arith.truncf %47 : vector<8x256xf32> to vector<8x256xbf16>
    %cst_18 = arith.constant dense<0.000000e+00> : vector<16x256xf32>
    %50 = tpu.matmul %48, %49, %cst_18 {dimension_numbers = #tpu.dot_dimension_numbers<[1], [0], [0], [1], [0, 0, 1, 1], [], []>} : vector<16x8xbf16>, vector<8x256xbf16>, vector<16x256xf32> -> vector<16x256xf32>
    %c0_19 = arith.constant 0 : index
    %c0_20 = arith.constant 0 : index
    %51 = vector.load %arg5[%c0_19, %c0_20] : memref<16x1xf32, #tpu.memory_space<vmem>>, vector<16x1xf32>
    %52 = vector.broadcast %51 : vector<16x1xf32> to vector<16x256xf32>
    %53 = arith.addf %50, %52 : vector<16x256xf32>
    %cst_21 = arith.constant 0.000000e+00 : f32
    %54 = vector.broadcast %cst_21 : f32 to vector<16x256xf32>
    %55 = arith.maximumf %53, %54 : vector<16x256xf32>
    %c0_22 = arith.constant 0 : index
    %c0_23 = arith.constant 0 : index
    %56 = vector.load %arg6[%c0_22, %c0_23] : memref<16x16xbf16, #tpu.memory_space<vmem>>, vector<16x16xbf16>
    %57 = arith.truncf %55 : vector<16x256xf32> to vector<16x256xbf16>
    %cst_24 = arith.constant dense<0.000000e+00> : vector<16x256xf32>
    %58 = tpu.matmul %56, %57, %cst_24 {dimension_numbers = #tpu.dot_dimension_numbers<[1], [0], [0], [1], [0, 0, 1, 1], [], []>} : vector<16x16xbf16>, vector<16x256xbf16>, vector<16x256xf32> -> vector<16x256xf32>
    %c0_25 = arith.constant 0 : index
    %c0_26 = arith.constant 0 : index
    %59 = vector.load %arg7[%c0_25, %c0_26] : memref<16x1xf32, #tpu.memory_space<vmem>>, vector<16x1xf32>
    %60 = vector.broadcast %59 : vector<16x1xf32> to vector<16x256xf32>
    %61 = arith.addf %58, %60 : vector<16x256xf32>
    %cst_27 = arith.constant 0.000000e+00 : f32
    %62 = vector.broadcast %cst_27 : f32 to vector<16x256xf32>
    %63 = arith.subf %62, %61 : vector<16x256xf32>
    %64 = math.exp %63 : vector<16x256xf32>
    %cst_28 = arith.constant 1.000000e+00 : f32
    %65 = vector.broadcast %cst_28 : f32 to vector<16x256xf32>
    %66 = arith.addf %65, %64 : vector<16x256xf32>
    %cst_29 = arith.constant 1.000000e+00 : f32
    %67 = vector.broadcast %cst_29 : f32 to vector<16x256xf32>
    %68 = arith.divf %67, %66 : vector<16x256xf32>
    %69 = vector.extract_strided_slice %68 {offsets = [0, 0], sizes = [8, 256], strides = [1, 1]} : vector<16x256xf32> to vector<8x256xf32>
    %cst_30 = arith.constant 1.000000e+00 : f32
    %70 = vector.broadcast %cst_30 : f32 to vector<8x256xf32>
    %71 = arith.subf %70, %69 : vector<8x256xf32>
    %72 = vector.extract_strided_slice %68 {offsets = [8, 0], sizes = [8, 256], strides = [1, 1]} : vector<16x256xf32> to vector<8x256xf32>
    %73 = arith.addf %71, %72 : vector<8x256xf32>
    %74 = arith.mulf %1, %73 : vector<8x256xf32>
    %cst_31 = arith.constant 0.000000e+00 : f32
    %75 = vector.broadcast %cst_31 : f32 to vector<1x256xf32>
    %76 = arith.subf %75, %5 : vector<1x256xf32>
    %77 = math.exp %76 : vector<1x256xf32>
    %cst_32 = arith.constant 1.000000e+00 : f32
    %78 = vector.broadcast %cst_32 : f32 to vector<1x256xf32>
    %79 = arith.addf %78, %77 : vector<1x256xf32>
    %cst_33 = arith.constant 1.000000e+00 : f32
    %80 = vector.broadcast %cst_33 : f32 to vector<1x256xf32>
    %81 = arith.divf %80, %79 : vector<1x256xf32>
    %82 = vector.broadcast %81 : vector<1x256xf32> to vector<8x256xf32>
    %83 = arith.mulf %82, %1 : vector<8x256xf32>
    %c0_34 = arith.constant 0 : index
    %c0_35 = arith.constant 0 : index
    %84 = vector.load %arg8[%c0_34, %c0_35] : memref<8x8xbf16, #tpu.memory_space<vmem>>, vector<8x8xbf16>
    %85 = arith.truncf %1 : vector<8x256xf32> to vector<8x256xbf16>
    %cst_36 = arith.constant dense<0.000000e+00> : vector<8x256xf32>
    %86 = tpu.matmul %84, %85, %cst_36 {dimension_numbers = #tpu.dot_dimension_numbers<[1], [0], [0], [1], [0, 0, 1, 1], [], []>} : vector<8x8xbf16>, vector<8x256xbf16>, vector<8x256xf32> -> vector<8x256xf32>
    %c0_37 = arith.constant 0 : index
    %c0_38 = arith.constant 0 : index
    %87 = vector.load %arg9[%c0_37, %c0_38] : memref<8x8xbf16, #tpu.memory_space<vmem>>, vector<8x8xbf16>
    %88 = arith.truncf %83 : vector<8x256xf32> to vector<8x256xbf16>
    %cst_39 = arith.constant dense<0.000000e+00> : vector<8x256xf32>
    %89 = tpu.matmul %87, %88, %cst_39 {dimension_numbers = #tpu.dot_dimension_numbers<[1], [0], [0], [1], [0, 0, 1, 1], [], []>} : vector<8x8xbf16>, vector<8x256xbf16>, vector<8x256xf32> -> vector<8x256xf32>
    %90 = arith.addf %86, %89 : vector<8x256xf32>
    %c0_40 = arith.constant 0 : index
    %c0_41 = arith.constant 0 : index
    %91 = vector.load %arg10[%c0_40, %c0_41] : memref<8x8xbf16, #tpu.memory_space<vmem>>, vector<8x8xbf16>
    %92 = arith.truncf %74 : vector<8x256xf32> to vector<8x256xbf16>
    %cst_42 = arith.constant dense<0.000000e+00> : vector<8x256xf32>
    %93 = tpu.matmul %91, %92, %cst_42 {dimension_numbers = #tpu.dot_dimension_numbers<[1], [0], [0], [1], [0, 0, 1, 1], [], []>} : vector<8x8xbf16>, vector<8x256xbf16>, vector<8x256xf32> -> vector<8x256xf32>
    %94 = arith.addf %90, %93 : vector<8x256xf32>
    %c0_43 = arith.constant 0 : index
    %c0_44 = arith.constant 0 : index
    %95 = vector.load %arg11[%c0_43, %c0_44] : memref<8x1xf32, #tpu.memory_space<vmem>>, vector<8x1xf32>
    %96 = vector.broadcast %95 : vector<8x1xf32> to vector<8x256xf32>
    %97 = arith.addf %94, %96 : vector<8x256xf32>
    %cst_45 = arith.constant 0.000000e+00 : f32
    %98 = vector.broadcast %cst_45 : f32 to vector<8x128xf32>
    %c0_46 = arith.constant 0 : index
    %c0_47 = arith.constant 0 : index
    %99 = vector.load %arg18[%c0_46, %c0_47] : memref<8x512xf32, #tpu.memory_space<vmem>>, vector<8x128xf32>
    tpu.vector_store %arg18[%c0_46, %c0_47], %98 {strides = array<i32>} : memref<8x512xf32, #tpu.memory_space<vmem>>, vector<8x128xf32>,
    %cst_48 = arith.constant 0.000000e+00 : f32
    %100 = vector.broadcast %cst_48 : f32 to vector<8x128xf32>
    %c0_49 = arith.constant 0 : index
    %c384 = arith.constant 384 : index
    %101 = vector.load %arg18[%c0_49, %c384] : memref<8x512xf32, #tpu.memory_space<vmem>>, vector<8x128xf32>
    tpu.vector_store %arg18[%c0_49, %c384], %100 {strides = array<i32>} : memref<8x512xf32, #tpu.memory_space<vmem>>, vector<8x128xf32>,
    %c0_50 = arith.constant 0 : index
    %c128 = arith.constant 128 : index
    %102 = vector.load %arg18[%c0_50, %c128] : memref<8x512xf32, #tpu.memory_space<vmem>>, vector<8x256xf32>
    tpu.vector_store %arg18[%c0_50, %c128], %97 {strides = array<i32>} : memref<8x512xf32, #tpu.memory_space<vmem>>, vector<8x256xf32>,
    %c0_51 = arith.constant 0 : index
    %c111 = arith.constant 111 : index
    %103 = vector.load %arg18[%c0_51, %c111] : memref<8x512xf32, #tpu.memory_space<vmem>>, vector<8x256xf32>
    %c0_52 = arith.constant 0 : index
    %c0_53 = arith.constant 0 : index
    %c0_54 = arith.constant 0 : index
    %c0_55 = arith.constant 0 : index
    %104 = vector.load %arg12[%c0_52, %c0_53, %c0_54, %c0_55] : memref<3x9x8x8xbf16, #tpu.memory_space<vmem>>, vector<1x1x8x8xbf16>
    %105 = vector.shape_cast %104 : vector<1x1x8x8xbf16> to vector<8x8xbf16>
    %106 = arith.truncf %103 : vector<8x256xf32> to vector<8x256xbf16>
    %cst_56 = arith.constant dense<0.000000e+00> : vector<8x256xf32>
    %107 = tpu.matmul %105, %106, %cst_56 {dimension_numbers = #tpu.dot_dimension_numbers<[1], [0], [0], [1], [0, 0, 1, 1], [], []>} : vector<8x8xbf16>, vector<8x256xbf16>, vector<8x256xf32> -> vector<8x256xf32>
    %c0_57 = arith.constant 0 : index
    %c112 = arith.constant 112 : index
    %108 = vector.load %arg18[%c0_57, %c112] : memref<8x512xf32, #tpu.memory_space<vmem>>, vector<8x256xf32>
    %c0_58 = arith.constant 0 : index
    %c1 = arith.constant 1 : index
    %c0_59 = arith.constant 0 : index
    %c0_60 = arith.constant 0 : index
    %109 = vector.load %arg12[%c0_58, %c1, %c0_59, %c0_60] : memref<3x9x8x8xbf16, #tpu.memory_space<vmem>>, vector<1x1x8x8xbf16>
    %110 = vector.shape_cast %109 : vector<1x1x8x8xbf16> to vector<8x8xbf16>
    %111 = arith.truncf %108 : vector<8x256xf32> to vector<8x256xbf16>
    %cst_61 = arith.constant dense<0.000000e+00> : vector<8x256xf32>
    %112 = tpu.matmul %110, %111, %cst_61 {dimension_numbers = #tpu.dot_dimension_numbers<[1], [0], [0], [1], [0, 0, 1, 1], [], []>} : vector<8x8xbf16>, vector<8x256xbf16>, vector<8x256xf32> -> vector<8x256xf32>
    %c0_62 = arith.constant 0 : index
    %c113 = arith.constant 113 : index
    %113 = vector.load %arg18[%c0_62, %c113] : memref<8x512xf32, #tpu.memory_space<vmem>>, vector<8x256xf32>
    %c0_63 = arith.constant 0 : index
    %c2 = arith.constant 2 : index
    %c0_64 = arith.constant 0 : index
    %c0_65 = arith.constant 0 : index
    %114 = vector.load %arg12[%c0_63, %c2, %c0_64, %c0_65] : memref<3x9x8x8xbf16, #tpu.memory_space<vmem>>, vector<1x1x8x8xbf16>
    %115 = vector.shape_cast %114 : vector<1x1x8x8xbf16> to vector<8x8xbf16>
    %116 = arith.truncf %113 : vector<8x256xf32> to vector<8x256xbf16>
    %cst_66 = arith.constant dense<0.000000e+00> : vector<8x256xf32>
    %117 = tpu.matmul %115, %116, %cst_66 {dimension_numbers = #tpu.dot_dimension_numbers<[1], [0], [0], [1], [0, 0, 1, 1], [], []>} : vector<8x8xbf16>, vector<8x256xbf16>, vector<8x256xf32> -> vector<8x256xf32>
    %c0_67 = arith.constant 0 : index
    %c127 = arith.constant 127 : index
    %118 = vector.load %arg18[%c0_67, %c127] : memref<8x512xf32, #tpu.memory_space<vmem>>, vector<8x256xf32>
    %c0_68 = arith.constant 0 : index
    %c3 = arith.constant 3 : index
    %c0_69 = arith.constant 0 : index
    %c0_70 = arith.constant 0 : index
    %119 = vector.load %arg12[%c0_68, %c3, %c0_69, %c0_70] : memref<3x9x8x8xbf16, #tpu.memory_space<vmem>>, vector<1x1x8x8xbf16>
    %120 = vector.shape_cast %119 : vector<1x1x8x8xbf16> to vector<8x8xbf16>
    %121 = arith.truncf %118 : vector<8x256xf32> to vector<8x256xbf16>
    %cst_71 = arith.constant dense<0.000000e+00> : vector<8x256xf32>
    %122 = tpu.matmul %120, %121, %cst_71 {dimension_numbers = #tpu.dot_dimension_numbers<[1], [0], [0], [1], [0, 0, 1, 1], [], []>} : vector<8x8xbf16>, vector<8x256xbf16>, vector<8x256xf32> -> vector<8x256xf32>
    %123 = arith.addf %107, %122 : vector<8x256xf32>
    %c0_72 = arith.constant 0 : index
    %c128_73 = arith.constant 128 : index
    %124 = vector.load %arg18[%c0_72, %c128_73] : memref<8x512xf32, #tpu.memory_space<vmem>>, vector<8x256xf32>
    %c0_74 = arith.constant 0 : index
    %c4 = arith.constant 4 : index
    %c0_75 = arith.constant 0 : index
    %c0_76 = arith.constant 0 : index
    %125 = vector.load %arg12[%c0_74, %c4, %c0_75, %c0_76] : memref<3x9x8x8xbf16, #tpu.memory_space<vmem>>, vector<1x1x8x8xbf16>
    %126 = vector.shape_cast %125 : vector<1x1x8x8xbf16> to vector<8x8xbf16>
    %127 = arith.truncf %124 : vector<8x256xf32> to vector<8x256xbf16>
    %cst_77 = arith.constant dense<0.000000e+00> : vector<8x256xf32>
    %128 = tpu.matmul %126, %127, %cst_77 {dimension_numbers = #tpu.dot_dimension_numbers<[1], [0], [0], [1], [0, 0, 1, 1], [], []>} : vector<8x8xbf16>, vector<8x256xbf16>, vector<8x256xf32> -> vector<8x256xf32>
    %129 = arith.addf %112, %128 : vector<8x256xf32>
    %c0_78 = arith.constant 0 : index
    %c129 = arith.constant 129 : index
    %130 = vector.load %arg18[%c0_78, %c129] : memref<8x512xf32, #tpu.memory_space<vmem>>, vector<8x256xf32>
    %c0_79 = arith.constant 0 : index
    %c5 = arith.constant 5 : index
    %c0_80 = arith.constant 0 : index
    %c0_81 = arith.constant 0 : index
    %131 = vector.load %arg12[%c0_79, %c5, %c0_80, %c0_81] : memref<3x9x8x8xbf16, #tpu.memory_space<vmem>>, vector<1x1x8x8xbf16>
    %132 = vector.shape_cast %131 : vector<1x1x8x8xbf16> to vector<8x8xbf16>
    %133 = arith.truncf %130 : vector<8x256xf32> to vector<8x256xbf16>
    %cst_82 = arith.constant dense<0.000000e+00> : vector<8x256xf32>
    %134 = tpu.matmul %132, %133, %cst_82 {dimension_numbers = #tpu.dot_dimension_numbers<[1], [0], [0], [1], [0, 0, 1, 1], [], []>} : vector<8x8xbf16>, vector<8x256xbf16>, vector<8x256xf32> -> vector<8x256xf32>
    %135 = arith.addf %117, %134 : vector<8x256xf32>
    %c0_83 = arith.constant 0 : index
    %c143 = arith.constant 143 : index
    %136 = vector.load %arg18[%c0_83, %c143] : memref<8x512xf32, #tpu.memory_space<vmem>>, vector<8x256xf32>
    %c0_84 = arith.constant 0 : index
    %c6 = arith.constant 6 : index
    %c0_85 = arith.constant 0 : index
    %c0_86 = arith.constant 0 : index
    %137 = vector.load %arg12[%c0_84, %c6, %c0_85, %c0_86] : memref<3x9x8x8xbf16, #tpu.memory_space<vmem>>, vector<1x1x8x8xbf16>
    %138 = vector.shape_cast %137 : vector<1x1x8x8xbf16> to vector<8x8xbf16>
    %139 = arith.truncf %136 : vector<8x256xf32> to vector<8x256xbf16>
    %cst_87 = arith.constant dense<0.000000e+00> : vector<8x256xf32>
    %140 = tpu.matmul %138, %139, %cst_87 {dimension_numbers = #tpu.dot_dimension_numbers<[1], [0], [0], [1], [0, 0, 1, 1], [], []>} : vector<8x8xbf16>, vector<8x256xbf16>, vector<8x256xf32> -> vector<8x256xf32>
    %141 = arith.addf %123, %140 : vector<8x256xf32>
    %c0_88 = arith.constant 0 : index
    %c144 = arith.constant 144 : index
    %142 = vector.load %arg18[%c0_88, %c144] : memref<8x512xf32, #tpu.memory_space<vmem>>, vector<8x256xf32>
    %c0_89 = arith.constant 0 : index
    %c7 = arith.constant 7 : index
    %c0_90 = arith.constant 0 : index
    %c0_91 = arith.constant 0 : index
    %143 = vector.load %arg12[%c0_89, %c7, %c0_90, %c0_91] : memref<3x9x8x8xbf16, #tpu.memory_space<vmem>>, vector<1x1x8x8xbf16>
    %144 = vector.shape_cast %143 : vector<1x1x8x8xbf16> to vector<8x8xbf16>
    %145 = arith.truncf %142 : vector<8x256xf32> to vector<8x256xbf16>
    %cst_92 = arith.constant dense<0.000000e+00> : vector<8x256xf32>
    %146 = tpu.matmul %144, %145, %cst_92 {dimension_numbers = #tpu.dot_dimension_numbers<[1], [0], [0], [1], [0, 0, 1, 1], [], []>} : vector<8x8xbf16>, vector<8x256xbf16>, vector<8x256xf32> -> vector<8x256xf32>
    %147 = arith.addf %129, %146 : vector<8x256xf32>
    %c0_93 = arith.constant 0 : index
    %c145 = arith.constant 145 : index
    %148 = vector.load %arg18[%c0_93, %c145] : memref<8x512xf32, #tpu.memory_space<vmem>>, vector<8x256xf32>
    %c0_94 = arith.constant 0 : index
    %c8 = arith.constant 8 : index
    %c0_95 = arith.constant 0 : index
    %c0_96 = arith.constant 0 : index
    %149 = vector.load %arg12[%c0_94, %c8, %c0_95, %c0_96] : memref<3x9x8x8xbf16, #tpu.memory_space<vmem>>, vector<1x1x8x8xbf16>
    %150 = vector.shape_cast %149 : vector<1x1x8x8xbf16> to vector<8x8xbf16>
    %151 = arith.truncf %148 : vector<8x256xf32> to vector<8x256xbf16>
    %cst_97 = arith.constant dense<0.000000e+00> : vector<8x256xf32>
    %152 = tpu.matmul %150, %151, %cst_97 {dimension_numbers = #tpu.dot_dimension_numbers<[1], [0], [0], [1], [0, 0, 1, 1], [], []>} : vector<8x8xbf16>, vector<8x256xbf16>, vector<8x256xf32> -> vector<8x256xf32>
    %153 = arith.addf %135, %152 : vector<8x256xf32>
    %154 = vector.broadcast %26 : vector<1x256xf32> to vector<8x256xf32>
    %155 = arith.mulf %154, %141 : vector<8x256xf32>
    %156 = arith.addf %147, %155 : vector<8x256xf32>
    %157 = vector.broadcast %30 : vector<1x256xf32> to vector<8x256xf32>
    %158 = arith.mulf %157, %153 : vector<8x256xf32>
    %159 = arith.addf %156, %158 : vector<8x256xf32>
    %c0_98 = arith.constant 0 : index
    %c0_99 = arith.constant 0 : index
    %c0_100 = arith.constant 0 : index
    %160 = vector.load %arg13[%c0_98, %c0_99, %c0_100] : memref<3x8x1xf32, #tpu.memory_space<vmem>>, vector<1x8x1xf32>
    %161 = vector.shape_cast %160 : vector<1x8x1xf32> to vector<8x1xf32>
    %162 = vector.broadcast %161 : vector<8x1xf32> to vector<8x256xf32>
    %163 = arith.addf %159, %162 : vector<8x256xf32>
    %c0_101 = arith.constant 0 : index
    %c128_102 = arith.constant 128 : index
    %164 = vector.load %arg18[%c0_101, %c128_102] : memref<8x512xf32, #tpu.memory_space<vmem>>, vector<8x256xf32>
    tpu.vector_store %arg18[%c0_101, %c128_102], %163 {strides = array<i32>} : memref<8x512xf32, #tpu.memory_space<vmem>>, vector<8x256xf32>,
    %c0_103 = arith.constant 0 : index
    %c111_104 = arith.constant 111 : index
    %165 = vector.load %arg18[%c0_103, %c111_104] : memref<8x512xf32, #tpu.memory_space<vmem>>, vector<8x256xf32>
    %c1_105 = arith.constant 1 : index
    %c0_106 = arith.constant 0 : index
    %c0_107 = arith.constant 0 : index
    %c0_108 = arith.constant 0 : index
    %166 = vector.load %arg12[%c1_105, %c0_106, %c0_107, %c0_108] : memref<3x9x8x8xbf16, #tpu.memory_space<vmem>>, vector<1x1x8x8xbf16>
    %167 = vector.shape_cast %166 : vector<1x1x8x8xbf16> to vector<8x8xbf16>
    %168 = arith.truncf %165 : vector<8x256xf32> to vector<8x256xbf16>
    %cst_109 = arith.constant dense<0.000000e+00> : vector<8x256xf32>
    %169 = tpu.matmul %167, %168, %cst_109 {dimension_numbers = #tpu.dot_dimension_numbers<[1], [0], [0], [1], [0, 0, 1, 1], [], []>} : vector<8x8xbf16>, vector<8x256xbf16>, vector<8x256xf32> -> vector<8x256xf32>
    %c0_110 = arith.constant 0 : index
    %c112_111 = arith.constant 112 : index
    %170 = vector.load %arg18[%c0_110, %c112_111] : memref<8x512xf32, #tpu.memory_space<vmem>>, vector<8x256xf32>
    %c1_112 = arith.constant 1 : index
    %c1_113 = arith.constant 1 : index
    %c0_114 = arith.constant 0 : index
    %c0_115 = arith.constant 0 : index
    %171 = vector.load %arg12[%c1_112, %c1_113, %c0_114, %c0_115] : memref<3x9x8x8xbf16, #tpu.memory_space<vmem>>, vector<1x1x8x8xbf16>
    %172 = vector.shape_cast %171 : vector<1x1x8x8xbf16> to vector<8x8xbf16>
    %173 = arith.truncf %170 : vector<8x256xf32> to vector<8x256xbf16>
    %cst_116 = arith.constant dense<0.000000e+00> : vector<8x256xf32>
    %174 = tpu.matmul %172, %173, %cst_116 {dimension_numbers = #tpu.dot_dimension_numbers<[1], [0], [0], [1], [0, 0, 1, 1], [], []>} : vector<8x8xbf16>, vector<8x256xbf16>, vector<8x256xf32> -> vector<8x256xf32>
    %c0_117 = arith.constant 0 : index
    %c113_118 = arith.constant 113 : index
    %175 = vector.load %arg18[%c0_117, %c113_118] : memref<8x512xf32, #tpu.memory_space<vmem>>, vector<8x256xf32>
    %c1_119 = arith.constant 1 : index
    %c2_120 = arith.constant 2 : index
    %c0_121 = arith.constant 0 : index
    %c0_122 = arith.constant 0 : index
    %176 = vector.load %arg12[%c1_119, %c2_120, %c0_121, %c0_122] : memref<3x9x8x8xbf16, #tpu.memory_space<vmem>>, vector<1x1x8x8xbf16>
    %177 = vector.shape_cast %176 : vector<1x1x8x8xbf16> to vector<8x8xbf16>
    %178 = arith.truncf %175 : vector<8x256xf32> to vector<8x256xbf16>
    %cst_123 = arith.constant dense<0.000000e+00> : vector<8x256xf32>
    %179 = tpu.matmul %177, %178, %cst_123 {dimension_numbers = #tpu.dot_dimension_numbers<[1], [0], [0], [1], [0, 0, 1, 1], [], []>} : vector<8x8xbf16>, vector<8x256xbf16>, vector<8x256xf32> -> vector<8x256xf32>
    %c0_124 = arith.constant 0 : index
    %c127_125 = arith.constant 127 : index
    %180 = vector.load %arg18[%c0_124, %c127_125] : memref<8x512xf32, #tpu.memory_space<vmem>>, vector<8x256xf32>
    %c1_126 = arith.constant 1 : index
    %c3_127 = arith.constant 3 : index
    %c0_128 = arith.constant 0 : index
    %c0_129 = arith.constant 0 : index
    %181 = vector.load %arg12[%c1_126, %c3_127, %c0_128, %c0_129] : memref<3x9x8x8xbf16, #tpu.memory_space<vmem>>, vector<1x1x8x8xbf16>
    %182 = vector.shape_cast %181 : vector<1x1x8x8xbf16> to vector<8x8xbf16>
    %183 = arith.truncf %180 : vector<8x256xf32> to vector<8x256xbf16>
    %cst_130 = arith.constant dense<0.000000e+00> : vector<8x256xf32>
    %184 = tpu.matmul %182, %183, %cst_130 {dimension_numbers = #tpu.dot_dimension_numbers<[1], [0], [0], [1], [0, 0, 1, 1], [], []>} : vector<8x8xbf16>, vector<8x256xbf16>, vector<8x256xf32> -> vector<8x256xf32>
    %185 = arith.addf %169, %184 : vector<8x256xf32>
    %c0_131 = arith.constant 0 : index
    %c128_132 = arith.constant 128 : index
    %186 = vector.load %arg18[%c0_131, %c128_132] : memref<8x512xf32, #tpu.memory_space<vmem>>, vector<8x256xf32>
    %c1_133 = arith.constant 1 : index
    %c4_134 = arith.constant 4 : index
    %c0_135 = arith.constant 0 : index
    %c0_136 = arith.constant 0 : index
    %187 = vector.load %arg12[%c1_133, %c4_134, %c0_135, %c0_136] : memref<3x9x8x8xbf16, #tpu.memory_space<vmem>>, vector<1x1x8x8xbf16>
    %188 = vector.shape_cast %187 : vector<1x1x8x8xbf16> to vector<8x8xbf16>
    %189 = arith.truncf %186 : vector<8x256xf32> to vector<8x256xbf16>
    %cst_137 = arith.constant dense<0.000000e+00> : vector<8x256xf32>
    %190 = tpu.matmul %188, %189, %cst_137 {dimension_numbers = #tpu.dot_dimension_numbers<[1], [0], [0], [1], [0, 0, 1, 1], [], []>} : vector<8x8xbf16>, vector<8x256xbf16>, vector<8x256xf32> -> vector<8x256xf32>
    %191 = arith.addf %174, %190 : vector<8x256xf32>
    %c0_138 = arith.constant 0 : index
    %c129_139 = arith.constant 129 : index
    %192 = vector.load %arg18[%c0_138, %c129_139] : memref<8x512xf32, #tpu.memory_space<vmem>>, vector<8x256xf32>
    %c1_140 = arith.constant 1 : index
    %c5_141 = arith.constant 5 : index
    %c0_142 = arith.constant 0 : index
    %c0_143 = arith.constant 0 : index
    %193 = vector.load %arg12[%c1_140, %c5_141, %c0_142, %c0_143] : memref<3x9x8x8xbf16, #tpu.memory_space<vmem>>, vector<1x1x8x8xbf16>
    %194 = vector.shape_cast %193 : vector<1x1x8x8xbf16> to vector<8x8xbf16>
    %195 = arith.truncf %192 : vector<8x256xf32> to vector<8x256xbf16>
    %cst_144 = arith.constant dense<0.000000e+00> : vector<8x256xf32>
    %196 = tpu.matmul %194, %195, %cst_144 {dimension_numbers = #tpu.dot_dimension_numbers<[1], [0], [0], [1], [0, 0, 1, 1], [], []>} : vector<8x8xbf16>, vector<8x256xbf16>, vector<8x256xf32> -> vector<8x256xf32>
    %197 = arith.addf %179, %196 : vector<8x256xf32>
    %c0_145 = arith.constant 0 : index
    %c143_146 = arith.constant 143 : index
    %198 = vector.load %arg18[%c0_145, %c143_146] : memref<8x512xf32, #tpu.memory_space<vmem>>, vector<8x256xf32>
    %c1_147 = arith.constant 1 : index
    %c6_148 = arith.constant 6 : index
    %c0_149 = arith.constant 0 : index
    %c0_150 = arith.constant 0 : index
    %199 = vector.load %arg12[%c1_147, %c6_148, %c0_149, %c0_150] : memref<3x9x8x8xbf16, #tpu.memory_space<vmem>>, vector<1x1x8x8xbf16>
    %200 = vector.shape_cast %199 : vector<1x1x8x8xbf16> to vector<8x8xbf16>
    %201 = arith.truncf %198 : vector<8x256xf32> to vector<8x256xbf16>
    %cst_151 = arith.constant dense<0.000000e+00> : vector<8x256xf32>
    %202 = tpu.matmul %200, %201, %cst_151 {dimension_numbers = #tpu.dot_dimension_numbers<[1], [0], [0], [1], [0, 0, 1, 1], [], []>} : vector<8x8xbf16>, vector<8x256xbf16>, vector<8x256xf32> -> vector<8x256xf32>
    %203 = arith.addf %185, %202 : vector<8x256xf32>
    %c0_152 = arith.constant 0 : index
    %c144_153 = arith.constant 144 : index
    %204 = vector.load %arg18[%c0_152, %c144_153] : memref<8x512xf32, #tpu.memory_space<vmem>>, vector<8x256xf32>
    %c1_154 = arith.constant 1 : index
    %c7_155 = arith.constant 7 : index
    %c0_156 = arith.constant 0 : index
    %c0_157 = arith.constant 0 : index
    %205 = vector.load %arg12[%c1_154, %c7_155, %c0_156, %c0_157] : memref<3x9x8x8xbf16, #tpu.memory_space<vmem>>, vector<1x1x8x8xbf16>
    %206 = vector.shape_cast %205 : vector<1x1x8x8xbf16> to vector<8x8xbf16>
    %207 = arith.truncf %204 : vector<8x256xf32> to vector<8x256xbf16>
    %cst_158 = arith.constant dense<0.000000e+00> : vector<8x256xf32>
    %208 = tpu.matmul %206, %207, %cst_158 {dimension_numbers = #tpu.dot_dimension_numbers<[1], [0], [0], [1], [0, 0, 1, 1], [], []>} : vector<8x8xbf16>, vector<8x256xbf16>, vector<8x256xf32> -> vector<8x256xf32>
    %209 = arith.addf %191, %208 : vector<8x256xf32>
    %c0_159 = arith.constant 0 : index
    %c145_160 = arith.constant 145 : index
    %210 = vector.load %arg18[%c0_159, %c145_160] : memref<8x512xf32, #tpu.memory_space<vmem>>, vector<8x256xf32>
    %c1_161 = arith.constant 1 : index
    %c8_162 = arith.constant 8 : index
    %c0_163 = arith.constant 0 : index
    %c0_164 = arith.constant 0 : index
    %211 = vector.load %arg12[%c1_161, %c8_162, %c0_163, %c0_164] : memref<3x9x8x8xbf16, #tpu.memory_space<vmem>>, vector<1x1x8x8xbf16>
    %212 = vector.shape_cast %211 : vector<1x1x8x8xbf16> to vector<8x8xbf16>
    %213 = arith.truncf %210 : vector<8x256xf32> to vector<8x256xbf16>
    %cst_165 = arith.constant dense<0.000000e+00> : vector<8x256xf32>
    %214 = tpu.matmul %212, %213, %cst_165 {dimension_numbers = #tpu.dot_dimension_numbers<[1], [0], [0], [1], [0, 0, 1, 1], [], []>} : vector<8x8xbf16>, vector<8x256xbf16>, vector<8x256xf32> -> vector<8x256xf32>
    %215 = arith.addf %197, %214 : vector<8x256xf32>
    %216 = vector.broadcast %26 : vector<1x256xf32> to vector<8x256xf32>
    %217 = arith.mulf %216, %203 : vector<8x256xf32>
    %218 = arith.addf %209, %217 : vector<8x256xf32>
    %219 = vector.broadcast %30 : vector<1x256xf32> to vector<8x256xf32>
    %220 = arith.mulf %219, %215 : vector<8x256xf32>
    %221 = arith.addf %218, %220 : vector<8x256xf32>
    %c1_166 = arith.constant 1 : index
    %c0_167 = arith.constant 0 : index
    %c0_168 = arith.constant 0 : index
    %222 = vector.load %arg13[%c1_166, %c0_167, %c0_168] : memref<3x8x1xf32, #tpu.memory_space<vmem>>, vector<1x8x1xf32>
    %223 = vector.shape_cast %222 : vector<1x8x1xf32> to vector<8x1xf32>
    %224 = vector.broadcast %223 : vector<8x1xf32> to vector<8x256xf32>
    %225 = arith.addf %221, %224 : vector<8x256xf32>
    %c0_169 = arith.constant 0 : index
    %c128_170 = arith.constant 128 : index
    %226 = vector.load %arg18[%c0_169, %c128_170] : memref<8x512xf32, #tpu.memory_space<vmem>>, vector<8x256xf32>
    tpu.vector_store %arg18[%c0_169, %c128_170], %225 {strides = array<i32>} : memref<8x512xf32, #tpu.memory_space<vmem>>, vector<8x256xf32>,
    %c0_171 = arith.constant 0 : index
    %c111_172 = arith.constant 111 : index
    %227 = vector.load %arg18[%c0_171, %c111_172] : memref<8x512xf32, #tpu.memory_space<vmem>>, vector<8x256xf32>
    %c2_173 = arith.constant 2 : index
    %c0_174 = arith.constant 0 : index
    %c0_175 = arith.constant 0 : index
    %c0_176 = arith.constant 0 : index
    %228 = vector.load %arg12[%c2_173, %c0_174, %c0_175, %c0_176] : memref<3x9x8x8xbf16, #tpu.memory_space<vmem>>, vector<1x1x8x8xbf16>
    %229 = vector.shape_cast %228 : vector<1x1x8x8xbf16> to vector<8x8xbf16>
    %230 = arith.truncf %227 : vector<8x256xf32> to vector<8x256xbf16>
    %cst_177 = arith.constant dense<0.000000e+00> : vector<8x256xf32>
    %231 = tpu.matmul %229, %230, %cst_177 {dimension_numbers = #tpu.dot_dimension_numbers<[1], [0], [0], [1], [0, 0, 1, 1], [], []>} : vector<8x8xbf16>, vector<8x256xbf16>, vector<8x256xf32> -> vector<8x256xf32>
    %c0_178 = arith.constant 0 : index
    %c112_179 = arith.constant 112 : index
    %232 = vector.load %arg18[%c0_178, %c112_179] : memref<8x512xf32, #tpu.memory_space<vmem>>, vector<8x256xf32>
    %c2_180 = arith.constant 2 : index
    %c1_181 = arith.constant 1 : index
    %c0_182 = arith.constant 0 : index
    %c0_183 = arith.constant 0 : index
    %233 = vector.load %arg12[%c2_180, %c1_181, %c0_182, %c0_183] : memref<3x9x8x8xbf16, #tpu.memory_space<vmem>>, vector<1x1x8x8xbf16>
    %234 = vector.shape_cast %233 : vector<1x1x8x8xbf16> to vector<8x8xbf16>
    %235 = arith.truncf %232 : vector<8x256xf32> to vector<8x256xbf16>
    %cst_184 = arith.constant dense<0.000000e+00> : vector<8x256xf32>
    %236 = tpu.matmul %234, %235, %cst_184 {dimension_numbers = #tpu.dot_dimension_numbers<[1], [0], [0], [1], [0, 0, 1, 1], [], []>} : vector<8x8xbf16>, vector<8x256xbf16>, vector<8x256xf32> -> vector<8x256xf32>
    %c0_185 = arith.constant 0 : index
    %c113_186 = arith.constant 113 : index
    %237 = vector.load %arg18[%c0_185, %c113_186] : memref<8x512xf32, #tpu.memory_space<vmem>>, vector<8x256xf32>
    %c2_187 = arith.constant 2 : index
    %c2_188 = arith.constant 2 : index
    %c0_189 = arith.constant 0 : index
    %c0_190 = arith.constant 0 : index
    %238 = vector.load %arg12[%c2_187, %c2_188, %c0_189, %c0_190] : memref<3x9x8x8xbf16, #tpu.memory_space<vmem>>, vector<1x1x8x8xbf16>
    %239 = vector.shape_cast %238 : vector<1x1x8x8xbf16> to vector<8x8xbf16>
    %240 = arith.truncf %237 : vector<8x256xf32> to vector<8x256xbf16>
    %cst_191 = arith.constant dense<0.000000e+00> : vector<8x256xf32>
    %241 = tpu.matmul %239, %240, %cst_191 {dimension_numbers = #tpu.dot_dimension_numbers<[1], [0], [0], [1], [0, 0, 1, 1], [], []>} : vector<8x8xbf16>, vector<8x256xbf16>, vector<8x256xf32> -> vector<8x256xf32>
    %c0_192 = arith.constant 0 : index
    %c127_193 = arith.constant 127 : index
    %242 = vector.load %arg18[%c0_192, %c127_193] : memref<8x512xf32, #tpu.memory_space<vmem>>, vector<8x256xf32>
    %c2_194 = arith.constant 2 : index
    %c3_195 = arith.constant 3 : index
    %c0_196 = arith.constant 0 : index
    %c0_197 = arith.constant 0 : index
    %243 = vector.load %arg12[%c2_194, %c3_195, %c0_196, %c0_197] : memref<3x9x8x8xbf16, #tpu.memory_space<vmem>>, vector<1x1x8x8xbf16>
    %244 = vector.shape_cast %243 : vector<1x1x8x8xbf16> to vector<8x8xbf16>
    %245 = arith.truncf %242 : vector<8x256xf32> to vector<8x256xbf16>
    %cst_198 = arith.constant dense<0.000000e+00> : vector<8x256xf32>
    %246 = tpu.matmul %244, %245, %cst_198 {dimension_numbers = #tpu.dot_dimension_numbers<[1], [0], [0], [1], [0, 0, 1, 1], [], []>} : vector<8x8xbf16>, vector<8x256xbf16>, vector<8x256xf32> -> vector<8x256xf32>
    %247 = arith.addf %231, %246 : vector<8x256xf32>
    %c0_199 = arith.constant 0 : index
    %c128_200 = arith.constant 128 : index
    %248 = vector.load %arg18[%c0_199, %c128_200] : memref<8x512xf32, #tpu.memory_space<vmem>>, vector<8x256xf32>
    %c2_201 = arith.constant 2 : index
    %c4_202 = arith.constant 4 : index
    %c0_203 = arith.constant 0 : index
    %c0_204 = arith.constant 0 : index
    %249 = vector.load %arg12[%c2_201, %c4_202, %c0_203, %c0_204] : memref<3x9x8x8xbf16, #tpu.memory_space<vmem>>, vector<1x1x8x8xbf16>
    %250 = vector.shape_cast %249 : vector<1x1x8x8xbf16> to vector<8x8xbf16>
    %251 = arith.truncf %248 : vector<8x256xf32> to vector<8x256xbf16>
    %cst_205 = arith.constant dense<0.000000e+00> : vector<8x256xf32>
    %252 = tpu.matmul %250, %251, %cst_205 {dimension_numbers = #tpu.dot_dimension_numbers<[1], [0], [0], [1], [0, 0, 1, 1], [], []>} : vector<8x8xbf16>, vector<8x256xbf16>, vector<8x256xf32> -> vector<8x256xf32>
    %253 = arith.addf %236, %252 : vector<8x256xf32>
    %c0_206 = arith.constant 0 : index
    %c129_207 = arith.constant 129 : index
    %254 = vector.load %arg18[%c0_206, %c129_207] : memref<8x512xf32, #tpu.memory_space<vmem>>, vector<8x256xf32>
    %c2_208 = arith.constant 2 : index
    %c5_209 = arith.constant 5 : index
    %c0_210 = arith.constant 0 : index
    %c0_211 = arith.constant 0 : index
    %255 = vector.load %arg12[%c2_208, %c5_209, %c0_210, %c0_211] : memref<3x9x8x8xbf16, #tpu.memory_space<vmem>>, vector<1x1x8x8xbf16>
    %256 = vector.shape_cast %255 : vector<1x1x8x8xbf16> to vector<8x8xbf16>
    %257 = arith.truncf %254 : vector<8x256xf32> to vector<8x256xbf16>
    %cst_212 = arith.constant dense<0.000000e+00> : vector<8x256xf32>
    %258 = tpu.matmul %256, %257, %cst_212 {dimension_numbers = #tpu.dot_dimension_numbers<[1], [0], [0], [1], [0, 0, 1, 1], [], []>} : vector<8x8xbf16>, vector<8x256xbf16>, vector<8x256xf32> -> vector<8x256xf32>
    %259 = arith.addf %241, %258 : vector<8x256xf32>
    %c0_213 = arith.constant 0 : index
    %c143_214 = arith.constant 143 : index
    %260 = vector.load %arg18[%c0_213, %c143_214] : memref<8x512xf32, #tpu.memory_space<vmem>>, vector<8x256xf32>
    %c2_215 = arith.constant 2 : index
    %c6_216 = arith.constant 6 : index
    %c0_217 = arith.constant 0 : index
    %c0_218 = arith.constant 0 : index
    %261 = vector.load %arg12[%c2_215, %c6_216, %c0_217, %c0_218] : memref<3x9x8x8xbf16, #tpu.memory_space<vmem>>, vector<1x1x8x8xbf16>
    %262 = vector.shape_cast %261 : vector<1x1x8x8xbf16> to vector<8x8xbf16>
    %263 = arith.truncf %260 : vector<8x256xf32> to vector<8x256xbf16>
    %cst_219 = arith.constant dense<0.000000e+00> : vector<8x256xf32>
    %264 = tpu.matmul %262, %263, %cst_219 {dimension_numbers = #tpu.dot_dimension_numbers<[1], [0], [0], [1], [0, 0, 1, 1], [], []>} : vector<8x8xbf16>, vector<8x256xbf16>, vector<8x256xf32> -> vector<8x256xf32>
    %265 = arith.addf %247, %264 : vector<8x256xf32>
    %c0_220 = arith.constant 0 : index
    %c144_221 = arith.constant 144 : index
    %266 = vector.load %arg18[%c0_220, %c144_221] : memref<8x512xf32, #tpu.memory_space<vmem>>, vector<8x256xf32>
    %c2_222 = arith.constant 2 : index
    %c7_223 = arith.constant 7 : index
    %c0_224 = arith.constant 0 : index
    %c0_225 = arith.constant 0 : index
    %267 = vector.load %arg12[%c2_222, %c7_223, %c0_224, %c0_225] : memref<3x9x8x8xbf16, #tpu.memory_space<vmem>>, vector<1x1x8x8xbf16>
    %268 = vector.shape_cast %267 : vector<1x1x8x8xbf16> to vector<8x8xbf16>
    %269 = arith.truncf %266 : vector<8x256xf32> to vector<8x256xbf16>
    %cst_226 = arith.constant dense<0.000000e+00> : vector<8x256xf32>
    %270 = tpu.matmul %268, %269, %cst_226 {dimension_numbers = #tpu.dot_dimension_numbers<[1], [0], [0], [1], [0, 0, 1, 1], [], []>} : vector<8x8xbf16>, vector<8x256xbf16>, vector<8x256xf32> -> vector<8x256xf32>
    %271 = arith.addf %253, %270 : vector<8x256xf32>
    %c0_227 = arith.constant 0 : index
    %c145_228 = arith.constant 145 : index
    %272 = vector.load %arg18[%c0_227, %c145_228] : memref<8x512xf32, #tpu.memory_space<vmem>>, vector<8x256xf32>
    %c2_229 = arith.constant 2 : index
    %c8_230 = arith.constant 8 : index
    %c0_231 = arith.constant 0 : index
    %c0_232 = arith.constant 0 : index
    %273 = vector.load %arg12[%c2_229, %c8_230, %c0_231, %c0_232] : memref<3x9x8x8xbf16, #tpu.memory_space<vmem>>, vector<1x1x8x8xbf16>
    %274 = vector.shape_cast %273 : vector<1x1x8x8xbf16> to vector<8x8xbf16>
    %275 = arith.truncf %272 : vector<8x256xf32> to vector<8x256xbf16>
    %cst_233 = arith.constant dense<0.000000e+00> : vector<8x256xf32>
    %276 = tpu.matmul %274, %275, %cst_233 {dimension_numbers = #tpu.dot_dimension_numbers<[1], [0], [0], [1], [0, 0, 1, 1], [], []>} : vector<8x8xbf16>, vector<8x256xbf16>, vector<8x256xf32> -> vector<8x256xf32>
    %277 = arith.addf %259, %276 : vector<8x256xf32>
    %278 = vector.broadcast %26 : vector<1x256xf32> to vector<8x256xf32>
    %279 = arith.mulf %278, %265 : vector<8x256xf32>
    %280 = arith.addf %271, %279 : vector<8x256xf32>
    %281 = vector.broadcast %30 : vector<1x256xf32> to vector<8x256xf32>
    %282 = arith.mulf %281, %277 : vector<8x256xf32>
    %283 = arith.addf %280, %282 : vector<8x256xf32>
    %c2_234 = arith.constant 2 : index
    %c0_235 = arith.constant 0 : index
    %c0_236 = arith.constant 0 : index
    %284 = vector.load %arg13[%c2_234, %c0_235, %c0_236] : memref<3x8x1xf32, #tpu.memory_space<vmem>>, vector<1x8x1xf32>
    %285 = vector.shape_cast %284 : vector<1x8x1xf32> to vector<8x1xf32>
    %286 = vector.broadcast %285 : vector<8x1xf32> to vector<8x256xf32>
    %287 = arith.addf %283, %286 : vector<8x256xf32>
    %cst_237 = arith.constant 0.000000e+00 : f32
    %288 = vector.broadcast %cst_237 : f32 to vector<8x256xf32>
    %289 = arith.maximumf %287, %288 : vector<8x256xf32>
    %c0_238 = arith.constant 0 : index
    %c0_239 = arith.constant 0 : index
    %c0_240 = arith.constant 0 : index
    %290 = vector.load %arg16[%c0_238, %c0_239, %c0_240] : memref<1x8x256xf32, #tpu.memory_space<vmem>>, vector<1x8x256xf32>
    %291 = vector.shape_cast %290 : vector<1x8x256xf32> to vector<8x256xf32>
    %292 = vector.shape_cast %289 : vector<8x256xf32> to vector<1x8x256xf32>
    tpu.vector_store %arg16[%c0_238, %c0_239, %c0_240], %292 {strides = array<i32>} : memref<1x8x256xf32, #tpu.memory_space<vmem>>, vector<1x8x256xf32>,
    %c0_241 = arith.constant 0 : index
    %c0_242 = arith.constant 0 : index
    %293 = vector.load %arg14[%c0_241, %c0_242] : memref<1x8xbf16, #tpu.memory_space<vmem>>, vector<1x8xbf16>
    %294 = arith.truncf %289 : vector<8x256xf32> to vector<8x256xbf16>
    %cst_243 = arith.constant dense<0.000000e+00> : vector<1x256xf32>
    %295 = tpu.matmul %293, %294, %cst_243 {dimension_numbers = #tpu.dot_dimension_numbers<[1], [0], [0], [1], [0, 0, 1, 1], [], []>} : vector<1x8xbf16>, vector<8x256xbf16>, vector<1x256xf32> -> vector<1x256xf32>
    %c0_244 = arith.constant 0 : index
    %c0_245 = arith.constant 0 : index
    %296 = vector.load %arg15[%c0_244, %c0_245] : memref<1x1xf32, #tpu.memory_space<vmem>>, vector<1x1xf32>
    %297 = vector.broadcast %296 : vector<1x1xf32> to vector<1x256xf32>
    %298 = arith.addf %295, %297 : vector<1x256xf32>
    %299 = arith.addf %298, %5 : vector<1x256xf32>
    %c0_246 = arith.constant 0 : index
    %c0_247 = arith.constant 0 : index
    %c0_248 = arith.constant 0 : index
    %300 = vector.load %arg17[%c0_246, %c0_247, %c0_248] : memref<1x1x256xf32, #tpu.memory_space<vmem>>, vector<1x1x256xf32>
    %301 = vector.shape_cast %300 : vector<1x1x256xf32> to vector<1x256xf32>
    %302 = vector.shape_cast %299 : vector<1x256xf32> to vector<1x1x256xf32>
    tpu.vector_store %arg17[%c0_246, %c0_247, %c0_248], %302 {strides = array<i32>} : memref<1x1x256xf32, #tpu.memory_space<vmem>>, vector<1x1x256xf32>,
    return
  }
  func.func @transform_0(%arg0: i32) -> (i32, i32, i32) {
    %c0_i32 = arith.constant 0 : i32
    %c0_i32_0 = arith.constant 0 : i32
    %c0_i32_1 = arith.constant 0 : i32
    return %arg0, %c0_i32, %c0_i32_0 : i32, i32, i32
  }
  func.func @transform_1(%arg0: i32) -> (i32, i32, i32) {
    %c0_i32 = arith.constant 0 : i32
    %c0_i32_0 = arith.constant 0 : i32
    %c0_i32_1 = arith.constant 0 : i32
    return %arg0, %c0_i32, %c0_i32_0 : i32, i32, i32
  }
  func.func @transform_2(%arg0: i32) -> (i32, i32, i32) {
    %c0_i32 = arith.constant 0 : i32
    %c0_i32_0 = arith.constant 0 : i32
    %c0_i32_1 = arith.constant 0 : i32
    return %arg0, %c0_i32, %c0_i32_0 : i32, i32, i32
  }
  func.func @transform_3(%arg0: i32) -> (i32, i32) {
    %c0_i32 = arith.constant 0 : i32
    %c0_i32_0 = arith.constant 0 : i32
    %c0_i32_1 = arith.constant 0 : i32
    return %c0_i32, %c0_i32_0 : i32, i32
  }
  func.func @transform_4(%arg0: i32) -> (i32, i32) {
    %c0_i32 = arith.constant 0 : i32
    %c0_i32_0 = arith.constant 0 : i32
    %c0_i32_1 = arith.constant 0 : i32
    return %c0_i32, %c0_i32_0 : i32, i32
  }
  func.func @transform_5(%arg0: i32) -> (i32, i32) {
    %c0_i32 = arith.constant 0 : i32
    %c0_i32_0 = arith.constant 0 : i32
    %c0_i32_1 = arith.constant 0 : i32
    return %c0_i32, %c0_i32_0 : i32, i32
  }
  func.func @transform_6(%arg0: i32) -> (i32, i32) {
    %c0_i32 = arith.constant 0 : i32
    %c0_i32_0 = arith.constant 0 : i32
    %c0_i32_1 = arith.constant 0 : i32
    return %c0_i32, %c0_i32_0 : i32, i32
  }
  func.func @transform_7(%arg0: i32) -> (i32, i32) {
    %c0_i32 = arith.constant 0 : i32
    %c0_i32_0 = arith.constant 0 : i32
    %c0_i32_1 = arith.constant 0 : i32
    return %c0_i32, %c0_i32_0 : i32, i32
  }
  func.func @transform_8(%arg0: i32) -> (i32, i32) {
    %c0_i32 = arith.constant 0 : i32
    %c0_i32_0 = arith.constant 0 : i32
    %c0_i32_1 = arith.constant 0 : i32
    return %c0_i32, %c0_i32_0 : i32, i32
  }
  func.func @transform_9(%arg0: i32) -> (i32, i32) {
    %c0_i32 = arith.constant 0 : i32
    %c0_i32_0 = arith.constant 0 : i32
    %c0_i32_1 = arith.constant 0 : i32
    return %c0_i32, %c0_i32_0 : i32, i32
  }
  func.func @transform_10(%arg0: i32) -> (i32, i32) {
    %c0_i32 = arith.constant 0 : i32
    %c0_i32_0 = arith.constant 0 : i32
    %c0_i32_1 = arith.constant 0 : i32
    return %c0_i32, %c0_i32_0 : i32, i32
  }
  func.func @transform_11(%arg0: i32) -> (i32, i32, i32, i32) {
    %c0_i32 = arith.constant 0 : i32
    %c0_i32_0 = arith.constant 0 : i32
    %c0_i32_1 = arith.constant 0 : i32
    %c0_i32_2 = arith.constant 0 : i32
    %c0_i32_3 = arith.constant 0 : i32
    return %c0_i32, %c0_i32_0, %c0_i32_1, %c0_i32_2 : i32, i32, i32, i32
  }
  func.func @transform_12(%arg0: i32) -> (i32, i32, i32) {
    %c0_i32 = arith.constant 0 : i32
    %c0_i32_0 = arith.constant 0 : i32
    %c0_i32_1 = arith.constant 0 : i32
    %c0_i32_2 = arith.constant 0 : i32
    return %c0_i32, %c0_i32_0, %c0_i32_1 : i32, i32, i32
  }
  func.func @transform_13(%arg0: i32) -> (i32, i32) {
    %c0_i32 = arith.constant 0 : i32
    %c0_i32_0 = arith.constant 0 : i32
    %c0_i32_1 = arith.constant 0 : i32
    return %c0_i32, %c0_i32_0 : i32, i32
  }
  func.func @transform_14(%arg0: i32) -> (i32, i32) {
    %c0_i32 = arith.constant 0 : i32
    %c0_i32_0 = arith.constant 0 : i32
    %c0_i32_1 = arith.constant 0 : i32
    return %c0_i32, %c0_i32_0 : i32, i32
  }
  func.func @transform_15(%arg0: i32) -> (i32, i32, i32) {
    %c0_i32 = arith.constant 0 : i32
    %c0_i32_0 = arith.constant 0 : i32
    %c0_i32_1 = arith.constant 0 : i32
    return %arg0, %c0_i32, %c0_i32_0 : i32, i32, i32
  }
  func.func @transform_16(%arg0: i32) -> (i32, i32, i32) {
    %c0_i32 = arith.constant 0 : i32
    %c0_i32_0 = arith.constant 0 : i32
    %c0_i32_1 = arith.constant 0 : i32
    return %arg0, %c0_i32, %c0_i32_0 : i32, i32, i32
  }
}

</mosaic_0001>

<llo_original>
// kernel: fore_attention_forward.1
$region0: #{fore_attention_forward.1}
  #allocation0 [shape = 'u32[]', space=smem, size = 0x4, offset = 0x4, fixed_abs, tag = 'smem constant byte address 0x4 - core index']
  #allocation1 [shape = 'u32[144,128]{1,0:T(1,128)}', space=vmem, size = 0x12000, scoped, tag = 'internal scratch']
  #allocation2 [shape = 'f32[8,512]{1,0:T(8,128)}', space=vmem, size = 0x4000, scoped, tag = 'scratch operand']
  #allocation3 [shape = 'f32[1,1]{1,0:T(1,128)S(1)}', space=vmem, size = 0x200, scoped, tag = 'scoped memory for fore_attention_forward.1']
  %s0 = inlined_call_operand.vmem [shape: f32[2,8,256], index: 0, kind: input, shape index: {}]
  %s1 = inlined_call_operand.vmem [shape: f32[2,8,256], index: 1, kind: input, shape index: {}]
  %s2 = inlined_call_operand.vmem [shape: f32[2,1,256], index: 2, kind: input, shape index: {}]
  %s3 = inlined_call_operand.vmem [shape: bf16[16,8], index: 3, kind: input, shape index: {}]
  %s4 = inlined_call_operand.vmem [shape: f32[16,1], index: 4, kind: input, shape index: {}]
  %s5 = inlined_call_operand.vmem [shape: bf16[16,16], index: 5, kind: input, shape index: {}]
  %s6 = inlined_call_operand.vmem [shape: f32[16,1], index: 6, kind: input, shape index: {}]
  %s7 = inlined_call_operand.vmem [shape: bf16[8,8], index: 7, kind: input, shape index: {}]
  %s8 = inlined_call_operand.vmem [shape: bf16[8,8], index: 8, kind: input, shape index: {}]
  %s9 = inlined_call_operand.vmem [shape: bf16[8,8], index: 9, kind: input, shape index: {}]
  %s10 = inlined_call_operand.vmem [shape: f32[8,1], index: 10, kind: input, shape index: {}]
  %s11 = inlined_call_operand.vmem [shape: bf16[3,9,8,8], index: 11, kind: input, shape index: {}]
  %s12 = inlined_call_operand.vmem [shape: f32[3,8,1], index: 12, kind: input, shape index: {}]
  %s13 = inlined_call_operand.vmem [shape: bf16[1,8], index: 13, kind: input, shape index: {}]
  %s14 = inlined_call_operand.<no memory space> [shape: f32[1,1], index: 14, kind: input, shape index: {}]
  %s15 = inlined_call_operand.vmem [shape: f32[2,8,256], index: 15, kind: output, shape index: {0}]
  %s16 = inlined_call_operand.vmem [shape: f32[2,1,256], index: 16, kind: output, shape index: {1}]
  %17 = xla_tuple %s15, %s16
  %s18 = sld [smem:[#allocation0]]
  $region101: #{fore_attention_forward.1} parent=0
    _
  %s20 = ssub.s32 1, %s18
  %s21 = scalar_select 0, %s20, %s18
  %v22 = vstv %s14
  %23 = vst [vmem:[#allocation3] sm:$0x1] %v22
  loop: start=0, step=1, limit=4
  $region2: #{fore_attention_forward.1} parent=0 // loop_pre_header
    _
  $region3: #{fore_attention_forward.1} parent=0 // loop_header
    %s25 = sphi 0, %s29
    %p26 = scmp.ge.s32.totalorder %s25, 4
    %s35 = sphi 0, %s37
    %s38 = sphi 0, %s35
    %s39 = sphi 0, %s38
    %s55 = sphi 0, %s39
    %s61 = sphi 0, %s63
    %s64 = sphi 0, %s61
    %s65 = sphi 0, %s64
    %s81 = sphi 0, %s65
    %s87 = sphi 0, %s89
    %s90 = sphi 0, %s87
    %s91 = sphi 0, %s90
    %s107 = sphi 0, %s91
    %s111 = sphi 0, %s111
    %s113 = sphi 0, %s111
    %s114 = sphi 0, %s113
    %s128 = sphi 0, %s114
    %s132 = sphi 0, %s132
    %s134 = sphi 0, %s132
    %s135 = sphi 0, %s134
    %s149 = sphi 0, %s135
    %s153 = sphi 0, %s153
    %s155 = sphi 0, %s153
    %s156 = sphi 0, %s155
    %s170 = sphi 0, %s156
    %s174 = sphi 0, %s174
    %s176 = sphi 0, %s174
    %s177 = sphi 0, %s176
    %s191 = sphi 0, %s177
    %s195 = sphi 0, %s195
    %s197 = sphi 0, %s195
    %s198 = sphi 0, %s197
    %s212 = sphi 0, %s198
    %s216 = sphi 0, %s216
    %s218 = sphi 0, %s216
    %s219 = sphi 0, %s218
    %s233 = sphi 0, %s219
    %s237 = sphi 0, %s237
    %s239 = sphi 0, %s237
    %s240 = sphi 0, %s239
    %s254 = sphi 0, %s240
    %s258 = sphi 0, %s258
    %s260 = sphi 0, %s258
    %s261 = sphi 0, %s260
    %s275 = sphi 0, %s261
    %s279 = sphi 0, %s279
    %s281 = sphi 0, %s279
    %s282 = sphi 0, %s281
    %s296 = sphi 0, %s282
    %s300 = sphi 0, %s300
    %s302 = sphi 0, %s300
    %s303 = sphi 0, %s302
    %s317 = sphi 0, %s303
    %s321 = sphi 0, %s321
    %s323 = sphi 0, %s321
    %s324 = sphi 0, %s323
    %s338 = sphi 0, %s324
    %s342 = sphi 0, %s342
    %s344 = sphi 0, %s342
    %s345 = sphi 0, %s344
    %s359 = sphi 0, %s345
    %s365 = sphi 0, %s367
    %s368 = sphi 0, %s365
    %s369 = sphi 0, %s368
    %s385 = sphi 0, %s369
    %s391 = sphi 0, %s393
    %s394 = sphi 0, %s391
    %s395 = sphi 0, %s394
    %s411 = sphi 0, %s395
  $region4: #{fore_attention_forward.1} parent=0 // loop_header_branch
    %28 = sbr.rel (%p26) target = $region8
  $region5: #{fore_attention_forward.1} parent=0 // loop_body
    %s30 = ssub.s32 %s25, 1
    %s31 = ssub.s32 %s25, 2
    %s32 = sadd.s32 %s25, 1
    %s33 = ssub.s32 %s25, %s32
    %p34 = scmp.eq.s32.totalorder %s33, 0
    %s36 = sadd.s32 %s35, 1
    %s37 = scalar_select %p34, %s35, %s36
    %p40 = pneg %p34
    %p41 = scmp.eq.s32.totalorder %s25, 1
    %p42 = por %p40, %p41
    %p43 = scmp.ne.s32.totalorder %s35, %s38
    %p44 = scmp.eq.s32.totalorder %s25, 0
    %p45 = por %p43, %p44
    %p46 = scmp.ne.s32.totalorder %s35, %s38
    %p47 = scmp.eq.s32.totalorder %s30, 1
    %p48 = por %p46, %p47
    %p49 = scmp.ne.s32.totalorder %s38, %s39
    %p50 = scmp.eq.s32.totalorder %s30, 0
    %p51 = por %p49, %p50
    %p52 = scmp.ne.s32.totalorder %s38, %s39
    %p53 = scmp.eq.s32.totalorder %s31, 1
    %p54 = por %p52, %p53
    %p56 = scmp.ne.s32.totalorder %s39, %s55
    %p57 = scmp.eq.s32.totalorder %s31, 0
    %p58 = por %p56, %p57
    %s59 = ssub.s32 %s25, %s32
    %p60 = scmp.eq.s32.totalorder %s59, 0
    %s62 = sadd.s32 %s61, 1
    %s63 = scalar_select %p60, %s61, %s62
    %p66 = pneg %p60
    %p67 = scmp.eq.s32.totalorder %s25, 1
    %p68 = por %p66, %p67
    %p69 = scmp.ne.s32.totalorder %s61, %s64
    %p70 = scmp.eq.s32.totalorder %s25, 0
    %p71 = por %p69, %p70
    %p72 = scmp.ne.s32.totalorder %s61, %s64
    %p73 = scmp.eq.s32.totalorder %s30, 1
    %p74 = por %p72, %p73
    %p75 = scmp.ne.s32.totalorder %s64, %s65
    %p76 = scmp.eq.s32.totalorder %s30, 0
    %p77 = por %p75, %p76
    %p78 = scmp.ne.s32.totalorder %s64, %s65
    %p79 = scmp.eq.s32.totalorder %s31, 1
    %p80 = por %p78, %p79
    %p82 = scmp.ne.s32.totalorder %s65, %s81
    %p83 = scmp.eq.s32.totalorder %s31, 0
    %p84 = por %p82, %p83
    %s85 = ssub.s32 %s25, %s32
    %p86 = scmp.eq.s32.totalorder %s85, 0
    %s88 = sadd.s32 %s87, 1
    %s89 = scalar_select %p86, %s87, %s88
    %p92 = pneg %p86
    %p93 = scmp.eq.s32.totalorder %s25, 1
    %p94 = por %p92, %p93
    %p95 = scmp.ne.s32.totalorder %s87, %s90
    %p96 = scmp.eq.s32.totalorder %s25, 0
    %p97 = por %p95, %p96
    %p98 = scmp.ne.s32.totalorder %s87, %s90
    %p99 = scmp.eq.s32.totalorder %s30, 1
    %p100 = por %p98, %p99
    %p101 = scmp.ne.s32.totalorder %s90, %s91
    %p102 = scmp.eq.s32.totalorder %s30, 0
    %p103 = por %p101, %p102
    %p104 = scmp.ne.s32.totalorder %s90, %s91
    %p105 = scmp.eq.s32.totalorder %s31, 1
    %p106 = por %p104, %p105
    %p108 = scmp.ne.s32.totalorder %s91, %s107
    %p109 = scmp.eq.s32.totalorder %s31, 0
    %p110 = por %p108, %p109
    %s112 = sadd.s32 %s111, 1
    %p115 = scmp.eq.s32.totalorder %s25, 1
    %p116 = scmp.ne.s32.totalorder %s111, %s113
    %p117 = scmp.eq.s32.totalorder %s25, 0
    %p118 = por %p116, %p117
    %p119 = scmp.ne.s32.totalorder %s111, %s113
    %p120 = scmp.eq.s32.totalorder %s30, 1
    %p121 = por %p119, %p120
    %p122 = scmp.ne.s32.totalorder %s113, %s114
    %p123 = scmp.eq.s32.totalorder %s30, 0
    %p124 = por %p122, %p123
    %p125 = scmp.ne.s32.totalorder %s113, %s114
    %p126 = scmp.eq.s32.totalorder %s31, 1
    %p127 = por %p125, %p126
    %p129 = scmp.ne.s32.totalorder %s114, %s128
    %p130 = scmp.eq.s32.totalorder %s31, 0
    %p131 = por %p129, %p130
    %s133 = sadd.s32 %s132, 1
    %p136 = scmp.eq.s32.totalorder %s25, 1
    %p137 = scmp.ne.s32.totalorder %s132, %s134
    %p138 = scmp.eq.s32.totalorder %s25, 0
    %p139 = por %p137, %p138
    %p140 = scmp.ne.s32.totalorder %s132, %s134
    %p141 = scmp.eq.s32.totalorder %s30, 1
    %p142 = por %p140, %p141
    %p143 = scmp.ne.s32.totalorder %s134, %s135
    %p144 = scmp.eq.s32.totalorder %s30, 0
    %p145 = por %p143, %p144
    %p146 = scmp.ne.s32.totalorder %s134, %s135
    %p147 = scmp.eq.s32.totalorder %s31, 1
    %p148 = por %p146, %p147
    %p150 = scmp.ne.s32.totalorder %s135, %s149
    %p151 = scmp.eq.s32.totalorder %s31, 0
    %p152 = por %p150, %p151
    %s154 = sadd.s32 %s153, 1
    %p157 = scmp.eq.s32.totalorder %s25, 1
    %p158 = scmp.ne.s32.totalorder %s153, %s155
    %p159 = scmp.eq.s32.totalorder %s25, 0
    %p160 = por %p158, %p159
    %p161 = scmp.ne.s32.totalorder %s153, %s155
    %p162 = scmp.eq.s32.totalorder %s30, 1
    %p163 = por %p161, %p162
    %p164 = scmp.ne.s32.totalorder %s155, %s156
    %p165 = scmp.eq.s32.totalorder %s30, 0
    %p166 = por %p164, %p165
    %p167 = scmp.ne.s32.totalorder %s155, %s156
    %p168 = scmp.eq.s32.totalorder %s31, 1
    %p169 = por %p167, %p168
    %p171 = scmp.ne.s32.totalorder %s156, %s170
    %p172 = scmp.eq.s32.totalorder %s31, 0
    %p173 = por %p171, %p172
    %s175 = sadd.s32 %s174, 1
    %p178 = scmp.eq.s32.totalorder %s25, 1
    %p179 = scmp.ne.s32.totalorder %s174, %s176
    %p180 = scmp.eq.s32.totalorder %s25, 0
    %p181 = por %p179, %p180
    %p182 = scmp.ne.s32.totalorder %s174, %s176
    %p183 = scmp.eq.s32.totalorder %s30, 1
    %p184 = por %p182, %p183
    %p185 = scmp.ne.s32.totalorder %s176, %s177
    %p186 = scmp.eq.s32.totalorder %s30, 0
    %p187 = por %p185, %p186
    %p188 = scmp.ne.s32.totalorder %s176, %s177
    %p189 = scmp.eq.s32.totalorder %s31, 1
    %p190 = por %p188, %p189
    %p192 = scmp.ne.s32.totalorder %s177, %s191
    %p193 = scmp.eq.s32.totalorder %s31, 0
    %p194 = por %p192, %p193
    %s196 = sadd.s32 %s195, 1
    %p199 = scmp.eq.s32.totalorder %s25, 1
    %p200 = scmp.ne.s32.totalorder %s195, %s197
    %p201 = scmp.eq.s32.totalorder %s25, 0
    %p202 = por %p200, %p201
    %p203 = scmp.ne.s32.totalorder %s195, %s197
    %p204 = scmp.eq.s32.totalorder %s30, 1
    %p205 = por %p203, %p204
    %p206 = scmp.ne.s32.totalorder %s197, %s198
    %p207 = scmp.eq.s32.totalorder %s30, 0
    %p208 = por %p206, %p207
    %p209 = scmp.ne.s32.totalorder %s197, %s198
    %p210 = scmp.eq.s32.totalorder %s31, 1
    %p211 = por %p209, %p210
    %p213 = scmp.ne.s32.totalorder %s198, %s212
    %p214 = scmp.eq.s32.totalorder %s31, 0
    %p215 = por %p213, %p214
    %s217 = sadd.s32 %s216, 1
    %p220 = scmp.eq.s32.totalorder %s25, 1
    %p221 = scmp.ne.s32.totalorder %s216, %s218
    %p222 = scmp.eq.s32.totalorder %s25, 0
    %p223 = por %p221, %p222
    %p224 = scmp.ne.s32.totalorder %s216, %s218
    %p225 = scmp.eq.s32.totalorder %s30, 1
    %p226 = por %p224, %p225
    %p227 = scmp.ne.s32.totalorder %s218, %s219
    %p228 = scmp.eq.s32.totalorder %s30, 0
    %p229 = por %p227, %p228
    %p230 = scmp.ne.s32.totalorder %s218, %s219
    %p231 = scmp.eq.s32.totalorder %s31, 1
    %p232 = por %p230, %p231
    %p234 = scmp.ne.s32.totalorder %s219, %s233
    %p235 = scmp.eq.s32.totalorder %s31, 0
    %p236 = por %p234, %p235
    %s238 = sadd.s32 %s237, 1
    %p241 = scmp.eq.s32.totalorder %s25, 1
    %p242 = scmp.ne.s32.totalorder %s237, %s239
    %p243 = scmp.eq.s32.totalorder %s25, 0
    %p244 = por %p242, %p243
    %p245 = scmp.ne.s32.totalorder %s237, %s239
    %p246 = scmp.eq.s32.totalorder %s30, 1
    %p247 = por %p245, %p246
    %p248 = scmp.ne.s32.totalorder %s239, %s240
    %p249 = scmp.eq.s32.totalorder %s30, 0
    %p250 = por %p248, %p249
    %p251 = scmp.ne.s32.totalorder %s239, %s240
    %p252 = scmp.eq.s32.totalorder %s31, 1
    %p253 = por %p251, %p252
    %p255 = scmp.ne.s32.totalorder %s240, %s254
    %p256 = scmp.eq.s32.totalorder %s31, 0
    %p257 = por %p255, %p256
    %s259 = sadd.s32 %s258, 1
    %p262 = scmp.eq.s32.totalorder %s25, 1
    %p263 = scmp.ne.s32.totalorder %s258, %s260
    %p264 = scmp.eq.s32.totalorder %s25, 0
    %p265 = por %p263, %p264
    %p266 = scmp.ne.s32.totalorder %s258, %s260
    %p267 = scmp.eq.s32.totalorder %s30, 1
    %p268 = por %p266, %p267
    %p269 = scmp.ne.s32.totalorder %s260, %s261
    %p270 = scmp.eq.s32.totalorder %s30, 0
    %p271 = por %p269, %p270
    %p272 = scmp.ne.s32.totalorder %s260, %s261
    %p273 = scmp.eq.s32.totalorder %s31, 1
    %p274 = por %p272, %p273
    %p276 = scmp.ne.s32.totalorder %s261, %s275
    %p277 = scmp.eq.s32.totalorder %s31, 0
    %p278 = por %p276, %p277
    %s280 = sadd.s32 %s279, 1
    %p283 = scmp.eq.s32.totalorder %s25, 1
    %p284 = scmp.ne.s32.totalorder %s279, %s281
    %p285 = scmp.eq.s32.totalorder %s25, 0
    %p286 = por %p284, %p285
    %p287 = scmp.ne.s32.totalorder %s279, %s281
    %p288 = scmp.eq.s32.totalorder %s30, 1
    %p289 = por %p287, %p288
    %p290 = scmp.ne.s32.totalorder %s281, %s282
    %p291 = scmp.eq.s32.totalorder %s30, 0
    %p292 = por %p290, %p291
    %p293 = scmp.ne.s32.totalorder %s281, %s282
    %p294 = scmp.eq.s32.totalorder %s31, 1
    %p295 = por %p293, %p294
    %p297 = scmp.ne.s32.totalorder %s282, %s296
    %p298 = scmp.eq.s32.totalorder %s31, 0
    %p299 = por %p297, %p298
    %s301 = sadd.s32 %s300, 1
    %p304 = scmp.eq.s32.totalorder %s25, 1
    %p305 = scmp.ne.s32.totalorder %s300, %s302
    %p306 = scmp.eq.s32.totalorder %s25, 0
    %p307 = por %p305, %p306
    %p308 = scmp.ne.s32.totalorder %s300, %s302
    %p309 = scmp.eq.s32.totalorder %s30, 1
    %p310 = por %p308, %p309
    %p311 = scmp.ne.s32.totalorder %s302, %s303
    %p312 = scmp.eq.s32.totalorder %s30, 0
    %p313 = por %p311, %p312
    %p314 = scmp.ne.s32.totalorder %s302, %s303
    %p315 = scmp.eq.s32.totalorder %s31, 1
    %p316 = por %p314, %p315
    %p318 = scmp.ne.s32.totalorder %s303, %s317
    %p319 = scmp.eq.s32.totalorder %s31, 0
    %p320 = por %p318, %p319
    %s322 = sadd.s32 %s321, 1
    %p325 = scmp.eq.s32.totalorder %s25, 1
    %p326 = scmp.ne.s32.totalorder %s321, %s323
    %p327 = scmp.eq.s32.totalorder %s25, 0
    %p328 = por %p326, %p327
    %p329 = scmp.ne.s32.totalorder %s321, %s323
    %p330 = scmp.eq.s32.totalorder %s30, 1
    %p331 = por %p329, %p330
    %p332 = scmp.ne.s32.totalorder %s323, %s324
    %p333 = scmp.eq.s32.totalorder %s30, 0
    %p334 = por %p332, %p333
    %p335 = scmp.ne.s32.totalorder %s323, %s324
    %p336 = scmp.eq.s32.totalorder %s31, 1
    %p337 = por %p335, %p336
    %p339 = scmp.ne.s32.totalorder %s324, %s338
    %p340 = scmp.eq.s32.totalorder %s31, 0
    %p341 = por %p339, %p340
    %s343 = sadd.s32 %s342, 1
    %p346 = scmp.eq.s32.totalorder %s25, 1
    %p347 = scmp.ne.s32.totalorder %s342, %s344
    %p348 = scmp.eq.s32.totalorder %s25, 0
    %p349 = por %p347, %p348
    %p350 = scmp.ne.s32.totalorder %s342, %s344
    %p351 = scmp.eq.s32.totalorder %s30, 1
    %p352 = por %p350, %p351
    %p353 = scmp.ne.s32.totalorder %s344, %s345
    %p354 = scmp.eq.s32.totalorder %s30, 0
    %p355 = por %p353, %p354
    %p356 = scmp.ne.s32.totalorder %s344, %s345
    %p357 = scmp.eq.s32.totalorder %s31, 1
    %p358 = por %p356, %p357
    %p360 = scmp.ne.s32.totalorder %s345, %s359
    %p361 = scmp.eq.s32.totalorder %s31, 0
    %p362 = por %p360, %p361
    %s363 = ssub.s32 %s25, %s32
    %p364 = scmp.eq.s32.totalorder %s363, 0
    %s366 = sadd.s32 %s365, 1
    %s367 = scalar_select %p364, %s365, %s366
    %p370 = pneg %p364
    %p371 = scmp.eq.s32.totalorder %s25, 1
    %p372 = por %p370, %p371
    %p373 = scmp.ne.s32.totalorder %s365, %s368
    %p374 = scmp.eq.s32.totalorder %s25, 0
    %p375 = por %p373, %p374
    %p376 = scmp.ne.s32.totalorder %s365, %s368
    %p377 = scmp.eq.s32.totalorder %s30, 1
    %p378 = por %p376, %p377
    %p379 = scmp.ne.s32.totalorder %s368, %s369
    %p380 = scmp.eq.s32.totalorder %s30, 0
    %p381 = por %p379, %p380
    %p382 = scmp.ne.s32.totalorder %s368, %s369
    %p383 = scmp.eq.s32.totalorder %s31, 1
    %p384 = por %p382, %p383
    %p386 = scmp.ne.s32.totalorder %s369, %s385
    %p387 = scmp.eq.s32.totalorder %s31, 0
    %p388 = por %p386, %p387
    %s389 = ssub.s32 %s25, %s32
    %p390 = scmp.eq.s32.totalorder %s389, 0
    %s392 = sadd.s32 %s391, 1
    %s393 = scalar_select %p390, %s391, %s392
    %p396 = pneg %p390
    %p397 = scmp.eq.s32.totalorder %s25, 1
    %p398 = por %p396, %p397
    %p399 = scmp.ne.s32.totalorder %s391, %s394
    %p400 = scmp.eq.s32.totalorder %s25, 0
    %p401 = por %p399, %p400
    %p402 = scmp.ne.s32.totalorder %s391, %s394
    %p403 = scmp.eq.s32.totalorder %s30, 1
    %p404 = por %p402, %p403
    %p405 = scmp.ne.s32.totalorder %s394, %s395
    %p406 = scmp.eq.s32.totalorder %s30, 0
    %p407 = por %p405, %p406
    %p408 = scmp.ne.s32.totalorder %s394, %s395
    %p409 = scmp.eq.s32.totalorder %s31, 1
    %p410 = por %p408, %p409
    %p412 = scmp.ne.s32.totalorder %s395, %s411
    %p413 = scmp.eq.s32.totalorder %s31, 0
    %p414 = por %p412, %p413
    %p415 = scmp.le.s32.totalorder 1, %s25
    %p416 = scmp.lt.s32.totalorder %s25, 3
    %p417 = pnand %p415, %p416
    %p418 = pneg %p417
    // Predicated region
    $region9: #{fore_attention_forward.1} parent=5 // pred_check
      _
    $region10: #{fore_attention_forward.1} parent=5 // pred_check_branch
      %420 = sbr.rel (%p417) target = $region12
    $region11: #{fore_attention_forward.1} parent=5 // pred_region
      %s421 = ssub.s32 %s25, 1
      // Predicated region
      $region13: #{fore_attention_forward.1} parent=11 // pred_check
        %p422 = pneg %p124
      $region14: #{fore_attention_forward.1} parent=11 // pred_check_branch
        %424 = sbr.rel (%p422) target = $region16
      $region15: #{fore_attention_forward.1} parent=11 // pred_region
        _
      $region16: #{fore_attention_forward.1} parent=11 // pred_fallthru
        _
      // Predicated region
      $region17: #{fore_attention_forward.1} parent=11 // pred_check
        %p425 = pneg %p145
      $region18: #{fore_attention_forward.1} parent=11 // pred_check_branch
        %427 = sbr.rel (%p425) target = $region20
      $region19: #{fore_attention_forward.1} parent=11 // pred_region
        _
      $region20: #{fore_attention_forward.1} parent=11 // pred_fallthru
        _
      // Predicated region
      $region21: #{fore_attention_forward.1} parent=11 // pred_check
        %p428 = pneg %p166
      $region22: #{fore_attention_forward.1} parent=11 // pred_check_branch
        %430 = sbr.rel (%p428) target = $region24
      $region23: #{fore_attention_forward.1} parent=11 // pred_region
        _
      $region24: #{fore_attention_forward.1} parent=11 // pred_fallthru
        _
      // Predicated region
      $region25: #{fore_attention_forward.1} parent=11 // pred_check
        %p431 = pneg %p187
      $region26: #{fore_attention_forward.1} parent=11 // pred_check_branch
        %433 = sbr.rel (%p431) target = $region28
      $region27: #{fore_attention_forward.1} parent=11 // pred_region
        _
      $region28: #{fore_attention_forward.1} parent=11 // pred_fallthru
        _
      // Predicated region
      $region29: #{fore_attention_forward.1} parent=11 // pred_check
        %p434 = pneg %p208
      $region30: #{fore_attention_forward.1} parent=11 // pred_check_branch
        %436 = sbr.rel (%p434) target = $region32
      $region31: #{fore_attention_forward.1} parent=11 // pred_region
        _
      $region32: #{fore_attention_forward.1} parent=11 // pred_fallthru
        _
      // Predicated region
      $region33: #{fore_attention_forward.1} parent=11 // pred_check
        %p437 = pneg %p229
      $region34: #{fore_attention_forward.1} parent=11 // pred_check_branch
        %439 = sbr.rel (%p437) target = $region36
      $region35: #{fore_attention_forward.1} parent=11 // pred_region
        _
      $region36: #{fore_attention_forward.1} parent=11 // pred_fallthru
        _
      // Predicated region
      $region37: #{fore_attention_forward.1} parent=11 // pred_check
        %p440 = pneg %p250
      $region38: #{fore_attention_forward.1} parent=11 // pred_check_branch
        %442 = sbr.rel (%p440) target = $region40
      $region39: #{fore_attention_forward.1} parent=11 // pred_region
        _
      $region40: #{fore_attention_forward.1} parent=11 // pred_fallthru
        _
      // Predicated region
      $region41: #{fore_attention_forward.1} parent=11 // pred_check
        %p443 = pneg %p271
      $region42: #{fore_attention_forward.1} parent=11 // pred_check_branch
        %445 = sbr.rel (%p443) target = $region44
      $region43: #{fore_attention_forward.1} parent=11 // pred_region
        _
      $region44: #{fore_attention_forward.1} parent=11 // pred_fallthru
        _
      // Predicated region
      $region45: #{fore_attention_forward.1} parent=11 // pred_check
        %p446 = pneg %p292
      $region46: #{fore_attention_forward.1} parent=11 // pred_check_branch
        %448 = sbr.rel (%p446) target = $region48
      $region47: #{fore_attention_forward.1} parent=11 // pred_region
        _
      $region48: #{fore_attention_forward.1} parent=11 // pred_fallthru
        _
      // Predicated region
      $region49: #{fore_attention_forward.1} parent=11 // pred_check
        %p449 = pneg %p313
      $region50: #{fore_attention_forward.1} parent=11 // pred_check_branch
        %451 = sbr.rel (%p449) target = $region52
      $region51: #{fore_attention_forward.1} parent=11 // pred_region
        _
      $region52: #{fore_attention_forward.1} parent=11 // pred_fallthru
        _
      // Predicated region
      $region53: #{fore_attention_forward.1} parent=11 // pred_check
        %p452 = pneg %p334
      $region54: #{fore_attention_forward.1} parent=11 // pred_check_branch
        %454 = sbr.rel (%p452) target = $region56
      $region55: #{fore_attention_forward.1} parent=11 // pred_region
        _
      $region56: #{fore_attention_forward.1} parent=11 // pred_fallthru
        _
      // Predicated region
      $region57: #{fore_attention_forward.1} parent=11 // pred_check
        %p455 = pneg %p355
      $region58: #{fore_attention_forward.1} parent=11 // pred_check_branch
        %457 = sbr.rel (%p455) target = $region60
      $region59: #{fore_attention_forward.1} parent=11 // pred_region
        _
      $region60: #{fore_attention_forward.1} parent=11 // pred_fallthru
        _
    $region12: #{fore_attention_forward.1} parent=5 // pred_fallthru
      _
    %p458 = scmp.lt.s32.totalorder %s25, 2
    // Predicated region
    $region61: #{fore_attention_forward.1} parent=5 // pred_check
      %p459 = pneg %p458
    $region62: #{fore_attention_forward.1} parent=5 // pred_check_branch
      %461 = sbr.rel (%p459) target = $region64
    $region63: #{fore_attention_forward.1} parent=5 // pred_region
      // Predicated region
      $region65: #{fore_attention_forward.1} parent=63 // pred_check
        %p462 = pneg %p45
      $region66: #{fore_attention_forward.1} parent=63 // pred_check_branch
        %464 = sbr.rel (%p462) target = $region68
      $region67: #{fore_attention_forward.1} parent=63 // pred_region
        %p465 = scmp.lt.s32.totalorder %s25, 1
        %s466 = scalar_select %p465, %s25, 1
        %s467 = smul.addr %s466, 2
        %s468 = smul.addr %s467, 8
        %s469 = scalar_lea.vmem %s0, %s468
      $region68: #{fore_attention_forward.1} parent=63 // pred_fallthru
        _
      // Predicated region
      $region69: #{fore_attention_forward.1} parent=63 // pred_check
        %p470 = pneg %p71
      $region70: #{fore_attention_forward.1} parent=63 // pred_check_branch
        %472 = sbr.rel (%p470) target = $region72
      $region71: #{fore_attention_forward.1} parent=63 // pred_region
        %p473 = scmp.lt.s32.totalorder %s25, 1
        %s474 = scalar_select %p473, %s25, 1
        %s475 = smul.addr %s474, 2
        %s476 = smul.addr %s475, 8
        %s477 = scalar_lea.vmem %s1, %s476
      $region72: #{fore_attention_forward.1} parent=63 // pred_fallthru
        _
      // Predicated region
      $region73: #{fore_attention_forward.1} parent=63 // pred_check
        %p478 = pneg %p97
      $region74: #{fore_attention_forward.1} parent=63 // pred_check_branch
        %480 = sbr.rel (%p478) target = $region76
      $region75: #{fore_attention_forward.1} parent=63 // pred_region
        %p481 = scmp.lt.s32.totalorder %s25, 1
        %s482 = scalar_select %p481, %s25, 1
        %s483 = smul.addr %s482, 2
        %s484 = scalar_lea.vmem %s2, %s483
      $region76: #{fore_attention_forward.1} parent=63 // pred_fallthru
        _
    $region64: #{fore_attention_forward.1} parent=5 // pred_fallthru
      _
    %p485 = scmp.le.s32.totalorder 1, %s25
    %p486 = scmp.lt.s32.totalorder %s25, 3
    %p487 = pnand %p485, %p486
    %p488 = pneg %p487
    // Predicated region
    $region77: #{fore_attention_forward.1} parent=5 // pred_check
      _
    $region78: #{fore_attention_forward.1} parent=5 // pred_check_branch
      %490 = sbr.rel (%p487) target = $region80
    $region79: #{fore_attention_forward.1} parent=5 // pred_region
      %s491 = ssub.s32 %s25, 1
      %p492 = scmp.lt.s32.totalorder %s30, 1
      %s493 = scalar_select %p492, %s30, 1
      %s494 = smul.addr %s493, 2
      %s495 = smul.addr %s494, 8
      %s496 = scalar_lea.vmem %s0, %s495
      %p497 = pneg %p51
      %p498 = pneg %p48
      %p499 = scmp.lt.s32.totalorder %s30, 1
      %s500 = scalar_select %p499, %s30, 1
      %s501 = smul.addr %s500, 2
      %s502 = smul.addr %s501, 8
      %s503 = scalar_lea.vmem %s1, %s502
      %p504 = pneg %p77
      %p505 = pneg %p74
      %p506 = scmp.lt.s32.totalorder %s30, 1
      %s507 = scalar_select %p506, %s30, 1
      %s508 = smul.addr %s507, 2
      %s509 = scalar_lea.vmem %s2, %s508
      %p510 = pneg %p103
      %p511 = pneg %p100
      %p512 = pneg %p124
      %p513 = pneg %p121
      %p514 = pneg %p145
      %p515 = pneg %p142
      %p516 = pneg %p166
      %p517 = pneg %p163
      %p518 = pneg %p187
      %p519 = pneg %p184
      %p520 = pneg %p208
      %p521 = pneg %p205
      %p522 = pneg %p229
      %p523 = pneg %p226
      %p524 = pneg %p250
      %p525 = pneg %p247
      %p526 = pneg %p271
      %p527 = pneg %p268
      %p528 = pneg %p292
      %p529 = pneg %p289
      %p530 = pneg %p313
      %p531 = pneg %p310
      %p532 = pneg %p334
      %p533 = pneg %p331
      %p534 = pneg %p355
      %p535 = pneg %p352
      %p536 = pneg %p381
      %p537 = pneg %p378
      %p538 = scmp.lt.s32.totalorder %s30, 1
      %s539 = scalar_select %p538, %s30, 1
      %s540 = smul.addr %s539, 2
      %s541 = smul.addr %s540, 8
      %s542 = scalar_lea.vmem %s15, %s541
      %p543 = pneg %p407
      %p544 = pneg %p404
      %p545 = scmp.lt.s32.totalorder %s30, 1
      %s546 = scalar_select %p545, %s30, 1
      %s547 = smul.addr %s546, 2
      %s548 = scalar_lea.vmem %s16, %s547
      %p549 = scmp.lt.s32.totalorder %s30, 1
      %s550 = scalar_select %p549, %s30, 1
      %s551 = smul.addr %s550, 2
      %s552 = smul.addr %s551, 8
      %s553 = scalar_lea.vmem %s0, %s552
      %p554 = scmp.lt.s32.totalorder %s30, 1
      %s555 = scalar_select %p554, %s30, 1
      %s556 = smul.addr %s555, 2
      %s557 = smul.addr %s556, 8
      %s558 = scalar_lea.vmem %s1, %s557
      %p559 = scmp.lt.s32.totalorder %s30, 1
      %s560 = scalar_select %p559, %s30, 1
      %s561 = smul.addr %s560, 2
      %s562 = scalar_lea.vmem %s2, %s561
      %p563 = scmp.lt.s32.totalorder %s30, 1
      %s564 = scalar_select %p563, %s30, 1
      %s565 = smul.addr %s564, 2
      %s566 = smul.addr %s565, 8
      %s567 = scalar_lea.vmem %s15, %s566
      %p568 = scmp.lt.s32.totalorder %s30, 1
      %s569 = scalar_select %p568, %s30, 1
      %s570 = smul.addr %s569, 2
      %s571 = scalar_lea.vmem %s16, %s570
      %v573 = vld [vmem:[%s553] sm:$0xff]
      %v574 = vld [vmem:[%s553 + $0x8] sm:$0xff]
      %v575 = vld [vmem:[%s558] sm:$0xff]
      %v576 = vld [vmem:[%s558 + $0x8] sm:$0xff]
      %v577 = vld [vmem:[%s562] sm:$0x3]
      %v578 = vlaneseq
      %v579 = vand.u32 %v578, 127
      %v580 = vadd.s32 %v579, 128
      %vm581 = vcmp.lt.s32.totalorder %v579, 0
      %v582 = vsub.s32 0, %v579
      %v583 = vsel %vm581, %v582, %v579
      %v584 = vshrl.u32 %v583, 4
      %v585 = vand.u32 %v583, 15
      %v586 = vsub.s32 0, %v585
      %v587 = vsel %vm581, %v586, %v585
      %vm588 = vcmp.lt.s32.totalorder %v580, 0
      %v589 = vsub.s32 0, %v580
      %v590 = vsel %vm588, %v589, %v580
      %v591 = vshrl.u32 %v590, 4
      %v592 = vand.u32 %v590, 15
      %v593 = vsub.s32 0, %v592
      %v594 = vsel %vm588, %v593, %v592
      %vm595 = vcmp.ne.s32.totalorder %v587, 0
      %vm596 = vcmp.ne.s32.totalorder %v594, 0
      %vm597 = vcmp.lt.s32.totalorder %v587, 0
      %vm598 = vcmp.lt.s32.totalorder %v594, 0
      %vm599 = vmand %vm597, %vm595
      %vm600 = vmand %vm598, %vm596
      %v601 = vadd.s32 %v587, 16
      %v602 = vadd.s32 %v594, 16
      %v603 = vsel %vm599, %v601, %v587
      %v604 = vsel %vm600, %v602, %v594
      %vm605 = vcmp.ge.s32.totalorder %v603, 1
      %vm606 = vcmp.ge.s32.totalorder %v604, 1
      %v607 = vsel %vm605, 1, 0
      %v608 = vsel %vm606, 1, 0
      %v609 = vcvt.s32.f32 %v607
      %v610 = vcvt.s32.f32 %v608
      %vm611 = vcmp.le.s32.totalorder %v603, 14
      %vm612 = vcmp.le.s32.totalorder %v604, 14
      %v613 = vsel %vm611, 1, 0
      %v614 = vsel %vm612, 1, 0
      %v615 = vcvt.s32.f32 %v613
      %v616 = vcvt.s32.f32 %v614
      %v617 = vadd.f32 %v575, %v576
      %618 = vadd.xlane.f32.xlu0 %v617
      %v619 = vpop.xlane.xlu0 %618
      %v620 = vmul.f32 %v619, 0.00390625
      %v621 = vsub.f32 %v575, %v620
      %v622 = vsub.f32 %v576, %v620
      %v623 = vmul.f32 %v621, %v621
      %v624 = vmul.f32 %v622, %v622
      %v625 = vadd.f32 %v623, %v624
      %626 = vadd.xlane.f32.xlu0 %v625
      %v627 = vpop.xlane.xlu0 %626
      %v628 = vmul.f32 %v627, 0.003921569
      %v629 = vrsqrt.pop %v628
      %v630 = vmul.f32 %v628, %v629
      %vm631 = vcmp.eq.f32.partialorder %v628, inf
      %v632 = vsel %vm631, %v628, %v630
      %vm633 = vcmp.eq.f32.partialorder %v628, 0.0
      %v634 = vand.u32 %v628, 2147483648
      %v635 = vsel %vm633, %v634, %v632
      %v636 = vmul.f32 %v635, 2.0
      %v637 = vsub.f32 %v620, %v636
      %v638 = vsub.f32 %v637, %v575
      %v639 = vsub.f32 %v637, %v576
      %v640 = vld [vmem:[%s3] sm:$0xf]
      %v641 = vld [vmem:[%s3 + $0x4] sm:$0xf]
      %v642 = vpack.c.bf16 %v638, %v638
      %v643 = vpack.c.bf16 %v639, %v639
      %v644 = vld [vmem:[%s4] sm:$0xff]
      %v645 = vld [vmem:[%s4 + $0x8] sm:$0xff]
      %647 = vset.pattern.permute.xlu0 0
      %648 = vperm.xlu0 %647, %v644
      %v649 = vpop.permute.xlu0 %648
      %652 = vset.pattern.permute.xlu0 0
      %653 = vperm.xlu0 %652, %v645
      %v654 = vpop.permute.xlu0 %653
      %v658 = vunpack.c.l.b16 %v640
      %v659 = vunpack.c.l.b16 %v641
      %v660 = vpack.c.b16 %v659, %v658
      %vm661 = vcmask 64512
      %v663 = vsel %vm661, %v660, 0
      %vm665 = vcmask 1043456
      %v667 = vsel %vm665, %v642, 0
      %v670 = vsel %vm665, %v643, 0
      %672 = vmatprep.subr.bf16.mxu0 0
      %673 = vmatpush1.bf16.msra.mxu0 0
      %674 = vmatprep.subr.bf16.mxu0 0
      %675 = vmatpush1.bf16.msra.mxu0 0
      %676 = vmatprep.subr.bf16.mxu0 0
      %677 = vmatpush1.bf16.msra.mxu0 0
      %678 = vmatprep.subr.bf16.mxu0 0
      %679 = vmatpush1.bf16.msra.mxu0 0
      %680 = vmatprep.subr.bf16.mxu0 0
      %681 = vmatpush1.bf16.msra.mxu0 0
      %682 = vmatprep.subr.bf16.mxu0 0
      %683 = vmatpush1.bf16.msra.mxu0 0
      %684 = vmatprep.subr.bf16.mxu0 0
      %685 = vmatpush1.bf16.msra.mxu0 0
      %686 = vmatprep.subr.bf16.mxu0 %v670
      %687 = vmatpush1.bf16.msra.mxu0 %v667
      %688 = vmatprep.subr.bf16.mxu0 0
      %689 = vmatpush2.bf16.msra.mxu0 0
      %690 = vmatprep.subr.bf16.mxu0 0
      %691 = vmatpush2.bf16.msra.mxu0 0
      %692 = vmatprep.subr.bf16.mxu0 0
      %693 = vmatpush2.bf16.msra.mxu0 0
      %694 = vmatprep.subr.bf16.mxu0 0
      %695 = vmatpush2.bf16.msra.mxu0 0
      %696 = vmatprep.subr.bf16.mxu0 0
      %697 = vmatpush2.bf16.msra.mxu0 0
      %698 = vmatprep.subr.bf16.mxu0 0
      %699 = vmatpush2.bf16.msra.mxu0 0
      %700 = vmatprep.subr.bf16.mxu0 0
      %701 = vmatpush2.bf16.msra.mxu0 0
      %702 = vmatprep.subr.bf16.mxu0 0
      %703 = vmatpush2.bf16.msra.mxu0 0
      %704 = vmatprep.mubr.bf16.mxu0 0
      %705 = vmatmul.mubr.bf16.gmra.mxu0 %v663
      %v706 = vpop.f32.mrf.mxu0
      %v707 = vadd.f32 %v649, %v706
      %v708 = vpop.f32.mrf.mxu0
      %v709 = vadd.f32 %v649, %v708
      %v710 = vpop.f32.mrf.mxu0
      %v711 = vadd.f32 %v654, %v710
      %v712 = vpop.f32.mrf.mxu0
      %v713 = vadd.f32 %v654, %v712
      %714 = vdwg.mxu0
      %v715 = vmax.f32 %v707, 0.0
      %v716 = vmax.f32 %v709, 0.0
      %v717 = vmax.f32 %v711, 0.0
      %v718 = vmax.f32 %v713, 0.0
      %v719 = vld [vmem:[%s5] sm:$0xf]
      %v720 = vld [vmem:[%s5 + $0x4] sm:$0xf]
      %v721 = vpack.c.bf16 %v717, %v715
      %v722 = vpack.c.bf16 %v718, %v716
      %v723 = vld [vmem:[%s6] sm:$0xff]
      %v724 = vld [vmem:[%s6 + $0x8] sm:$0xff]
      %726 = vset.pattern.permute.xlu0 0
      %727 = vperm.xlu0 %726, %v723
      %v728 = vpop.permute.xlu0 %727
      %731 = vset.pattern.permute.xlu0 0
      %732 = vperm.xlu0 %731, %v724
      %v733 = vpop.permute.xlu0 %732
      %v737 = vunpack.c.l.b16 %v719
      %v738 = vunpack.c.l.b16 %v720
      %v739 = vpack.c.b16 %v738, %v737
      %vm740 = vcmask 130048
      %v742 = vsel %vm740, %v739, 0
      %744 = vmatprep.subr.bf16.mxu0 0
      %745 = vmatpush1.bf16.msra.mxu0 0
      %746 = vmatprep.subr.bf16.mxu0 0
      %747 = vmatpush1.bf16.msra.mxu0 0
      %748 = vmatprep.subr.bf16.mxu0 0
      %749 = vmatpush1.bf16.msra.mxu0 0
      %750 = vmatprep.subr.bf16.mxu0 0
      %751 = vmatpush1.bf16.msra.mxu0 0
      %752 = vmatprep.subr.bf16.mxu0 0
      %753 = vmatpush1.bf16.msra.mxu0 0
      %754 = vmatprep.subr.bf16.mxu0 0
      %755 = vmatpush1.bf16.msra.mxu0 0
      %756 = vmatprep.subr.bf16.mxu0 0
      %757 = vmatpush1.bf16.msra.mxu0 0
      %758 = vmatprep.subr.bf16.mxu0 %v722
      %759 = vmatpush1.bf16.msra.mxu0 %v721
      %760 = vmatprep.subr.bf16.mxu0 0
      %761 = vmatpush2.bf16.msra.mxu0 0
      %762 = vmatprep.subr.bf16.mxu0 0
      %763 = vmatpush2.bf16.msra.mxu0 0
      %764 = vmatprep.subr.bf16.mxu0 0
      %765 = vmatpush2.bf16.msra.mxu0 0
      %766 = vmatprep.subr.bf16.mxu0 0
      %767 = vmatpush2.bf16.msra.mxu0 0
      %768 = vmatprep.subr.bf16.mxu0 0
      %769 = vmatpush2.bf16.msra.mxu0 0
      %770 = vmatprep.subr.bf16.mxu0 0
      %771 = vmatpush2.bf16.msra.mxu0 0
      %772 = vmatprep.subr.bf16.mxu0 0
      %773 = vmatpush2.bf16.msra.mxu0 0
      %774 = vmatprep.subr.bf16.mxu0 0
      %775 = vmatpush2.bf16.msra.mxu0 0
      %776 = vmatprep.mubr.bf16.mxu0 0
      %777 = vmatmul.mubr.bf16.gmra.mxu0 %v742
      %v778 = vpop.f32.mrf.mxu0
      %v779 = vadd.f32 %v728, %v778
      %v780 = vpop.f32.mrf.mxu0
      %v781 = vadd.f32 %v728, %v780
      %v782 = vpop.f32.mrf.mxu0
      %v783 = vadd.f32 %v733, %v782
      %v784 = vpop.f32.mrf.mxu0
      %v785 = vadd.f32 %v733, %v784
      %786 = vdwg.mxu0
      %v787 = vsub.f32 0.0, %v779
      %v788 = vsub.f32 0.0, %v781
      %v789 = vsub.f32 0.0, %v783
      %v790 = vsub.f32 0.0, %v785
      %v791 = vmul.f32 %v787, 1.442695
      %v792 = vpow.pop %v791
      %v793 = vmul.f32 %v788, 1.442695
      %v794 = vpow.pop %v793
      %v795 = vmul.f32 %v789, 1.442695
      %v796 = vpow.pop %v795
      %v797 = vmul.f32 %v790, 1.442695
      %v798 = vpow.pop %v797
      %v799 = vadd.f32 %v792, 1.0
      %v800 = vadd.f32 %v794, 1.0
      %v801 = vadd.f32 %v796, 1.0
      %v802 = vadd.f32 %v798, 1.0
      %v803 = vrcp.pop %v799
      %v804 = vmul.f32 1.0, %v803
      %v805 = vrcp.pop %v800
      %v806 = vmul.f32 1.0, %v805
      %v807 = vrcp.pop %v801
      %v808 = vmul.f32 1.0, %v807
      %v809 = vrcp.pop %v802
      %v810 = vmul.f32 1.0, %v809
      %v811 = vsub.f32 1.0, %v804
      %v812 = vsub.f32 1.0, %v806
      %v813 = vadd.f32 %v811, %v808
      %v814 = vadd.f32 %v812, %v810
      %v815 = vmul.f32 %v573, %v813
      %v816 = vmul.f32 %v574, %v814
      %v817 = vsub.f32 0.0, %v577
      %v818 = vmul.f32 %v817, 1.442695
      %v819 = vpow.pop %v818
      %v820 = vadd.f32 %v819, 1.0
      %v821 = vrcp.pop %v820
      %v822 = vmul.f32 1.0, %v821
      %v824 = vlaneseq
      %v825 = vshrl.u32 %v824, 7
      %v826 = vsub.s32 0, %v825
      %v827 = vrot.slane %v822, %v826
      %v828 = vlaneseq
      %v829 = vshrl.u32 %v828, 7
      %v830 = vsub.s32 1, %v829
      %v831 = vrot.slane %v822, %v830
      %v834 = vmul.f32 %v827, %v573
      %v835 = vmul.f32 %v831, %v574
      %v836 = vld [vmem:[%s7] sm:$0xf]
      %v837 = vpack.c.bf16 %v573, %v573
      %v838 = vpack.c.bf16 %v574, %v574
      %v839 = vld [vmem:[%s8] sm:$0xf]
      %v840 = vpack.c.bf16 %v834, %v834
      %v841 = vpack.c.bf16 %v835, %v835
      %v843 = vsel %vm661, %v839, 0
      %v846 = vsel %vm665, %v840, 0
      %v849 = vsel %vm665, %v841, 0
      %851 = vmatprep.subr.bf16.mxu0 0
      %852 = vmatpush1.bf16.msra.mxu0 0
      %853 = vmatprep.subr.bf16.mxu0 0
      %854 = vmatpush1.bf16.msra.mxu0 0
      %855 = vmatprep.subr.bf16.mxu0 0
      %856 = vmatpush1.bf16.msra.mxu0 0
      %857 = vmatprep.subr.bf16.mxu0 0
      %858 = vmatpush1.bf16.msra.mxu0 0
      %859 = vmatprep.subr.bf16.mxu0 0
      %860 = vmatpush1.bf16.msra.mxu0 0
      %861 = vmatprep.subr.bf16.mxu0 0
      %862 = vmatpush1.bf16.msra.mxu0 0
      %863 = vmatprep.subr.bf16.mxu0 0
      %864 = vmatpush1.bf16.msra.mxu0 0
      %865 = vmatprep.subr.bf16.mxu0 %v849
      %866 = vmatpush1.bf16.msra.mxu0 %v846
      %867 = vmatprep.subr.bf16.mxu0 0
      %868 = vmatpush2.bf16.msra.mxu0 0
      %869 = vmatprep.subr.bf16.mxu0 0
      %870 = vmatpush2.bf16.msra.mxu0 0
      %871 = vmatprep.subr.bf16.mxu0 0
      %872 = vmatpush2.bf16.msra.mxu0 0
      %873 = vmatprep.subr.bf16.mxu0 0
      %874 = vmatpush2.bf16.msra.mxu0 0
      %875 = vmatprep.subr.bf16.mxu0 0
      %876 = vmatpush2.bf16.msra.mxu0 0
      %877 = vmatprep.subr.bf16.mxu0 0
      %878 = vmatpush2.bf16.msra.mxu0 0
      %879 = vmatprep.subr.bf16.mxu0 0
      %880 = vmatpush2.bf16.msra.mxu0 0
      %881 = vmatprep.subr.bf16.mxu0 0
      %882 = vmatpush2.bf16.msra.mxu0 0
      %883 = vmatprep.mubr.bf16.mxu0 0
      %884 = vmatmul.mubr.bf16.gmra.mxu0 %v843
      %v885 = vpop.f32.mrf.mxu0
      %v886 = vadd.f32 0.0, %v885
      %v887 = vpop.f32.mrf.mxu0
      %v888 = vadd.f32 0.0, %v887
      %v889 = vpop.f32.mrf.mxu0
      %v890 = vpop.f32.mrf.mxu0
      %891 = vdwg.mxu0
      %v893 = vsel %vm661, %v836, 0
      %v896 = vsel %vm665, %v837, 0
      %v899 = vsel %vm665, %v838, 0
      %901 = vmatprep.subr.bf16.mxu0 0
      %902 = vmatpush1.bf16.msra.mxu0 0
      %903 = vmatprep.subr.bf16.mxu0 0
      %904 = vmatpush1.bf16.msra.mxu0 0
      %905 = vmatprep.subr.bf16.mxu0 0
      %906 = vmatpush1.bf16.msra.mxu0 0
      %907 = vmatprep.subr.bf16.mxu0 0
      %908 = vmatpush1.bf16.msra.mxu0 0
      %909 = vmatprep.subr.bf16.mxu0 0
      %910 = vmatpush1.bf16.msra.mxu0 0
      %911 = vmatprep.subr.bf16.mxu0 0
      %912 = vmatpush1.bf16.msra.mxu0 0
      %913 = vmatprep.subr.bf16.mxu0 0
      %914 = vmatpush1.bf16.msra.mxu0 0
      %915 = vmatprep.subr.bf16.mxu0 %v899
      %916 = vmatpush1.bf16.msra.mxu0 %v896
      %917 = vmatprep.subr.bf16.mxu0 0
      %918 = vmatpush2.bf16.msra.mxu0 0
      %919 = vmatprep.subr.bf16.mxu0 0
      %920 = vmatpush2.bf16.msra.mxu0 0
      %921 = vmatprep.subr.bf16.mxu0 0
      %922 = vmatpush2.bf16.msra.mxu0 0
      %923 = vmatprep.subr.bf16.mxu0 0
      %924 = vmatpush2.bf16.msra.mxu0 0
      %925 = vmatprep.subr.bf16.mxu0 0
      %926 = vmatpush2.bf16.msra.mxu0 0
      %927 = vmatprep.subr.bf16.mxu0 0
      %928 = vmatpush2.bf16.msra.mxu0 0
      %929 = vmatprep.subr.bf16.mxu0 0
      %930 = vmatpush2.bf16.msra.mxu0 0
      %931 = vmatprep.subr.bf16.mxu0 0
      %932 = vmatpush2.bf16.msra.mxu0 0
      %933 = vmatprep.mubr.bf16.mxu0 0
      %934 = vmatmul.mubr.bf16.gmra.mxu0 %v893
      %v935 = vpop.f32.mrf.mxu0
      %v936 = vadd.f32 %v886, %v935
      %v937 = vpop.f32.mrf.mxu0
      %v938 = vadd.f32 %v888, %v937
      %v939 = vpop.f32.mrf.mxu0
      %v940 = vpop.f32.mrf.mxu0
      %941 = vdwg.mxu0
      %v942 = vld [vmem:[%s9] sm:$0xf]
      %v943 = vpack.c.bf16 %v815, %v815
      %v944 = vpack.c.bf16 %v816, %v816
      %v946 = vsel %vm661, %v942, 0
      %v949 = vsel %vm665, %v943, 0
      %v952 = vsel %vm665, %v944, 0
      %954 = vmatprep.subr.bf16.mxu0 0
      %955 = vmatpush1.bf16.msra.mxu0 0
      %956 = vmatprep.subr.bf16.mxu0 0
      %957 = vmatpush1.bf16.msra.mxu0 0
      %958 = vmatprep.subr.bf16.mxu0 0
      %959 = vmatpush1.bf16.msra.mxu0 0
      %960 = vmatprep.subr.bf16.mxu0 0
      %961 = vmatpush1.bf16.msra.mxu0 0
      %962 = vmatprep.subr.bf16.mxu0 0
      %963 = vmatpush1.bf16.msra.mxu0 0
      %964 = vmatprep.subr.bf16.mxu0 0
      %965 = vmatpush1.bf16.msra.mxu0 0
      %966 = vmatprep.subr.bf16.mxu0 0
      %967 = vmatpush1.bf16.msra.mxu0 0
      %968 = vmatprep.subr.bf16.mxu0 %v952
      %969 = vmatpush1.bf16.msra.mxu0 %v949
      %970 = vmatprep.subr.bf16.mxu0 0
      %971 = vmatpush2.bf16.msra.mxu0 0
      %972 = vmatprep.subr.bf16.mxu0 0
      %973 = vmatpush2.bf16.msra.mxu0 0
      %974 = vmatprep.subr.bf16.mxu0 0
      %975 = vmatpush2.bf16.msra.mxu0 0
      %976 = vmatprep.subr.bf16.mxu0 0
      %977 = vmatpush2.bf16.msra.mxu0 0
      %978 = vmatprep.subr.bf16.mxu0 0
      %979 = vmatpush2.bf16.msra.mxu0 0
      %980 = vmatprep.subr.bf16.mxu0 0
      %981 = vmatpush2.bf16.msra.mxu0 0
      %982 = vmatprep.subr.bf16.mxu0 0
      %983 = vmatpush2.bf16.msra.mxu0 0
      %984 = vmatprep.subr.bf16.mxu0 0
      %985 = vmatpush2.bf16.msra.mxu0 0
      %986 = vmatprep.mubr.bf16.mxu0 0
      %987 = vmatmul.mubr.bf16.gmra.mxu0 %v946
      %v988 = vpop.f32.mrf.mxu0
      %v989 = vadd.f32 0.0, %v988
      %v990 = vpop.f32.mrf.mxu0
      %v991 = vadd.f32 0.0, %v990
      %v992 = vpop.f32.mrf.mxu0
      %v993 = vpop.f32.mrf.mxu0
      %994 = vdwg.mxu0
      %v995 = vadd.f32 %v936, %v989
      %v996 = vadd.f32 %v938, %v991
      %v997 = vld [vmem:[%s10] sm:$0xff]
      %999 = vset.pattern.permute.xlu0 0
      %1000 = vperm.xlu0 %999, %v997
      %v1001 = vpop.permute.xlu0 %1000
      %v1003 = vadd.f32 %v995, %v1001
      %v1004 = vadd.f32 %v996, %v1001
      %1005 = vst [vmem:[#allocation2] sm:$0xff] 0.0
      %1006 = vst [vmem:[#allocation2 + $0x18] sm:$0xff] 0.0
      %1007 = vst [vmem:[#allocation2 + $0x8] sm:$0xff] %v1003
      %1008 = vst [vmem:[#allocation2 + $0x10] sm:$0xff] %v1004
      %v1009 = vld [vmem:[#allocation2] sm:$0xff]
      %v1010 = vld [vmem:[#allocation2 + $0x8] sm:$0xff]
      %v1011 = vld [vmem:[#allocation2 + $0x10] sm:$0xff]
      %v1012 = vld [vmem:[%s11] sm:$0xf]
      %v1013 = vpack.c.bf16 %v1009, %v1009
      %v1014 = vpack.c.bf16 %v1010, %v1010
      %v1015 = vpack.c.bf16 %v1011, %v1011
      %s1016 = scalar_lea.vmem %s11, 4
      %v1017 = vld [vmem:[%s1016] sm:$0xf]
      %s1018 = scalar_lea.vmem %s11, 8
      %v1019 = vld [vmem:[%s1018] sm:$0xf]
      %s1020 = scalar_lea.vmem %s11, 12
      %v1021 = vld [vmem:[%s1020] sm:$0xf]
      %1025 = vrot.lane.b32.xlu0 %v1013, 1
      %v1026 = vpop.permute.xlu0 %1025
      %1027 = vrot.lane.b32.xlu0 %v1014, 1
      %v1028 = vpop.permute.xlu0 %1027
      %1029 = vrot.lane.b32.xlu0 %v1015, 1
      %v1030 = vpop.permute.xlu0 %1029
      %vm1031 = vcmask 7168
      %v1032 = vsel %vm1031, %v1026, %v1028
      %v1033 = vsel %vm1031, %v1028, %v1030
      %v1035 = vsel %vm661, %v1021, 0
      %v1038 = vsel %vm665, %v1032, 0
      %v1041 = vsel %vm665, %v1033, 0
      %1043 = vmatprep.subr.bf16.mxu0 0
      %1044 = vmatpush1.bf16.msra.mxu0 0
      %1045 = vmatprep.subr.bf16.mxu0 0
      %1046 = vmatpush1.bf16.msra.mxu0 0
      %1047 = vmatprep.subr.bf16.mxu0 0
      %1048 = vmatpush1.bf16.msra.mxu0 0
      %1049 = vmatprep.subr.bf16.mxu0 0
      %1050 = vmatpush1.bf16.msra.mxu0 0
      %1051 = vmatprep.subr.bf16.mxu0 0
      %1052 = vmatpush1.bf16.msra.mxu0 0
      %1053 = vmatprep.subr.bf16.mxu0 0
      %1054 = vmatpush1.bf16.msra.mxu0 0
      %1055 = vmatprep.subr.bf16.mxu0 0
      %1056 = vmatpush1.bf16.msra.mxu0 0
      %1057 = vmatprep.subr.bf16.mxu0 %v1041
      %1058 = vmatpush1.bf16.msra.mxu0 %v1038
      %1059 = vmatprep.subr.bf16.mxu0 0
      %1060 = vmatpush2.bf16.msra.mxu0 0
      %1061 = vmatprep.subr.bf16.mxu0 0
      %1062 = vmatpush2.bf16.msra.mxu0 0
      %1063 = vmatprep.subr.bf16.mxu0 0
      %1064 = vmatpush2.bf16.msra.mxu0 0
      %1065 = vmatprep.subr.bf16.mxu0 0
      %1066 = vmatpush2.bf16.msra.mxu0 0
      %1067 = vmatprep.subr.bf16.mxu0 0
      %1068 = vmatpush2.bf16.msra.mxu0 0
      %1069 = vmatprep.subr.bf16.mxu0 0
      %1070 = vmatpush2.bf16.msra.mxu0 0
      %1071 = vmatprep.subr.bf16.mxu0 0
      %1072 = vmatpush2.bf16.msra.mxu0 0
      %1073 = vmatprep.subr.bf16.mxu0 0
      %1074 = vmatpush2.bf16.msra.mxu0 0
      %1075 = vmatprep.mubr.bf16.mxu0 0
      %1076 = vmatmul.mubr.bf16.gmra.mxu0 %v1035
      %v1077 = vpop.f32.mrf.mxu0
      %v1078 = vadd.f32 0.0, %v1077
      %v1079 = vpop.f32.mrf.mxu0
      %v1080 = vadd.f32 0.0, %v1079
      %v1081 = vpop.f32.mrf.mxu0
      %v1082 = vpop.f32.mrf.mxu0
      %1083 = vdwg.mxu0
      %1084 = vrot.lane.b32.xlu0 %v1013, 17
      %v1085 = vpop.permute.xlu0 %1084
      %1086 = vrot.lane.b32.xlu0 %v1014, 17
      %v1087 = vpop.permute.xlu0 %1086
      %1088 = vrot.lane.b32.xlu0 %v1015, 17
      %v1089 = vpop.permute.xlu0 %1088
      %vm1090 = vcmask 138240
      %v1091 = vsel %vm1090, %v1085, %v1087
      %v1092 = vsel %vm1090, %v1087, %v1089
      %v1094 = vsel %vm661, %v1012, 0
      %v1097 = vsel %vm665, %v1091, 0
      %v1100 = vsel %vm665, %v1092, 0
      %1102 = vmatprep.subr.bf16.mxu0 0
      %1103 = vmatpush1.bf16.msra.mxu0 0
      %1104 = vmatprep.subr.bf16.mxu0 0
      %1105 = vmatpush1.bf16.msra.mxu0 0
      %1106 = vmatprep.subr.bf16.mxu0 0
      %1107 = vmatpush1.bf16.msra.mxu0 0
      %1108 = vmatprep.subr.bf16.mxu0 0
      %1109 = vmatpush1.bf16.msra.mxu0 0
      %1110 = vmatprep.subr.bf16.mxu0 0
      %1111 = vmatpush1.bf16.msra.mxu0 0
      %1112 = vmatprep.subr.bf16.mxu0 0
      %1113 = vmatpush1.bf16.msra.mxu0 0
      %1114 = vmatprep.subr.bf16.mxu0 0
      %1115 = vmatpush1.bf16.msra.mxu0 0
      %1116 = vmatprep.subr.bf16.mxu0 %v1100
      %1117 = vmatpush1.bf16.msra.mxu0 %v1097
      %1118 = vmatprep.subr.bf16.mxu0 0
      %1119 = vmatpush2.bf16.msra.mxu0 0
      %1120 = vmatprep.subr.bf16.mxu0 0
      %1121 = vmatpush2.bf16.msra.mxu0 0
      %1122 = vmatprep.subr.bf16.mxu0 0
      %1123 = vmatpush2.bf16.msra.mxu0 0
      %1124 = vmatprep.subr.bf16.mxu0 0
      %1125 = vmatpush2.bf16.msra.mxu0 0
      %1126 = vmatprep.subr.bf16.mxu0 0
      %1127 = vmatpush2.bf16.msra.mxu0 0
      %1128 = vmatprep.subr.bf16.mxu0 0
      %1129 = vmatpush2.bf16.msra.mxu0 0
      %1130 = vmatprep.subr.bf16.mxu0 0
      %1131 = vmatpush2.bf16.msra.mxu0 0
      %1132 = vmatprep.subr.bf16.mxu0 0
      %1133 = vmatpush2.bf16.msra.mxu0 0
      %1134 = vmatprep.mubr.bf16.mxu0 0
      %1135 = vmatmul.mubr.bf16.gmra.mxu0 %v1094
      %v1136 = vpop.f32.mrf.mxu0
      %v1137 = vadd.f32 %v1078, %v1136
      %v1138 = vpop.f32.mrf.mxu0
      %v1139 = vadd.f32 %v1080, %v1138
      %v1140 = vpop.f32.mrf.mxu0
      %v1141 = vpop.f32.mrf.mxu0
      %1142 = vdwg.mxu0
      %s1143 = scalar_lea.vmem %s11, 16
      %v1144 = vld [vmem:[%s1143] sm:$0xf]
      %v1146 = vsel %vm661, %v1144, 0
      %v1149 = vsel %vm665, %v1014, 0
      %v1152 = vsel %vm665, %v1015, 0
      %1154 = vmatprep.subr.bf16.mxu0 0
      %1155 = vmatpush1.bf16.msra.mxu0 0
      %1156 = vmatprep.subr.bf16.mxu0 0
      %1157 = vmatpush1.bf16.msra.mxu0 0
      %1158 = vmatprep.subr.bf16.mxu0 0
      %1159 = vmatpush1.bf16.msra.mxu0 0
      %1160 = vmatprep.subr.bf16.mxu0 0
      %1161 = vmatpush1.bf16.msra.mxu0 0
      %1162 = vmatprep.subr.bf16.mxu0 0
      %1163 = vmatpush1.bf16.msra.mxu0 0
      %1164 = vmatprep.subr.bf16.mxu0 0
      %1165 = vmatpush1.bf16.msra.mxu0 0
      %1166 = vmatprep.subr.bf16.mxu0 0
      %1167 = vmatpush1.bf16.msra.mxu0 0
      %1168 = vmatprep.subr.bf16.mxu0 %v1152
      %1169 = vmatpush1.bf16.msra.mxu0 %v1149
      %1170 = vmatprep.subr.bf16.mxu0 0
      %1171 = vmatpush2.bf16.msra.mxu0 0
      %1172 = vmatprep.subr.bf16.mxu0 0
      %1173 = vmatpush2.bf16.msra.mxu0 0
      %1174 = vmatprep.subr.bf16.mxu0 0
      %1175 = vmatpush2.bf16.msra.mxu0 0
      %1176 = vmatprep.subr.bf16.mxu0 0
      %1177 = vmatpush2.bf16.msra.mxu0 0
      %1178 = vmatprep.subr.bf16.mxu0 0
      %1179 = vmatpush2.bf16.msra.mxu0 0
      %1180 = vmatprep.subr.bf16.mxu0 0
      %1181 = vmatpush2.bf16.msra.mxu0 0
      %1182 = vmatprep.subr.bf16.mxu0 0
      %1183 = vmatpush2.bf16.msra.mxu0 0
      %1184 = vmatprep.subr.bf16.mxu0 0
      %1185 = vmatpush2.bf16.msra.mxu0 0
      %1186 = vmatprep.mubr.bf16.mxu0 0
      %1187 = vmatmul.mubr.bf16.gmra.mxu0 %v1146
      %v1188 = vpop.f32.mrf.mxu0
      %v1189 = vadd.f32 0.0, %v1188
      %v1190 = vpop.f32.mrf.mxu0
      %v1191 = vadd.f32 0.0, %v1190
      %v1192 = vpop.f32.mrf.mxu0
      %v1193 = vpop.f32.mrf.mxu0
      %1194 = vdwg.mxu0
      %1195 = vrot.lane.b32.xlu0 %v1013, 16
      %v1196 = vpop.permute.xlu0 %1195
      %1197 = vrot.lane.b32.xlu0 %v1014, 16
      %v1198 = vpop.permute.xlu0 %1197
      %1199 = vrot.lane.b32.xlu0 %v1015, 16
      %v1200 = vpop.permute.xlu0 %1199
      %vm1201 = vcmask 130048
      %v1202 = vsel %vm1201, %v1196, %v1198
      %v1203 = vsel %vm1201, %v1198, %v1200
      %v1205 = vsel %vm661, %v1017, 0
      %v1208 = vsel %vm665, %v1202, 0
      %v1211 = vsel %vm665, %v1203, 0
      %1213 = vmatprep.subr.bf16.mxu0 0
      %1214 = vmatpush1.bf16.msra.mxu0 0
      %1215 = vmatprep.subr.bf16.mxu0 0
      %1216 = vmatpush1.bf16.msra.mxu0 0
      %1217 = vmatprep.subr.bf16.mxu0 0
      %1218 = vmatpush1.bf16.msra.mxu0 0
      %1219 = vmatprep.subr.bf16.mxu0 0
      %1220 = vmatpush1.bf16.msra.mxu0 0
      %1221 = vmatprep.subr.bf16.mxu0 0
      %1222 = vmatpush1.bf16.msra.mxu0 0
      %1223 = vmatprep.subr.bf16.mxu0 0
      %1224 = vmatpush1.bf16.msra.mxu0 0
      %1225 = vmatprep.subr.bf16.mxu0 0
      %1226 = vmatpush1.bf16.msra.mxu0 0
      %1227 = vmatprep.subr.bf16.mxu0 %v1211
      %1228 = vmatpush1.bf16.msra.mxu0 %v1208
      %1229 = vmatprep.subr.bf16.mxu0 0
      %1230 = vmatpush2.bf16.msra.mxu0 0
      %1231 = vmatprep.subr.bf16.mxu0 0
      %1232 = vmatpush2.bf16.msra.mxu0 0
      %1233 = vmatprep.subr.bf16.mxu0 0
      %1234 = vmatpush2.bf16.msra.mxu0 0
      %1235 = vmatprep.subr.bf16.mxu0 0
      %1236 = vmatpush2.bf16.msra.mxu0 0
      %1237 = vmatprep.subr.bf16.mxu0 0
      %1238 = vmatpush2.bf16.msra.mxu0 0
      %1239 = vmatprep.subr.bf16.mxu0 0
      %1240 = vmatpush2.bf16.msra.mxu0 0
      %1241 = vmatprep.subr.bf16.mxu0 0
      %1242 = vmatpush2.bf16.msra.mxu0 0
      %1243 = vmatprep.subr.bf16.mxu0 0
      %1244 = vmatpush2.bf16.msra.mxu0 0
      %1245 = vmatprep.mubr.bf16.mxu0 0
      %1246 = vmatmul.mubr.bf16.gmra.mxu0 %v1205
      %v1247 = vpop.f32.mrf.mxu0
      %v1248 = vadd.f32 %v1189, %v1247
      %v1249 = vpop.f32.mrf.mxu0
      %v1250 = vadd.f32 %v1191, %v1249
      %v1251 = vpop.f32.mrf.mxu0
      %v1252 = vpop.f32.mrf.mxu0
      %1253 = vdwg.mxu0
      %v1254 = vld [vmem:[#allocation2 + $0x8] sm:$0xff]
      %v1255 = vld [vmem:[#allocation2 + $0x10] sm:$0xff]
      %v1256 = vld [vmem:[#allocation2 + $0x18] sm:$0xff]
      %s1257 = scalar_lea.vmem %s11, 20
      %v1258 = vld [vmem:[%s1257] sm:$0xf]
      %v1259 = vpack.c.bf16 %v1254, %v1254
      %v1260 = vpack.c.bf16 %v1255, %v1255
      %v1261 = vpack.c.bf16 %v1256, %v1256
      %1265 = vrot.lane.b32.xlu0 %v1259, 127
      %v1266 = vpop.permute.xlu0 %1265
      %1267 = vrot.lane.b32.xlu0 %v1260, 127
      %v1268 = vpop.permute.xlu0 %1267
      %1269 = vrot.lane.b32.xlu0 %v1261, 127
      %v1270 = vpop.permute.xlu0 %1269
      %vm1271 = vcmask 1039360
      %v1272 = vsel %vm1271, %v1266, %v1268
      %v1273 = vsel %vm1271, %v1268, %v1270
      %v1275 = vsel %vm661, %v1258, 0
      %v1278 = vsel %vm665, %v1272, 0
      %v1281 = vsel %vm665, %v1273, 0
      %1283 = vmatprep.subr.bf16.mxu0 0
      %1284 = vmatpush1.bf16.msra.mxu0 0
      %1285 = vmatprep.subr.bf16.mxu0 0
      %1286 = vmatpush1.bf16.msra.mxu0 0
      %1287 = vmatprep.subr.bf16.mxu0 0
      %1288 = vmatpush1.bf16.msra.mxu0 0
      %1289 = vmatprep.subr.bf16.mxu0 0
      %1290 = vmatpush1.bf16.msra.mxu0 0
      %1291 = vmatprep.subr.bf16.mxu0 0
      %1292 = vmatpush1.bf16.msra.mxu0 0
      %1293 = vmatprep.subr.bf16.mxu0 0
      %1294 = vmatpush1.bf16.msra.mxu0 0
      %1295 = vmatprep.subr.bf16.mxu0 0
      %1296 = vmatpush1.bf16.msra.mxu0 0
      %1297 = vmatprep.subr.bf16.mxu0 %v1281
      %1298 = vmatpush1.bf16.msra.mxu0 %v1278
      %1299 = vmatprep.subr.bf16.mxu0 0
      %1300 = vmatpush2.bf16.msra.mxu0 0
      %1301 = vmatprep.subr.bf16.mxu0 0
      %1302 = vmatpush2.bf16.msra.mxu0 0
      %1303 = vmatprep.subr.bf16.mxu0 0
      %1304 = vmatpush2.bf16.msra.mxu0 0
      %1305 = vmatprep.subr.bf16.mxu0 0
      %1306 = vmatpush2.bf16.msra.mxu0 0
      %1307 = vmatprep.subr.bf16.mxu0 0
      %1308 = vmatpush2.bf16.msra.mxu0 0
      %1309 = vmatprep.subr.bf16.mxu0 0
      %1310 = vmatpush2.bf16.msra.mxu0 0
      %1311 = vmatprep.subr.bf16.mxu0 0
      %1312 = vmatpush2.bf16.msra.mxu0 0
      %1313 = vmatprep.subr.bf16.mxu0 0
      %1314 = vmatpush2.bf16.msra.mxu0 0
      %1315 = vmatprep.mubr.bf16.mxu0 0
      %1316 = vmatmul.mubr.bf16.gmra.mxu0 %v1275
      %v1317 = vpop.f32.mrf.mxu0
      %v1318 = vadd.f32 0.0, %v1317
      %v1319 = vpop.f32.mrf.mxu0
      %v1320 = vadd.f32 0.0, %v1319
      %v1321 = vpop.f32.mrf.mxu0
      %v1322 = vpop.f32.mrf.mxu0
      %1323 = vdwg.mxu0
      %1324 = vrot.lane.b32.xlu0 %v1013, 15
      %v1325 = vpop.permute.xlu0 %1324
      %1326 = vrot.lane.b32.xlu0 %v1014, 15
      %v1327 = vpop.permute.xlu0 %1326
      %1328 = vrot.lane.b32.xlu0 %v1015, 15
      %v1329 = vpop.permute.xlu0 %1328
      %vm1330 = vcmask 121856
      %v1331 = vsel %vm1330, %v1325, %v1327
      %v1332 = vsel %vm1330, %v1327, %v1329
      %v1334 = vsel %vm661, %v1019, 0
      %v1337 = vsel %vm665, %v1331, 0
      %v1340 = vsel %vm665, %v1332, 0
      %1342 = vmatprep.subr.bf16.mxu0 0
      %1343 = vmatpush1.bf16.msra.mxu0 0
      %1344 = vmatprep.subr.bf16.mxu0 0
      %1345 = vmatpush1.bf16.msra.mxu0 0
      %1346 = vmatprep.subr.bf16.mxu0 0
      %1347 = vmatpush1.bf16.msra.mxu0 0
      %1348 = vmatprep.subr.bf16.mxu0 0
      %1349 = vmatpush1.bf16.msra.mxu0 0
      %1350 = vmatprep.subr.bf16.mxu0 0
      %1351 = vmatpush1.bf16.msra.mxu0 0
      %1352 = vmatprep.subr.bf16.mxu0 0
      %1353 = vmatpush1.bf16.msra.mxu0 0
      %1354 = vmatprep.subr.bf16.mxu0 0
      %1355 = vmatpush1.bf16.msra.mxu0 0
      %1356 = vmatprep.subr.bf16.mxu0 %v1340
      %1357 = vmatpush1.bf16.msra.mxu0 %v1337
      %1358 = vmatprep.subr.bf16.mxu0 0
      %1359 = vmatpush2.bf16.msra.mxu0 0
      %1360 = vmatprep.subr.bf16.mxu0 0
      %1361 = vmatpush2.bf16.msra.mxu0 0
      %1362 = vmatprep.subr.bf16.mxu0 0
      %1363 = vmatpush2.bf16.msra.mxu0 0
      %1364 = vmatprep.subr.bf16.mxu0 0
      %1365 = vmatpush2.bf16.msra.mxu0 0
      %1366 = vmatprep.subr.bf16.mxu0 0
      %1367 = vmatpush2.bf16.msra.mxu0 0
      %1368 = vmatprep.subr.bf16.mxu0 0
      %1369 = vmatpush2.bf16.msra.mxu0 0
      %1370 = vmatprep.subr.bf16.mxu0 0
      %1371 = vmatpush2.bf16.msra.mxu0 0
      %1372 = vmatprep.subr.bf16.mxu0 0
      %1373 = vmatpush2.bf16.msra.mxu0 0
      %1374 = vmatprep.mubr.bf16.mxu0 0
      %1375 = vmatmul.mubr.bf16.gmra.mxu0 %v1334
      %v1376 = vpop.f32.mrf.mxu0
      %v1377 = vadd.f32 %v1318, %v1376
      %v1378 = vpop.f32.mrf.mxu0
      %v1379 = vadd.f32 %v1320, %v1378
      %v1380 = vpop.f32.mrf.mxu0
      %v1381 = vpop.f32.mrf.mxu0
      %1382 = vdwg.mxu0
      %s1383 = scalar_lea.vmem %s11, 24
      %v1384 = vld [vmem:[%s1383] sm:$0xf]
      %1385 = vrot.lane.b32.xlu0 %v1259, 113
      %v1386 = vpop.permute.xlu0 %1385
      %1387 = vrot.lane.b32.xlu0 %v1260, 113
      %v1388 = vpop.permute.xlu0 %1387
      %1389 = vrot.lane.b32.xlu0 %v1261, 113
      %v1390 = vpop.permute.xlu0 %1389
      %vm1391 = vcmask 924672
      %v1392 = vsel %vm1391, %v1386, %v1388
      %v1393 = vsel %vm1391, %v1388, %v1390
      %v1395 = vsel %vm661, %v1384, 0
      %v1398 = vsel %vm665, %v1392, 0
      %v1401 = vsel %vm665, %v1393, 0
      %1403 = vmatprep.subr.bf16.mxu0 0
      %1404 = vmatpush1.bf16.msra.mxu0 0
      %1405 = vmatprep.subr.bf16.mxu0 0
      %1406 = vmatpush1.bf16.msra.mxu0 0
      %1407 = vmatprep.subr.bf16.mxu0 0
      %1408 = vmatpush1.bf16.msra.mxu0 0
      %1409 = vmatprep.subr.bf16.mxu0 0
      %1410 = vmatpush1.bf16.msra.mxu0 0
      %1411 = vmatprep.subr.bf16.mxu0 0
      %1412 = vmatpush1.bf16.msra.mxu0 0
      %1413 = vmatprep.subr.bf16.mxu0 0
      %1414 = vmatpush1.bf16.msra.mxu0 0
      %1415 = vmatprep.subr.bf16.mxu0 0
      %1416 = vmatpush1.bf16.msra.mxu0 0
      %1417 = vmatprep.subr.bf16.mxu0 %v1401
      %1418 = vmatpush1.bf16.msra.mxu0 %v1398
      %1419 = vmatprep.subr.bf16.mxu0 0
      %1420 = vmatpush2.bf16.msra.mxu0 0
      %1421 = vmatprep.subr.bf16.mxu0 0
      %1422 = vmatpush2.bf16.msra.mxu0 0
      %1423 = vmatprep.subr.bf16.mxu0 0
      %1424 = vmatpush2.bf16.msra.mxu0 0
      %1425 = vmatprep.subr.bf16.mxu0 0
      %1426 = vmatpush2.bf16.msra.mxu0 0
      %1427 = vmatprep.subr.bf16.mxu0 0
      %1428 = vmatpush2.bf16.msra.mxu0 0
      %1429 = vmatprep.subr.bf16.mxu0 0
      %1430 = vmatpush2.bf16.msra.mxu0 0
      %1431 = vmatprep.subr.bf16.mxu0 0
      %1432 = vmatpush2.bf16.msra.mxu0 0
      %1433 = vmatprep.subr.bf16.mxu0 0
      %1434 = vmatpush2.bf16.msra.mxu0 0
      %1435 = vmatprep.mubr.bf16.mxu0 0
      %1436 = vmatmul.mubr.bf16.gmra.mxu0 %v1395
      %v1437 = vpop.f32.mrf.mxu0
      %v1438 = vadd.f32 0.0, %v1437
      %v1439 = vpop.f32.mrf.mxu0
      %v1440 = vadd.f32 0.0, %v1439
      %v1441 = vpop.f32.mrf.mxu0
      %v1442 = vpop.f32.mrf.mxu0
      %1443 = vdwg.mxu0
      %v1444 = vadd.f32 %v1137, %v1438
      %v1445 = vadd.f32 %v1139, %v1440
      %s1446 = scalar_lea.vmem %s11, 28
      %v1447 = vld [vmem:[%s1446] sm:$0xf]
      %1448 = vrot.lane.b32.xlu0 %v1259, 112
      %v1449 = vpop.permute.xlu0 %1448
      %1450 = vrot.lane.b32.xlu0 %v1260, 112
      %v1451 = vpop.permute.xlu0 %1450
      %1452 = vrot.lane.b32.xlu0 %v1261, 112
      %v1453 = vpop.permute.xlu0 %1452
      %vm1454 = vcmask 916480
      %v1455 = vsel %vm1454, %v1449, %v1451
      %v1456 = vsel %vm1454, %v1451, %v1453
      %v1458 = vsel %vm661, %v1447, 0
      %v1461 = vsel %vm665, %v1455, 0
      %v1464 = vsel %vm665, %v1456, 0
      %1466 = vmatprep.subr.bf16.mxu0 0
      %1467 = vmatpush1.bf16.msra.mxu0 0
      %1468 = vmatprep.subr.bf16.mxu0 0
      %1469 = vmatpush1.bf16.msra.mxu0 0
      %1470 = vmatprep.subr.bf16.mxu0 0
      %1471 = vmatpush1.bf16.msra.mxu0 0
      %1472 = vmatprep.subr.bf16.mxu0 0
      %1473 = vmatpush1.bf16.msra.mxu0 0
      %1474 = vmatprep.subr.bf16.mxu0 0
      %1475 = vmatpush1.bf16.msra.mxu0 0
      %1476 = vmatprep.subr.bf16.mxu0 0
      %1477 = vmatpush1.bf16.msra.mxu0 0
      %1478 = vmatprep.subr.bf16.mxu0 0
      %1479 = vmatpush1.bf16.msra.mxu0 0
      %1480 = vmatprep.subr.bf16.mxu0 %v1464
      %1481 = vmatpush1.bf16.msra.mxu0 %v1461
      %1482 = vmatprep.subr.bf16.mxu0 0
      %1483 = vmatpush2.bf16.msra.mxu0 0
      %1484 = vmatprep.subr.bf16.mxu0 0
      %1485 = vmatpush2.bf16.msra.mxu0 0
      %1486 = vmatprep.subr.bf16.mxu0 0
      %1487 = vmatpush2.bf16.msra.mxu0 0
      %1488 = vmatprep.subr.bf16.mxu0 0
      %1489 = vmatpush2.bf16.msra.mxu0 0
      %1490 = vmatprep.subr.bf16.mxu0 0
      %1491 = vmatpush2.bf16.msra.mxu0 0
      %1492 = vmatprep.subr.bf16.mxu0 0
      %1493 = vmatpush2.bf16.msra.mxu0 0
      %1494 = vmatprep.subr.bf16.mxu0 0
      %1495 = vmatpush2.bf16.msra.mxu0 0
      %1496 = vmatprep.subr.bf16.mxu0 0
      %1497 = vmatpush2.bf16.msra.mxu0 0
      %1498 = vmatprep.mubr.bf16.mxu0 0
      %1499 = vmatmul.mubr.bf16.gmra.mxu0 %v1458
      %v1500 = vpop.f32.mrf.mxu0
      %v1501 = vadd.f32 0.0, %v1500
      %v1502 = vpop.f32.mrf.mxu0
      %v1503 = vadd.f32 0.0, %v1502
      %v1504 = vpop.f32.mrf.mxu0
      %v1505 = vpop.f32.mrf.mxu0
      %1506 = vdwg.mxu0
      %v1507 = vadd.f32 %v1248, %v1501
      %v1508 = vadd.f32 %v1250, %v1503
      %s1509 = scalar_lea.vmem %s11, 32
      %v1510 = vld [vmem:[%s1509] sm:$0xf]
      %1511 = vrot.lane.b32.xlu0 %v1259, 111
      %v1512 = vpop.permute.xlu0 %1511
      %1513 = vrot.lane.b32.xlu0 %v1260, 111
      %v1514 = vpop.permute.xlu0 %1513
      %1515 = vrot.lane.b32.xlu0 %v1261, 111
      %v1516 = vpop.permute.xlu0 %1515
      %vm1517 = vcmask 908288
      %v1518 = vsel %vm1517, %v1512, %v1514
      %v1519 = vsel %vm1517, %v1514, %v1516
      %v1521 = vsel %vm661, %v1510, 0
      %v1524 = vsel %vm665, %v1518, 0
      %v1527 = vsel %vm665, %v1519, 0
      %1529 = vmatprep.subr.bf16.mxu0 0
      %1530 = vmatpush1.bf16.msra.mxu0 0
      %1531 = vmatprep.subr.bf16.mxu0 0
      %1532 = vmatpush1.bf16.msra.mxu0 0
      %1533 = vmatprep.subr.bf16.mxu0 0
      %1534 = vmatpush1.bf16.msra.mxu0 0
      %1535 = vmatprep.subr.bf16.mxu0 0
      %1536 = vmatpush1.bf16.msra.mxu0 0
      %1537 = vmatprep.subr.bf16.mxu0 0
      %1538 = vmatpush1.bf16.msra.mxu0 0
      %1539 = vmatprep.subr.bf16.mxu0 0
      %1540 = vmatpush1.bf16.msra.mxu0 0
      %1541 = vmatprep.subr.bf16.mxu0 0
      %1542 = vmatpush1.bf16.msra.mxu0 0
      %1543 = vmatprep.subr.bf16.mxu0 %v1527
      %1544 = vmatpush1.bf16.msra.mxu0 %v1524
      %1545 = vmatprep.subr.bf16.mxu0 0
      %1546 = vmatpush2.bf16.msra.mxu0 0
      %1547 = vmatprep.subr.bf16.mxu0 0
      %1548 = vmatpush2.bf16.msra.mxu0 0
      %1549 = vmatprep.subr.bf16.mxu0 0
      %1550 = vmatpush2.bf16.msra.mxu0 0
      %1551 = vmatprep.subr.bf16.mxu0 0
      %1552 = vmatpush2.bf16.msra.mxu0 0
      %1553 = vmatprep.subr.bf16.mxu0 0
      %1554 = vmatpush2.bf16.msra.mxu0 0
      %1555 = vmatprep.subr.bf16.mxu0 0
      %1556 = vmatpush2.bf16.msra.mxu0 0
      %1557 = vmatprep.subr.bf16.mxu0 0
      %1558 = vmatpush2.bf16.msra.mxu0 0
      %1559 = vmatprep.subr.bf16.mxu0 0
      %1560 = vmatpush2.bf16.msra.mxu0 0
      %1561 = vmatprep.mubr.bf16.mxu0 0
      %1562 = vmatmul.mubr.bf16.gmra.mxu0 %v1521
      %v1563 = vpop.f32.mrf.mxu0
      %v1564 = vadd.f32 0.0, %v1563
      %v1565 = vpop.f32.mrf.mxu0
      %v1566 = vadd.f32 0.0, %v1565
      %v1567 = vpop.f32.mrf.mxu0
      %v1568 = vpop.f32.mrf.mxu0
      %1569 = vdwg.mxu0
      %v1570 = vadd.f32 %v1377, %v1564
      %v1571 = vadd.f32 %v1379, %v1566
      %v1572 = vmul.f32 %v609, %v1444
      %v1573 = vmul.f32 %v610, %v1445
      %v1574 = vadd.f32 %v1507, %v1572
      %v1575 = vadd.f32 %v1508, %v1573
      %v1576 = vmul.f32 %v615, %v1570
      %v1577 = vmul.f32 %v616, %v1571
      %v1578 = vadd.f32 %v1574, %v1576
      %v1579 = vadd.f32 %v1575, %v1577
      %v1580 = vld [vmem:[%s12] sm:$0xff]
      %1582 = vset.pattern.permute.xlu0 0
      %1583 = vperm.xlu0 %1582, %v1580
      %v1584 = vpop.permute.xlu0 %1583
      %v1586 = vadd.f32 %v1578, %v1584
      %v1587 = vadd.f32 %v1579, %v1584
      %1588 = vst [vmem:[#allocation2 + $0x8] sm:$0xff] %v1586
      %1589 = vst [vmem:[#allocation2 + $0x10] sm:$0xff] %v1587
      %v1590 = vld [vmem:[#allocation2] sm:$0xff]
      %v1591 = vld [vmem:[#allocation2 + $0x8] sm:$0xff]
      %v1592 = vld [vmem:[#allocation2 + $0x10] sm:$0xff]
      %s1593 = scalar_lea.vmem %s11, 36
      %v1594 = vld [vmem:[%s1593] sm:$0xf]
      %v1595 = vpack.c.bf16 %v1590, %v1590
      %v1596 = vpack.c.bf16 %v1591, %v1591
      %v1597 = vpack.c.bf16 %v1592, %v1592
      %s1598 = scalar_lea.vmem %s11, 40
      %v1599 = vld [vmem:[%s1598] sm:$0xf]
      %s1600 = scalar_lea.vmem %s11, 44
      %v1601 = vld [vmem:[%s1600] sm:$0xf]
      %s1602 = scalar_lea.vmem %s11, 48
      %v1603 = vld [vmem:[%s1602] sm:$0xf]
      %1607 = vrot.lane.b32.xlu0 %v1595, 1
      %v1608 = vpop.permute.xlu0 %1607
      %1609 = vrot.lane.b32.xlu0 %v1596, 1
      %v1610 = vpop.permute.xlu0 %1609
      %1611 = vrot.lane.b32.xlu0 %v1597, 1
      %v1612 = vpop.permute.xlu0 %1611
      %v1613 = vsel %vm1031, %v1608, %v1610
      %v1614 = vsel %vm1031, %v1610, %v1612
      %v1616 = vsel %vm661, %v1603, 0
      %v1619 = vsel %vm665, %v1613, 0
      %v1622 = vsel %vm665, %v1614, 0
      %1624 = vmatprep.subr.bf16.mxu0 0
      %1625 = vmatpush1.bf16.msra.mxu0 0
      %1626 = vmatprep.subr.bf16.mxu0 0
      %1627 = vmatpush1.bf16.msra.mxu0 0
      %1628 = vmatprep.subr.bf16.mxu0 0
      %1629 = vmatpush1.bf16.msra.mxu0 0
      %1630 = vmatprep.subr.bf16.mxu0 0
      %1631 = vmatpush1.bf16.msra.mxu0 0
      %1632 = vmatprep.subr.bf16.mxu0 0
      %1633 = vmatpush1.bf16.msra.mxu0 0
      %1634 = vmatprep.subr.bf16.mxu0 0
      %1635 = vmatpush1.bf16.msra.mxu0 0
      %1636 = vmatprep.subr.bf16.mxu0 0
      %1637 = vmatpush1.bf16.msra.mxu0 0
      %1638 = vmatprep.subr.bf16.mxu0 %v1622
      %1639 = vmatpush1.bf16.msra.mxu0 %v1619
      %1640 = vmatprep.subr.bf16.mxu0 0
      %1641 = vmatpush2.bf16.msra.mxu0 0
      %1642 = vmatprep.subr.bf16.mxu0 0
      %1643 = vmatpush2.bf16.msra.mxu0 0
      %1644 = vmatprep.subr.bf16.mxu0 0
      %1645 = vmatpush2.bf16.msra.mxu0 0
      %1646 = vmatprep.subr.bf16.mxu0 0
      %1647 = vmatpush2.bf16.msra.mxu0 0
      %1648 = vmatprep.subr.bf16.mxu0 0
      %1649 = vmatpush2.bf16.msra.mxu0 0
      %1650 = vmatprep.subr.bf16.mxu0 0
      %1651 = vmatpush2.bf16.msra.mxu0 0
      %1652 = vmatprep.subr.bf16.mxu0 0
      %1653 = vmatpush2.bf16.msra.mxu0 0
      %1654 = vmatprep.subr.bf16.mxu0 0
      %1655 = vmatpush2.bf16.msra.mxu0 0
      %1656 = vmatprep.mubr.bf16.mxu0 0
      %1657 = vmatmul.mubr.bf16.gmra.mxu0 %v1616
      %v1658 = vpop.f32.mrf.mxu0
      %v1659 = vadd.f32 0.0, %v1658
      %v1660 = vpop.f32.mrf.mxu0
      %v1661 = vadd.f32 0.0, %v1660
      %v1662 = vpop.f32.mrf.mxu0
      %v1663 = vpop.f32.mrf.mxu0
      %1664 = vdwg.mxu0
      %1665 = vrot.lane.b32.xlu0 %v1595, 17
      %v1666 = vpop.permute.xlu0 %1665
      %1667 = vrot.lane.b32.xlu0 %v1596, 17
      %v1668 = vpop.permute.xlu0 %1667
      %1669 = vrot.lane.b32.xlu0 %v1597, 17
      %v1670 = vpop.permute.xlu0 %1669
      %v1671 = vsel %vm1090, %v1666, %v1668
      %v1672 = vsel %vm1090, %v1668, %v1670
      %v1674 = vsel %vm661, %v1594, 0
      %v1677 = vsel %vm665, %v1671, 0
      %v1680 = vsel %vm665, %v1672, 0
      %1682 = vmatprep.subr.bf16.mxu0 0
      %1683 = vmatpush1.bf16.msra.mxu0 0
      %1684 = vmatprep.subr.bf16.mxu0 0
      %1685 = vmatpush1.bf16.msra.mxu0 0
      %1686 = vmatprep.subr.bf16.mxu0 0
      %1687 = vmatpush1.bf16.msra.mxu0 0
      %1688 = vmatprep.subr.bf16.mxu0 0
      %1689 = vmatpush1.bf16.msra.mxu0 0
      %1690 = vmatprep.subr.bf16.mxu0 0
      %1691 = vmatpush1.bf16.msra.mxu0 0
      %1692 = vmatprep.subr.bf16.mxu0 0
      %1693 = vmatpush1.bf16.msra.mxu0 0
      %1694 = vmatprep.subr.bf16.mxu0 0
      %1695 = vmatpush1.bf16.msra.mxu0 0
      %1696 = vmatprep.subr.bf16.mxu0 %v1680
      %1697 = vmatpush1.bf16.msra.mxu0 %v1677
      %1698 = vmatprep.subr.bf16.mxu0 0
      %1699 = vmatpush2.bf16.msra.mxu0 0
      %1700 = vmatprep.subr.bf16.mxu0 0
      %1701 = vmatpush2.bf16.msra.mxu0 0
      %1702 = vmatprep.subr.bf16.mxu0 0
      %1703 = vmatpush2.bf16.msra.mxu0 0
      %1704 = vmatprep.subr.bf16.mxu0 0
      %1705 = vmatpush2.bf16.msra.mxu0 0
      %1706 = vmatprep.subr.bf16.mxu0 0
      %1707 = vmatpush2.bf16.msra.mxu0 0
      %1708 = vmatprep.subr.bf16.mxu0 0
      %1709 = vmatpush2.bf16.msra.mxu0 0
      %1710 = vmatprep.subr.bf16.mxu0 0
      %1711 = vmatpush2.bf16.msra.mxu0 0
      %1712 = vmatprep.subr.bf16.mxu0 0
      %1713 = vmatpush2.bf16.msra.mxu0 0
      %1714 = vmatprep.mubr.bf16.mxu0 0
      %1715 = vmatmul.mubr.bf16.gmra.mxu0 %v1674
      %v1716 = vpop.f32.mrf.mxu0
      %v1717 = vadd.f32 %v1659, %v1716
      %v1718 = vpop.f32.mrf.mxu0
      %v1719 = vadd.f32 %v1661, %v1718
      %v1720 = vpop.f32.mrf.mxu0
      %v1721 = vpop.f32.mrf.mxu0
      %1722 = vdwg.mxu0
      %s1723 = scalar_lea.vmem %s11, 52
      %v1724 = vld [vmem:[%s1723] sm:$0xf]
      %v1726 = vsel %vm661, %v1724, 0
      %v1729 = vsel %vm665, %v1596, 0
      %v1732 = vsel %vm665, %v1597, 0
      %1734 = vmatprep.subr.bf16.mxu0 0
      %1735 = vmatpush1.bf16.msra.mxu0 0
      %1736 = vmatprep.subr.bf16.mxu0 0
      %1737 = vmatpush1.bf16.msra.mxu0 0
      %1738 = vmatprep.subr.bf16.mxu0 0
      %1739 = vmatpush1.bf16.msra.mxu0 0
      %1740 = vmatprep.subr.bf16.mxu0 0
      %1741 = vmatpush1.bf16.msra.mxu0 0
      %1742 = vmatprep.subr.bf16.mxu0 0
      %1743 = vmatpush1.bf16.msra.mxu0 0
      %1744 = vmatprep.subr.bf16.mxu0 0
      %1745 = vmatpush1.bf16.msra.mxu0 0
      %1746 = vmatprep.subr.bf16.mxu0 0
      %1747 = vmatpush1.bf16.msra.mxu0 0
      %1748 = vmatprep.subr.bf16.mxu0 %v1732
      %1749 = vmatpush1.bf16.msra.mxu0 %v1729
      %1750 = vmatprep.subr.bf16.mxu0 0
      %1751 = vmatpush2.bf16.msra.mxu0 0
      %1752 = vmatprep.subr.bf16.mxu0 0
      %1753 = vmatpush2.bf16.msra.mxu0 0
      %1754 = vmatprep.subr.bf16.mxu0 0
      %1755 = vmatpush2.bf16.msra.mxu0 0
      %1756 = vmatprep.subr.bf16.mxu0 0
      %1757 = vmatpush2.bf16.msra.mxu0 0
      %1758 = vmatprep.subr.bf16.mxu0 0
      %1759 = vmatpush2.bf16.msra.mxu0 0
      %1760 = vmatprep.subr.bf16.mxu0 0
      %1761 = vmatpush2.bf16.msra.mxu0 0
      %1762 = vmatprep.subr.bf16.mxu0 0
      %1763 = vmatpush2.bf16.msra.mxu0 0
      %1764 = vmatprep.subr.bf16.mxu0 0
      %1765 = vmatpush2.bf16.msra.mxu0 0
      %1766 = vmatprep.mubr.bf16.mxu0 0
      %1767 = vmatmul.mubr.bf16.gmra.mxu0 %v1726
      %v1768 = vpop.f32.mrf.mxu0
      %v1769 = vadd.f32 0.0, %v1768
      %v1770 = vpop.f32.mrf.mxu0
      %v1771 = vadd.f32 0.0, %v1770
      %v1772 = vpop.f32.mrf.mxu0
      %v1773 = vpop.f32.mrf.mxu0
      %1774 = vdwg.mxu0
      %1775 = vrot.lane.b32.xlu0 %v1595, 16
      %v1776 = vpop.permute.xlu0 %1775
      %1777 = vrot.lane.b32.xlu0 %v1596, 16
      %v1778 = vpop.permute.xlu0 %1777
      %1779 = vrot.lane.b32.xlu0 %v1597, 16
      %v1780 = vpop.permute.xlu0 %1779
      %v1781 = vsel %vm1201, %v1776, %v1778
      %v1782 = vsel %vm1201, %v1778, %v1780
      %v1784 = vsel %vm661, %v1599, 0
      %v1787 = vsel %vm665, %v1781, 0
      %v1790 = vsel %vm665, %v1782, 0
      %1792 = vmatprep.subr.bf16.mxu0 0
      %1793 = vmatpush1.bf16.msra.mxu0 0
      %1794 = vmatprep.subr.bf16.mxu0 0
      %1795 = vmatpush1.bf16.msra.mxu0 0
      %1796 = vmatprep.subr.bf16.mxu0 0
      %1797 = vmatpush1.bf16.msra.mxu0 0
      %1798 = vmatprep.subr.bf16.mxu0 0
      %1799 = vmatpush1.bf16.msra.mxu0 0
      %1800 = vmatprep.subr.bf16.mxu0 0
      %1801 = vmatpush1.bf16.msra.mxu0 0
      %1802 = vmatprep.subr.bf16.mxu0 0
      %1803 = vmatpush1.bf16.msra.mxu0 0
      %1804 = vmatprep.subr.bf16.mxu0 0
      %1805 = vmatpush1.bf16.msra.mxu0 0
      %1806 = vmatprep.subr.bf16.mxu0 %v1790
      %1807 = vmatpush1.bf16.msra.mxu0 %v1787
      %1808 = vmatprep.subr.bf16.mxu0 0
      %1809 = vmatpush2.bf16.msra.mxu0 0
      %1810 = vmatprep.subr.bf16.mxu0 0
      %1811 = vmatpush2.bf16.msra.mxu0 0
      %1812 = vmatprep.subr.bf16.mxu0 0
      %1813 = vmatpush2.bf16.msra.mxu0 0
      %1814 = vmatprep.subr.bf16.mxu0 0
      %1815 = vmatpush2.bf16.msra.mxu0 0
      %1816 = vmatprep.subr.bf16.mxu0 0
      %1817 = vmatpush2.bf16.msra.mxu0 0
      %1818 = vmatprep.subr.bf16.mxu0 0
      %1819 = vmatpush2.bf16.msra.mxu0 0
      %1820 = vmatprep.subr.bf16.mxu0 0
      %1821 = vmatpush2.bf16.msra.mxu0 0
      %1822 = vmatprep.subr.bf16.mxu0 0
      %1823 = vmatpush2.bf16.msra.mxu0 0
      %1824 = vmatprep.mubr.bf16.mxu0 0
      %1825 = vmatmul.mubr.bf16.gmra.mxu0 %v1784
      %v1826 = vpop.f32.mrf.mxu0
      %v1827 = vadd.f32 %v1769, %v1826
      %v1828 = vpop.f32.mrf.mxu0
      %v1829 = vadd.f32 %v1771, %v1828
      %v1830 = vpop.f32.mrf.mxu0
      %v1831 = vpop.f32.mrf.mxu0
      %1832 = vdwg.mxu0
      %v1833 = vld [vmem:[#allocation2 + $0x8] sm:$0xff]
      %v1834 = vld [vmem:[#allocation2 + $0x10] sm:$0xff]
      %v1835 = vld [vmem:[#allocation2 + $0x18] sm:$0xff]
      %s1836 = scalar_lea.vmem %s11, 56
      %v1837 = vld [vmem:[%s1836] sm:$0xf]
      %v1838 = vpack.c.bf16 %v1833, %v1833
      %v1839 = vpack.c.bf16 %v1834, %v1834
      %v1840 = vpack.c.bf16 %v1835, %v1835
      %1844 = vrot.lane.b32.xlu0 %v1838, 127
      %v1845 = vpop.permute.xlu0 %1844
      %1846 = vrot.lane.b32.xlu0 %v1839, 127
      %v1847 = vpop.permute.xlu0 %1846
      %1848 = vrot.lane.b32.xlu0 %v1840, 127
      %v1849 = vpop.permute.xlu0 %1848
      %v1850 = vsel %vm1271, %v1845, %v1847
      %v1851 = vsel %vm1271, %v1847, %v1849
      %v1853 = vsel %vm661, %v1837, 0
      %v1856 = vsel %vm665, %v1850, 0
      %v1859 = vsel %vm665, %v1851, 0
      %1861 = vmatprep.subr.bf16.mxu0 0
      %1862 = vmatpush1.bf16.msra.mxu0 0
      %1863 = vmatprep.subr.bf16.mxu0 0
      %1864 = vmatpush1.bf16.msra.mxu0 0
      %1865 = vmatprep.subr.bf16.mxu0 0
      %1866 = vmatpush1.bf16.msra.mxu0 0
      %1867 = vmatprep.subr.bf16.mxu0 0
      %1868 = vmatpush1.bf16.msra.mxu0 0
      %1869 = vmatprep.subr.bf16.mxu0 0
      %1870 = vmatpush1.bf16.msra.mxu0 0
      %1871 = vmatprep.subr.bf16.mxu0 0
      %1872 = vmatpush1.bf16.msra.mxu0 0
      %1873 = vmatprep.subr.bf16.mxu0 0
      %1874 = vmatpush1.bf16.msra.mxu0 0
      %1875 = vmatprep.subr.bf16.mxu0 %v1859
      %1876 = vmatpush1.bf16.msra.mxu0 %v1856
      %1877 = vmatprep.subr.bf16.mxu0 0
      %1878 = vmatpush2.bf16.msra.mxu0 0
      %1879 = vmatprep.subr.bf16.mxu0 0
      %1880 = vmatpush2.bf16.msra.mxu0 0
      %1881 = vmatprep.subr.bf16.mxu0 0
      %1882 = vmatpush2.bf16.msra.mxu0 0
      %1883 = vmatprep.subr.bf16.mxu0 0
      %1884 = vmatpush2.bf16.msra.mxu0 0
      %1885 = vmatprep.subr.bf16.mxu0 0
      %1886 = vmatpush2.bf16.msra.mxu0 0
      %1887 = vmatprep.subr.bf16.mxu0 0
      %1888 = vmatpush2.bf16.msra.mxu0 0
      %1889 = vmatprep.subr.bf16.mxu0 0
      %1890 = vmatpush2.bf16.msra.mxu0 0
      %1891 = vmatprep.subr.bf16.mxu0 0
      %1892 = vmatpush2.bf16.msra.mxu0 0
      %1893 = vmatprep.mubr.bf16.mxu0 0
      %1894 = vmatmul.mubr.bf16.gmra.mxu0 %v1853
      %v1895 = vpop.f32.mrf.mxu0
      %v1896 = vadd.f32 0.0, %v1895
      %v1897 = vpop.f32.mrf.mxu0
      %v1898 = vadd.f32 0.0, %v1897
      %v1899 = vpop.f32.mrf.mxu0
      %v1900 = vpop.f32.mrf.mxu0
      %1901 = vdwg.mxu0
      %1902 = vrot.lane.b32.xlu0 %v1595, 15
      %v1903 = vpop.permute.xlu0 %1902
      %1904 = vrot.lane.b32.xlu0 %v1596, 15
      %v1905 = vpop.permute.xlu0 %1904
      %1906 = vrot.lane.b32.xlu0 %v1597, 15
      %v1907 = vpop.permute.xlu0 %1906
      %v1908 = vsel %vm1330, %v1903, %v1905
      %v1909 = vsel %vm1330, %v1905, %v1907
      %v1911 = vsel %vm661, %v1601, 0
      %v1914 = vsel %vm665, %v1908, 0
      %v1917 = vsel %vm665, %v1909, 0
      %1919 = vmatprep.subr.bf16.mxu0 0
      %1920 = vmatpush1.bf16.msra.mxu0 0
      %1921 = vmatprep.subr.bf16.mxu0 0
      %1922 = vmatpush1.bf16.msra.mxu0 0
      %1923 = vmatprep.subr.bf16.mxu0 0
      %1924 = vmatpush1.bf16.msra.mxu0 0
      %1925 = vmatprep.subr.bf16.mxu0 0
      %1926 = vmatpush1.bf16.msra.mxu0 0
      %1927 = vmatprep.subr.bf16.mxu0 0
      %1928 = vmatpush1.bf16.msra.mxu0 0
      %1929 = vmatprep.subr.bf16.mxu0 0
      %1930 = vmatpush1.bf16.msra.mxu0 0
      %1931 = vmatprep.subr.bf16.mxu0 0
      %1932 = vmatpush1.bf16.msra.mxu0 0
      %1933 = vmatprep.subr.bf16.mxu0 %v1917
      %1934 = vmatpush1.bf16.msra.mxu0 %v1914
      %1935 = vmatprep.subr.bf16.mxu0 0
      %1936 = vmatpush2.bf16.msra.mxu0 0
      %1937 = vmatprep.subr.bf16.mxu0 0
      %1938 = vmatpush2.bf16.msra.mxu0 0
      %1939 = vmatprep.subr.bf16.mxu0 0
      %1940 = vmatpush2.bf16.msra.mxu0 0
      %1941 = vmatprep.subr.bf16.mxu0 0
      %1942 = vmatpush2.bf16.msra.mxu0 0
      %1943 = vmatprep.subr.bf16.mxu0 0
      %1944 = vmatpush2.bf16.msra.mxu0 0
      %1945 = vmatprep.subr.bf16.mxu0 0
      %1946 = vmatpush2.bf16.msra.mxu0 0
      %1947 = vmatprep.subr.bf16.mxu0 0
      %1948 = vmatpush2.bf16.msra.mxu0 0
      %1949 = vmatprep.subr.bf16.mxu0 0
      %1950 = vmatpush2.bf16.msra.mxu0 0
      %1951 = vmatprep.mubr.bf16.mxu0 0
      %1952 = vmatmul.mubr.bf16.gmra.mxu0 %v1911
      %v1953 = vpop.f32.mrf.mxu0
      %v1954 = vadd.f32 %v1896, %v1953
      %v1955 = vpop.f32.mrf.mxu0
      %v1956 = vadd.f32 %v1898, %v1955
      %v1957 = vpop.f32.mrf.mxu0
      %v1958 = vpop.f32.mrf.mxu0
      %1959 = vdwg.mxu0
      %s1960 = scalar_lea.vmem %s11, 60
      %v1961 = vld [vmem:[%s1960] sm:$0xf]
      %1962 = vrot.lane.b32.xlu0 %v1838, 113
      %v1963 = vpop.permute.xlu0 %1962
      %1964 = vrot.lane.b32.xlu0 %v1839, 113
      %v1965 = vpop.permute.xlu0 %1964
      %1966 = vrot.lane.b32.xlu0 %v1840, 113
      %v1967 = vpop.permute.xlu0 %1966
      %v1968 = vsel %vm1391, %v1963, %v1965
      %v1969 = vsel %vm1391, %v1965, %v1967
      %v1971 = vsel %vm661, %v1961, 0
      %v1974 = vsel %vm665, %v1968, 0
      %v1977 = vsel %vm665, %v1969, 0
      %1979 = vmatprep.subr.bf16.mxu0 0
      %1980 = vmatpush1.bf16.msra.mxu0 0
      %1981 = vmatprep.subr.bf16.mxu0 0
      %1982 = vmatpush1.bf16.msra.mxu0 0
      %1983 = vmatprep.subr.bf16.mxu0 0
      %1984 = vmatpush1.bf16.msra.mxu0 0
      %1985 = vmatprep.subr.bf16.mxu0 0
      %1986 = vmatpush1.bf16.msra.mxu0 0
      %1987 = vmatprep.subr.bf16.mxu0 0
      %1988 = vmatpush1.bf16.msra.mxu0 0
      %1989 = vmatprep.subr.bf16.mxu0 0
      %1990 = vmatpush1.bf16.msra.mxu0 0
      %1991 = vmatprep.subr.bf16.mxu0 0
      %1992 = vmatpush1.bf16.msra.mxu0 0
      %1993 = vmatprep.subr.bf16.mxu0 %v1977
      %1994 = vmatpush1.bf16.msra.mxu0 %v1974
      %1995 = vmatprep.subr.bf16.mxu0 0
      %1996 = vmatpush2.bf16.msra.mxu0 0
      %1997 = vmatprep.subr.bf16.mxu0 0
      %1998 = vmatpush2.bf16.msra.mxu0 0
      %1999 = vmatprep.subr.bf16.mxu0 0
      %2000 = vmatpush2.bf16.msra.mxu0 0
      %2001 = vmatprep.subr.bf16.mxu0 0
      %2002 = vmatpush2.bf16.msra.mxu0 0
      %2003 = vmatprep.subr.bf16.mxu0 0
      %2004 = vmatpush2.bf16.msra.mxu0 0
      %2005 = vmatprep.subr.bf16.mxu0 0
      %2006 = vmatpush2.bf16.msra.mxu0 0
      %2007 = vmatprep.subr.bf16.mxu0 0
      %2008 = vmatpush2.bf16.msra.mxu0 0
      %2009 = vmatprep.subr.bf16.mxu0 0
      %2010 = vmatpush2.bf16.msra.mxu0 0
      %2011 = vmatprep.mubr.bf16.mxu0 0
      %2012 = vmatmul.mubr.bf16.gmra.mxu0 %v1971
      %v2013 = vpop.f32.mrf.mxu0
      %v2014 = vadd.f32 0.0, %v2013
      %v2015 = vpop.f32.mrf.mxu0
      %v2016 = vadd.f32 0.0, %v2015
      %v2017 = vpop.f32.mrf.mxu0
      %v2018 = vpop.f32.mrf.mxu0
      %2019 = vdwg.mxu0
      %v2020 = vadd.f32 %v1717, %v2014
      %v2021 = vadd.f32 %v1719, %v2016
      %s2022 = scalar_lea.vmem %s11, 64
      %v2023 = vld [vmem:[%s2022] sm:$0xf]
      %2024 = vrot.lane.b32.xlu0 %v1838, 112
      %v2025 = vpop.permute.xlu0 %2024
      %2026 = vrot.lane.b32.xlu0 %v1839, 112
      %v2027 = vpop.permute.xlu0 %2026
      %2028 = vrot.lane.b32.xlu0 %v1840, 112
      %v2029 = vpop.permute.xlu0 %2028
      %v2030 = vsel %vm1454, %v2025, %v2027
      %v2031 = vsel %vm1454, %v2027, %v2029
      %v2033 = vsel %vm661, %v2023, 0
      %v2036 = vsel %vm665, %v2030, 0
      %v2039 = vsel %vm665, %v2031, 0
      %2041 = vmatprep.subr.bf16.mxu0 0
      %2042 = vmatpush1.bf16.msra.mxu0 0
      %2043 = vmatprep.subr.bf16.mxu0 0
      %2044 = vmatpush1.bf16.msra.mxu0 0
      %2045 = vmatprep.subr.bf16.mxu0 0
      %2046 = vmatpush1.bf16.msra.mxu0 0
      %2047 = vmatprep.subr.bf16.mxu0 0
      %2048 = vmatpush1.bf16.msra.mxu0 0
      %2049 = vmatprep.subr.bf16.mxu0 0
      %2050 = vmatpush1.bf16.msra.mxu0 0
      %2051 = vmatprep.subr.bf16.mxu0 0
      %2052 = vmatpush1.bf16.msra.mxu0 0
      %2053 = vmatprep.subr.bf16.mxu0 0
      %2054 = vmatpush1.bf16.msra.mxu0 0
      %2055 = vmatprep.subr.bf16.mxu0 %v2039
      %2056 = vmatpush1.bf16.msra.mxu0 %v2036
      %2057 = vmatprep.subr.bf16.mxu0 0
      %2058 = vmatpush2.bf16.msra.mxu0 0
      %2059 = vmatprep.subr.bf16.mxu0 0
      %2060 = vmatpush2.bf16.msra.mxu0 0
      %2061 = vmatprep.subr.bf16.mxu0 0
      %2062 = vmatpush2.bf16.msra.mxu0 0
      %2063 = vmatprep.subr.bf16.mxu0 0
      %2064 = vmatpush2.bf16.msra.mxu0 0
      %2065 = vmatprep.subr.bf16.mxu0 0
      %2066 = vmatpush2.bf16.msra.mxu0 0
      %2067 = vmatprep.subr.bf16.mxu0 0
      %2068 = vmatpush2.bf16.msra.mxu0 0
      %2069 = vmatprep.subr.bf16.mxu0 0
      %2070 = vmatpush2.bf16.msra.mxu0 0
      %2071 = vmatprep.subr.bf16.mxu0 0
      %2072 = vmatpush2.bf16.msra.mxu0 0
      %2073 = vmatprep.mubr.bf16.mxu0 0
      %2074 = vmatmul.mubr.bf16.gmra.mxu0 %v2033
      %v2075 = vpop.f32.mrf.mxu0
      %v2076 = vadd.f32 0.0, %v2075
      %v2077 = vpop.f32.mrf.mxu0
      %v2078 = vadd.f32 0.0, %v2077
      %v2079 = vpop.f32.mrf.mxu0
      %v2080 = vpop.f32.mrf.mxu0
      %2081 = vdwg.mxu0
      %v2082 = vadd.f32 %v1827, %v2076
      %v2083 = vadd.f32 %v1829, %v2078
      %s2084 = scalar_lea.vmem %s11, 68
      %v2085 = vld [vmem:[%s2084] sm:$0xf]
      %2086 = vrot.lane.b32.xlu0 %v1838, 111
      %v2087 = vpop.permute.xlu0 %2086
      %2088 = vrot.lane.b32.xlu0 %v1839, 111
      %v2089 = vpop.permute.xlu0 %2088
      %2090 = vrot.lane.b32.xlu0 %v1840, 111
      %v2091 = vpop.permute.xlu0 %2090
      %v2092 = vsel %vm1517, %v2087, %v2089
      %v2093 = vsel %vm1517, %v2089, %v2091
      %v2095 = vsel %vm661, %v2085, 0
      %v2098 = vsel %vm665, %v2092, 0
      %v2101 = vsel %vm665, %v2093, 0
      %2103 = vmatprep.subr.bf16.mxu0 0
      %2104 = vmatpush1.bf16.msra.mxu0 0
      %2105 = vmatprep.subr.bf16.mxu0 0
      %2106 = vmatpush1.bf16.msra.mxu0 0
      %2107 = vmatprep.subr.bf16.mxu0 0
      %2108 = vmatpush1.bf16.msra.mxu0 0
      %2109 = vmatprep.subr.bf16.mxu0 0
      %2110 = vmatpush1.bf16.msra.mxu0 0
      %2111 = vmatprep.subr.bf16.mxu0 0
      %2112 = vmatpush1.bf16.msra.mxu0 0
      %2113 = vmatprep.subr.bf16.mxu0 0
      %2114 = vmatpush1.bf16.msra.mxu0 0
      %2115 = vmatprep.subr.bf16.mxu0 0
      %2116 = vmatpush1.bf16.msra.mxu0 0
      %2117 = vmatprep.subr.bf16.mxu0 %v2101
      %2118 = vmatpush1.bf16.msra.mxu0 %v2098
      %2119 = vmatprep.subr.bf16.mxu0 0
      %2120 = vmatpush2.bf16.msra.mxu0 0
      %2121 = vmatprep.subr.bf16.mxu0 0
      %2122 = vmatpush2.bf16.msra.mxu0 0
      %2123 = vmatprep.subr.bf16.mxu0 0
      %2124 = vmatpush2.bf16.msra.mxu0 0
      %2125 = vmatprep.subr.bf16.mxu0 0
      %2126 = vmatpush2.bf16.msra.mxu0 0
      %2127 = vmatprep.subr.bf16.mxu0 0
      %2128 = vmatpush2.bf16.msra.mxu0 0
      %2129 = vmatprep.subr.bf16.mxu0 0
      %2130 = vmatpush2.bf16.msra.mxu0 0
      %2131 = vmatprep.subr.bf16.mxu0 0
      %2132 = vmatpush2.bf16.msra.mxu0 0
      %2133 = vmatprep.subr.bf16.mxu0 0
      %2134 = vmatpush2.bf16.msra.mxu0 0
      %2135 = vmatprep.mubr.bf16.mxu0 0
      %2136 = vmatmul.mubr.bf16.gmra.mxu0 %v2095
      %v2137 = vpop.f32.mrf.mxu0
      %v2138 = vadd.f32 0.0, %v2137
      %v2139 = vpop.f32.mrf.mxu0
      %v2140 = vadd.f32 0.0, %v2139
      %v2141 = vpop.f32.mrf.mxu0
      %v2142 = vpop.f32.mrf.mxu0
      %2143 = vdwg.mxu0
      %v2144 = vadd.f32 %v1954, %v2138
      %v2145 = vadd.f32 %v1956, %v2140
      %v2146 = vmul.f32 %v609, %v2020
      %v2147 = vmul.f32 %v610, %v2021
      %v2148 = vadd.f32 %v2082, %v2146
      %v2149 = vadd.f32 %v2083, %v2147
      %v2150 = vmul.f32 %v615, %v2144
      %v2151 = vmul.f32 %v616, %v2145
      %v2152 = vadd.f32 %v2148, %v2150
      %v2153 = vadd.f32 %v2149, %v2151
      %s2154 = scalar_lea.vmem %s12, 8
      %v2155 = vld [vmem:[%s2154] sm:$0xff]
      %2157 = vset.pattern.permute.xlu0 0
      %2158 = vperm.xlu0 %2157, %v2155
      %v2159 = vpop.permute.xlu0 %2158
      %v2161 = vadd.f32 %v2152, %v2159
      %v2162 = vadd.f32 %v2153, %v2159
      %2163 = vst [vmem:[#allocation2 + $0x8] sm:$0xff] %v2161
      %2164 = vst [vmem:[#allocation2 + $0x10] sm:$0xff] %v2162
      %v2165 = vld [vmem:[#allocation2] sm:$0xff]
      %v2166 = vld [vmem:[#allocation2 + $0x8] sm:$0xff]
      %v2167 = vld [vmem:[#allocation2 + $0x10] sm:$0xff]
      %s2168 = scalar_lea.vmem %s11, 72
      %v2169 = vld [vmem:[%s2168] sm:$0xf]
      %v2170 = vpack.c.bf16 %v2165, %v2165
      %v2171 = vpack.c.bf16 %v2166, %v2166
      %v2172 = vpack.c.bf16 %v2167, %v2167
      %s2173 = scalar_lea.vmem %s11, 76
      %v2174 = vld [vmem:[%s2173] sm:$0xf]
      %s2175 = scalar_lea.vmem %s11, 80
      %v2176 = vld [vmem:[%s2175] sm:$0xf]
      %s2177 = scalar_lea.vmem %s11, 84
      %v2178 = vld [vmem:[%s2177] sm:$0xf]
      %2182 = vrot.lane.b32.xlu0 %v2170, 1
      %v2183 = vpop.permute.xlu0 %2182
      %2184 = vrot.lane.b32.xlu0 %v2171, 1
      %v2185 = vpop.permute.xlu0 %2184
      %2186 = vrot.lane.b32.xlu0 %v2172, 1
      %v2187 = vpop.permute.xlu0 %2186
      %v2188 = vsel %vm1031, %v2183, %v2185
      %v2189 = vsel %vm1031, %v2185, %v2187
      %v2191 = vsel %vm661, %v2178, 0
      %v2194 = vsel %vm665, %v2188, 0
      %v2197 = vsel %vm665, %v2189, 0
      %2199 = vmatprep.subr.bf16.mxu0 0
      %2200 = vmatpush1.bf16.msra.mxu0 0
      %2201 = vmatprep.subr.bf16.mxu0 0
      %2202 = vmatpush1.bf16.msra.mxu0 0
      %2203 = vmatprep.subr.bf16.mxu0 0
      %2204 = vmatpush1.bf16.msra.mxu0 0
      %2205 = vmatprep.subr.bf16.mxu0 0
      %2206 = vmatpush1.bf16.msra.mxu0 0
      %2207 = vmatprep.subr.bf16.mxu0 0
      %2208 = vmatpush1.bf16.msra.mxu0 0
      %2209 = vmatprep.subr.bf16.mxu0 0
      %2210 = vmatpush1.bf16.msra.mxu0 0
      %2211 = vmatprep.subr.bf16.mxu0 0
      %2212 = vmatpush1.bf16.msra.mxu0 0
      %2213 = vmatprep.subr.bf16.mxu0 %v2197
      %2214 = vmatpush1.bf16.msra.mxu0 %v2194
      %2215 = vmatprep.subr.bf16.mxu0 0
      %2216 = vmatpush2.bf16.msra.mxu0 0
      %2217 = vmatprep.subr.bf16.mxu0 0
      %2218 = vmatpush2.bf16.msra.mxu0 0
      %2219 = vmatprep.subr.bf16.mxu0 0
      %2220 = vmatpush2.bf16.msra.mxu0 0
      %2221 = vmatprep.subr.bf16.mxu0 0
      %2222 = vmatpush2.bf16.msra.mxu0 0
      %2223 = vmatprep.subr.bf16.mxu0 0
      %2224 = vmatpush2.bf16.msra.mxu0 0
      %2225 = vmatprep.subr.bf16.mxu0 0
      %2226 = vmatpush2.bf16.msra.mxu0 0
      %2227 = vmatprep.subr.bf16.mxu0 0
      %2228 = vmatpush2.bf16.msra.mxu0 0
      %2229 = vmatprep.subr.bf16.mxu0 0
      %2230 = vmatpush2.bf16.msra.mxu0 0
      %2231 = vmatprep.mubr.bf16.mxu0 0
      %2232 = vmatmul.mubr.bf16.gmra.mxu0 %v2191
      %v2233 = vpop.f32.mrf.mxu0
      %v2234 = vadd.f32 0.0, %v2233
      %v2235 = vpop.f32.mrf.mxu0
      %v2236 = vadd.f32 0.0, %v2235
      %v2237 = vpop.f32.mrf.mxu0
      %v2238 = vpop.f32.mrf.mxu0
      %2239 = vdwg.mxu0
      %2240 = vrot.lane.b32.xlu0 %v2170, 17
      %v2241 = vpop.permute.xlu0 %2240
      %2242 = vrot.lane.b32.xlu0 %v2171, 17
      %v2243 = vpop.permute.xlu0 %2242
      %2244 = vrot.lane.b32.xlu0 %v2172, 17
      %v2245 = vpop.permute.xlu0 %2244
      %v2246 = vsel %vm1090, %v2241, %v2243
      %v2247 = vsel %vm1090, %v2243, %v2245
      %v2249 = vsel %vm661, %v2169, 0
      %v2252 = vsel %vm665, %v2246, 0
      %v2255 = vsel %vm665, %v2247, 0
      %2257 = vmatprep.subr.bf16.mxu0 0
      %2258 = vmatpush1.bf16.msra.mxu0 0
      %2259 = vmatprep.subr.bf16.mxu0 0
      %2260 = vmatpush1.bf16.msra.mxu0 0
      %2261 = vmatprep.subr.bf16.mxu0 0
      %2262 = vmatpush1.bf16.msra.mxu0 0
      %2263 = vmatprep.subr.bf16.mxu0 0
      %2264 = vmatpush1.bf16.msra.mxu0 0
      %2265 = vmatprep.subr.bf16.mxu0 0
      %2266 = vmatpush1.bf16.msra.mxu0 0
      %2267 = vmatprep.subr.bf16.mxu0 0
      %2268 = vmatpush1.bf16.msra.mxu0 0
      %2269 = vmatprep.subr.bf16.mxu0 0
      %2270 = vmatpush1.bf16.msra.mxu0 0
      %2271 = vmatprep.subr.bf16.mxu0 %v2255
      %2272 = vmatpush1.bf16.msra.mxu0 %v2252
      %2273 = vmatprep.subr.bf16.mxu0 0
      %2274 = vmatpush2.bf16.msra.mxu0 0
      %2275 = vmatprep.subr.bf16.mxu0 0
      %2276 = vmatpush2.bf16.msra.mxu0 0
      %2277 = vmatprep.subr.bf16.mxu0 0
      %2278 = vmatpush2.bf16.msra.mxu0 0
      %2279 = vmatprep.subr.bf16.mxu0 0
      %2280 = vmatpush2.bf16.msra.mxu0 0
      %2281 = vmatprep.subr.bf16.mxu0 0
      %2282 = vmatpush2.bf16.msra.mxu0 0
      %2283 = vmatprep.subr.bf16.mxu0 0
      %2284 = vmatpush2.bf16.msra.mxu0 0
      %2285 = vmatprep.subr.bf16.mxu0 0
      %2286 = vmatpush2.bf16.msra.mxu0 0
      %2287 = vmatprep.subr.bf16.mxu0 0
      %2288 = vmatpush2.bf16.msra.mxu0 0
      %2289 = vmatprep.mubr.bf16.mxu0 0
      %2290 = vmatmul.mubr.bf16.gmra.mxu0 %v2249
      %v2291 = vpop.f32.mrf.mxu0
      %v2292 = vadd.f32 %v2234, %v2291
      %v2293 = vpop.f32.mrf.mxu0
      %v2294 = vadd.f32 %v2236, %v2293
      %v2295 = vpop.f32.mrf.mxu0
      %v2296 = vpop.f32.mrf.mxu0
      %2297 = vdwg.mxu0
      %s2298 = scalar_lea.vmem %s11, 88
      %v2299 = vld [vmem:[%s2298] sm:$0xf]
      %v2301 = vsel %vm661, %v2299, 0
      %v2304 = vsel %vm665, %v2171, 0
      %v2307 = vsel %vm665, %v2172, 0
      %2309 = vmatprep.subr.bf16.mxu0 0
      %2310 = vmatpush1.bf16.msra.mxu0 0
      %2311 = vmatprep.subr.bf16.mxu0 0
      %2312 = vmatpush1.bf16.msra.mxu0 0
      %2313 = vmatprep.subr.bf16.mxu0 0
      %2314 = vmatpush1.bf16.msra.mxu0 0
      %2315 = vmatprep.subr.bf16.mxu0 0
      %2316 = vmatpush1.bf16.msra.mxu0 0
      %2317 = vmatprep.subr.bf16.mxu0 0
      %2318 = vmatpush1.bf16.msra.mxu0 0
      %2319 = vmatprep.subr.bf16.mxu0 0
      %2320 = vmatpush1.bf16.msra.mxu0 0
      %2321 = vmatprep.subr.bf16.mxu0 0
      %2322 = vmatpush1.bf16.msra.mxu0 0
      %2323 = vmatprep.subr.bf16.mxu0 %v2307
      %2324 = vmatpush1.bf16.msra.mxu0 %v2304
      %2325 = vmatprep.subr.bf16.mxu0 0
      %2326 = vmatpush2.bf16.msra.mxu0 0
      %2327 = vmatprep.subr.bf16.mxu0 0
      %2328 = vmatpush2.bf16.msra.mxu0 0
      %2329 = vmatprep.subr.bf16.mxu0 0
      %2330 = vmatpush2.bf16.msra.mxu0 0
      %2331 = vmatprep.subr.bf16.mxu0 0
      %2332 = vmatpush2.bf16.msra.mxu0 0
      %2333 = vmatprep.subr.bf16.mxu0 0
      %2334 = vmatpush2.bf16.msra.mxu0 0
      %2335 = vmatprep.subr.bf16.mxu0 0
      %2336 = vmatpush2.bf16.msra.mxu0 0
      %2337 = vmatprep.subr.bf16.mxu0 0
      %2338 = vmatpush2.bf16.msra.mxu0 0
      %2339 = vmatprep.subr.bf16.mxu0 0
      %2340 = vmatpush2.bf16.msra.mxu0 0
      %2341 = vmatprep.mubr.bf16.mxu0 0
      %2342 = vmatmul.mubr.bf16.gmra.mxu0 %v2301
      %v2343 = vpop.f32.mrf.mxu0
      %v2344 = vadd.f32 0.0, %v2343
      %v2345 = vpop.f32.mrf.mxu0
      %v2346 = vadd.f32 0.0, %v2345
      %v2347 = vpop.f32.mrf.mxu0
      %v2348 = vpop.f32.mrf.mxu0
      %2349 = vdwg.mxu0
      %2350 = vrot.lane.b32.xlu0 %v2170, 16
      %v2351 = vpop.permute.xlu0 %2350
      %2352 = vrot.lane.b32.xlu0 %v2171, 16
      %v2353 = vpop.permute.xlu0 %2352
      %2354 = vrot.lane.b32.xlu0 %v2172, 16
      %v2355 = vpop.permute.xlu0 %2354
      %v2356 = vsel %vm1201, %v2351, %v2353
      %v2357 = vsel %vm1201, %v2353, %v2355
      %v2359 = vsel %vm661, %v2174, 0
      %v2362 = vsel %vm665, %v2356, 0
      %v2365 = vsel %vm665, %v2357, 0
      %2367 = vmatprep.subr.bf16.mxu0 0
      %2368 = vmatpush1.bf16.msra.mxu0 0
      %2369 = vmatprep.subr.bf16.mxu0 0
      %2370 = vmatpush1.bf16.msra.mxu0 0
      %2371 = vmatprep.subr.bf16.mxu0 0
      %2372 = vmatpush1.bf16.msra.mxu0 0
      %2373 = vmatprep.subr.bf16.mxu0 0
      %2374 = vmatpush1.bf16.msra.mxu0 0
      %2375 = vmatprep.subr.bf16.mxu0 0
      %2376 = vmatpush1.bf16.msra.mxu0 0
      %2377 = vmatprep.subr.bf16.mxu0 0
      %2378 = vmatpush1.bf16.msra.mxu0 0
      %2379 = vmatprep.subr.bf16.mxu0 0
      %2380 = vmatpush1.bf16.msra.mxu0 0
      %2381 = vmatprep.subr.bf16.mxu0 %v2365
      %2382 = vmatpush1.bf16.msra.mxu0 %v2362
      %2383 = vmatprep.subr.bf16.mxu0 0
      %2384 = vmatpush2.bf16.msra.mxu0 0
      %2385 = vmatprep.subr.bf16.mxu0 0
      %2386 = vmatpush2.bf16.msra.mxu0 0
      %2387 = vmatprep.subr.bf16.mxu0 0
      %2388 = vmatpush2.bf16.msra.mxu0 0
      %2389 = vmatprep.subr.bf16.mxu0 0
      %2390 = vmatpush2.bf16.msra.mxu0 0
      %2391 = vmatprep.subr.bf16.mxu0 0
      %2392 = vmatpush2.bf16.msra.mxu0 0
      %2393 = vmatprep.subr.bf16.mxu0 0
      %2394 = vmatpush2.bf16.msra.mxu0 0
      %2395 = vmatprep.subr.bf16.mxu0 0
      %2396 = vmatpush2.bf16.msra.mxu0 0
      %2397 = vmatprep.subr.bf16.mxu0 0
      %2398 = vmatpush2.bf16.msra.mxu0 0
      %2399 = vmatprep.mubr.bf16.mxu0 0
      %2400 = vmatmul.mubr.bf16.gmra.mxu0 %v2359
      %v2401 = vpop.f32.mrf.mxu0
      %v2402 = vadd.f32 %v2344, %v2401
      %v2403 = vpop.f32.mrf.mxu0
      %v2404 = vadd.f32 %v2346, %v2403
      %v2405 = vpop.f32.mrf.mxu0
      %v2406 = vpop.f32.mrf.mxu0
      %2407 = vdwg.mxu0
      %v2408 = vld [vmem:[#allocation2 + $0x8] sm:$0xff]
      %v2409 = vld [vmem:[#allocation2 + $0x10] sm:$0xff]
      %v2410 = vld [vmem:[#allocation2 + $0x18] sm:$0xff]
      %s2411 = scalar_lea.vmem %s11, 92
      %v2412 = vld [vmem:[%s2411] sm:$0xf]
      %v2413 = vpack.c.bf16 %v2408, %v2408
      %v2414 = vpack.c.bf16 %v2409, %v2409
      %v2415 = vpack.c.bf16 %v2410, %v2410
      %2419 = vrot.lane.b32.xlu0 %v2413, 127
      %v2420 = vpop.permute.xlu0 %2419
      %2421 = vrot.lane.b32.xlu0 %v2414, 127
      %v2422 = vpop.permute.xlu0 %2421
      %2423 = vrot.lane.b32.xlu0 %v2415, 127
      %v2424 = vpop.permute.xlu0 %2423
      %v2425 = vsel %vm1271, %v2420, %v2422
      %v2426 = vsel %vm1271, %v2422, %v2424
      %v2428 = vsel %vm661, %v2412, 0
      %v2431 = vsel %vm665, %v2425, 0
      %v2434 = vsel %vm665, %v2426, 0
      %2436 = vmatprep.subr.bf16.mxu0 0
      %2437 = vmatpush1.bf16.msra.mxu0 0
      %2438 = vmatprep.subr.bf16.mxu0 0
      %2439 = vmatpush1.bf16.msra.mxu0 0
      %2440 = vmatprep.subr.bf16.mxu0 0
      %2441 = vmatpush1.bf16.msra.mxu0 0
      %2442 = vmatprep.subr.bf16.mxu0 0
      %2443 = vmatpush1.bf16.msra.mxu0 0
      %2444 = vmatprep.subr.bf16.mxu0 0
      %2445 = vmatpush1.bf16.msra.mxu0 0
      %2446 = vmatprep.subr.bf16.mxu0 0
      %2447 = vmatpush1.bf16.msra.mxu0 0
      %2448 = vmatprep.subr.bf16.mxu0 0
      %2449 = vmatpush1.bf16.msra.mxu0 0
      %2450 = vmatprep.subr.bf16.mxu0 %v2434
      %2451 = vmatpush1.bf16.msra.mxu0 %v2431
      %2452 = vmatprep.subr.bf16.mxu0 0
      %2453 = vmatpush2.bf16.msra.mxu0 0
      %2454 = vmatprep.subr.bf16.mxu0 0
      %2455 = vmatpush2.bf16.msra.mxu0 0
      %2456 = vmatprep.subr.bf16.mxu0 0
      %2457 = vmatpush2.bf16.msra.mxu0 0
      %2458 = vmatprep.subr.bf16.mxu0 0
      %2459 = vmatpush2.bf16.msra.mxu0 0
      %2460 = vmatprep.subr.bf16.mxu0 0
      %2461 = vmatpush2.bf16.msra.mxu0 0
      %2462 = vmatprep.subr.bf16.mxu0 0
      %2463 = vmatpush2.bf16.msra.mxu0 0
      %2464 = vmatprep.subr.bf16.mxu0 0
      %2465 = vmatpush2.bf16.msra.mxu0 0
      %2466 = vmatprep.subr.bf16.mxu0 0
      %2467 = vmatpush2.bf16.msra.mxu0 0
      %2468 = vmatprep.mubr.bf16.mxu0 0
      %2469 = vmatmul.mubr.bf16.gmra.mxu0 %v2428
      %v2470 = vpop.f32.mrf.mxu0
      %v2471 = vadd.f32 0.0, %v2470
      %v2472 = vpop.f32.mrf.mxu0
      %v2473 = vadd.f32 0.0, %v2472
      %v2474 = vpop.f32.mrf.mxu0
      %v2475 = vpop.f32.mrf.mxu0
      %2476 = vdwg.mxu0
      %2477 = vrot.lane.b32.xlu0 %v2170, 15
      %v2478 = vpop.permute.xlu0 %2477
      %2479 = vrot.lane.b32.xlu0 %v2171, 15
      %v2480 = vpop.permute.xlu0 %2479
      %2481 = vrot.lane.b32.xlu0 %v2172, 15
      %v2482 = vpop.permute.xlu0 %2481
      %v2483 = vsel %vm1330, %v2478, %v2480
      %v2484 = vsel %vm1330, %v2480, %v2482
      %v2486 = vsel %vm661, %v2176, 0
      %v2489 = vsel %vm665, %v2483, 0
      %v2492 = vsel %vm665, %v2484, 0
      %2494 = vmatprep.subr.bf16.mxu0 0
      %2495 = vmatpush1.bf16.msra.mxu0 0
      %2496 = vmatprep.subr.bf16.mxu0 0
      %2497 = vmatpush1.bf16.msra.mxu0 0
      %2498 = vmatprep.subr.bf16.mxu0 0
      %2499 = vmatpush1.bf16.msra.mxu0 0
      %2500 = vmatprep.subr.bf16.mxu0 0
      %2501 = vmatpush1.bf16.msra.mxu0 0
      %2502 = vmatprep.subr.bf16.mxu0 0
      %2503 = vmatpush1.bf16.msra.mxu0 0
      %2504 = vmatprep.subr.bf16.mxu0 0
      %2505 = vmatpush1.bf16.msra.mxu0 0
      %2506 = vmatprep.subr.bf16.mxu0 0
      %2507 = vmatpush1.bf16.msra.mxu0 0
      %2508 = vmatprep.subr.bf16.mxu0 %v2492
      %2509 = vmatpush1.bf16.msra.mxu0 %v2489
      %2510 = vmatprep.subr.bf16.mxu0 0
      %2511 = vmatpush2.bf16.msra.mxu0 0
      %2512 = vmatprep.subr.bf16.mxu0 0
      %2513 = vmatpush2.bf16.msra.mxu0 0
      %2514 = vmatprep.subr.bf16.mxu0 0
      %2515 = vmatpush2.bf16.msra.mxu0 0
      %2516 = vmatprep.subr.bf16.mxu0 0
      %2517 = vmatpush2.bf16.msra.mxu0 0
      %2518 = vmatprep.subr.bf16.mxu0 0
      %2519 = vmatpush2.bf16.msra.mxu0 0
      %2520 = vmatprep.subr.bf16.mxu0 0
      %2521 = vmatpush2.bf16.msra.mxu0 0
      %2522 = vmatprep.subr.bf16.mxu0 0
      %2523 = vmatpush2.bf16.msra.mxu0 0
      %2524 = vmatprep.subr.bf16.mxu0 0
      %2525 = vmatpush2.bf16.msra.mxu0 0
      %2526 = vmatprep.mubr.bf16.mxu0 0
      %2527 = vmatmul.mubr.bf16.gmra.mxu0 %v2486
      %v2528 = vpop.f32.mrf.mxu0
      %v2529 = vadd.f32 %v2471, %v2528
      %v2530 = vpop.f32.mrf.mxu0
      %v2531 = vadd.f32 %v2473, %v2530
      %v2532 = vpop.f32.mrf.mxu0
      %v2533 = vpop.f32.mrf.mxu0
      %2534 = vdwg.mxu0
      %s2535 = scalar_lea.vmem %s11, 96
      %v2536 = vld [vmem:[%s2535] sm:$0xf]
      %2537 = vrot.lane.b32.xlu0 %v2413, 113
      %v2538 = vpop.permute.xlu0 %2537
      %2539 = vrot.lane.b32.xlu0 %v2414, 113
      %v2540 = vpop.permute.xlu0 %2539
      %2541 = vrot.lane.b32.xlu0 %v2415, 113
      %v2542 = vpop.permute.xlu0 %2541
      %v2543 = vsel %vm1391, %v2538, %v2540
      %v2544 = vsel %vm1391, %v2540, %v2542
      %v2546 = vsel %vm661, %v2536, 0
      %v2549 = vsel %vm665, %v2543, 0
      %v2552 = vsel %vm665, %v2544, 0
      %2554 = vmatprep.subr.bf16.mxu0 0
      %2555 = vmatpush1.bf16.msra.mxu0 0
      %2556 = vmatprep.subr.bf16.mxu0 0
      %2557 = vmatpush1.bf16.msra.mxu0 0
      %2558 = vmatprep.subr.bf16.mxu0 0
      %2559 = vmatpush1.bf16.msra.mxu0 0
      %2560 = vmatprep.subr.bf16.mxu0 0
      %2561 = vmatpush1.bf16.msra.mxu0 0
      %2562 = vmatprep.subr.bf16.mxu0 0
      %2563 = vmatpush1.bf16.msra.mxu0 0
      %2564 = vmatprep.subr.bf16.mxu0 0
      %2565 = vmatpush1.bf16.msra.mxu0 0
      %2566 = vmatprep.subr.bf16.mxu0 0
      %2567 = vmatpush1.bf16.msra.mxu0 0
      %2568 = vmatprep.subr.bf16.mxu0 %v2552
      %2569 = vmatpush1.bf16.msra.mxu0 %v2549
      %2570 = vmatprep.subr.bf16.mxu0 0
      %2571 = vmatpush2.bf16.msra.mxu0 0
      %2572 = vmatprep.subr.bf16.mxu0 0
      %2573 = vmatpush2.bf16.msra.mxu0 0
      %2574 = vmatprep.subr.bf16.mxu0 0
      %2575 = vmatpush2.bf16.msra.mxu0 0
      %2576 = vmatprep.subr.bf16.mxu0 0
      %2577 = vmatpush2.bf16.msra.mxu0 0
      %2578 = vmatprep.subr.bf16.mxu0 0
      %2579 = vmatpush2.bf16.msra.mxu0 0
      %2580 = vmatprep.subr.bf16.mxu0 0
      %2581 = vmatpush2.bf16.msra.mxu0 0
      %2582 = vmatprep.subr.bf16.mxu0 0
      %2583 = vmatpush2.bf16.msra.mxu0 0
      %2584 = vmatprep.subr.bf16.mxu0 0
      %2585 = vmatpush2.bf16.msra.mxu0 0
      %2586 = vmatprep.mubr.bf16.mxu0 0
      %2587 = vmatmul.mubr.bf16.gmra.mxu0 %v2546
      %v2588 = vpop.f32.mrf.mxu0
      %v2589 = vadd.f32 0.0, %v2588
      %v2590 = vpop.f32.mrf.mxu0
      %v2591 = vadd.f32 0.0, %v2590
      %v2592 = vpop.f32.mrf.mxu0
      %v2593 = vpop.f32.mrf.mxu0
      %2594 = vdwg.mxu0
      %v2595 = vadd.f32 %v2292, %v2589
      %v2596 = vadd.f32 %v2294, %v2591
      %s2597 = scalar_lea.vmem %s11, 100
      %v2598 = vld [vmem:[%s2597] sm:$0xf]
      %2599 = vrot.lane.b32.xlu0 %v2413, 112
      %v2600 = vpop.permute.xlu0 %2599
      %2601 = vrot.lane.b32.xlu0 %v2414, 112
      %v2602 = vpop.permute.xlu0 %2601
      %2603 = vrot.lane.b32.xlu0 %v2415, 112
      %v2604 = vpop.permute.xlu0 %2603
      %v2605 = vsel %vm1454, %v2600, %v2602
      %v2606 = vsel %vm1454, %v2602, %v2604
      %v2608 = vsel %vm661, %v2598, 0
      %v2611 = vsel %vm665, %v2605, 0
      %v2614 = vsel %vm665, %v2606, 0
      %2616 = vmatprep.subr.bf16.mxu0 0
      %2617 = vmatpush1.bf16.msra.mxu0 0
      %2618 = vmatprep.subr.bf16.mxu0 0
      %2619 = vmatpush1.bf16.msra.mxu0 0
      %2620 = vmatprep.subr.bf16.mxu0 0
      %2621 = vmatpush1.bf16.msra.mxu0 0
      %2622 = vmatprep.subr.bf16.mxu0 0
      %2623 = vmatpush1.bf16.msra.mxu0 0
      %2624 = vmatprep.subr.bf16.mxu0 0
      %2625 = vmatpush1.bf16.msra.mxu0 0
      %2626 = vmatprep.subr.bf16.mxu0 0
      %2627 = vmatpush1.bf16.msra.mxu0 0
      %2628 = vmatprep.subr.bf16.mxu0 0
      %2629 = vmatpush1.bf16.msra.mxu0 0
      %2630 = vmatprep.subr.bf16.mxu0 %v2614
      %2631 = vmatpush1.bf16.msra.mxu0 %v2611
      %2632 = vmatprep.subr.bf16.mxu0 0
      %2633 = vmatpush2.bf16.msra.mxu0 0
      %2634 = vmatprep.subr.bf16.mxu0 0
      %2635 = vmatpush2.bf16.msra.mxu0 0
      %2636 = vmatprep.subr.bf16.mxu0 0
      %2637 = vmatpush2.bf16.msra.mxu0 0
      %2638 = vmatprep.subr.bf16.mxu0 0
      %2639 = vmatpush2.bf16.msra.mxu0 0
      %2640 = vmatprep.subr.bf16.mxu0 0
      %2641 = vmatpush2.bf16.msra.mxu0 0
      %2642 = vmatprep.subr.bf16.mxu0 0
      %2643 = vmatpush2.bf16.msra.mxu0 0
      %2644 = vmatprep.subr.bf16.mxu0 0
      %2645 = vmatpush2.bf16.msra.mxu0 0
      %2646 = vmatprep.subr.bf16.mxu0 0
      %2647 = vmatpush2.bf16.msra.mxu0 0
      %2648 = vmatprep.mubr.bf16.mxu0 0
      %2649 = vmatmul.mubr.bf16.gmra.mxu0 %v2608
      %v2650 = vpop.f32.mrf.mxu0
      %v2651 = vadd.f32 0.0, %v2650
      %v2652 = vpop.f32.mrf.mxu0
      %v2653 = vadd.f32 0.0, %v2652
      %v2654 = vpop.f32.mrf.mxu0
      %v2655 = vpop.f32.mrf.mxu0
      %2656 = vdwg.mxu0
      %v2657 = vadd.f32 %v2402, %v2651
      %v2658 = vadd.f32 %v2404, %v2653
      %s2659 = scalar_lea.vmem %s11, 104
      %v2660 = vld [vmem:[%s2659] sm:$0xf]
      %2661 = vrot.lane.b32.xlu0 %v2413, 111
      %v2662 = vpop.permute.xlu0 %2661
      %2663 = vrot.lane.b32.xlu0 %v2414, 111
      %v2664 = vpop.permute.xlu0 %2663
      %2665 = vrot.lane.b32.xlu0 %v2415, 111
      %v2666 = vpop.permute.xlu0 %2665
      %v2667 = vsel %vm1517, %v2662, %v2664
      %v2668 = vsel %vm1517, %v2664, %v2666
      %v2670 = vsel %vm661, %v2660, 0
      %v2673 = vsel %vm665, %v2667, 0
      %v2676 = vsel %vm665, %v2668, 0
      %2678 = vmatprep.subr.bf16.mxu0 0
      %2679 = vmatpush1.bf16.msra.mxu0 0
      %2680 = vmatprep.subr.bf16.mxu0 0
      %2681 = vmatpush1.bf16.msra.mxu0 0
      %2682 = vmatprep.subr.bf16.mxu0 0
      %2683 = vmatpush1.bf16.msra.mxu0 0
      %2684 = vmatprep.subr.bf16.mxu0 0
      %2685 = vmatpush1.bf16.msra.mxu0 0
      %2686 = vmatprep.subr.bf16.mxu0 0
      %2687 = vmatpush1.bf16.msra.mxu0 0
      %2688 = vmatprep.subr.bf16.mxu0 0
      %2689 = vmatpush1.bf16.msra.mxu0 0
      %2690 = vmatprep.subr.bf16.mxu0 0
      %2691 = vmatpush1.bf16.msra.mxu0 0
      %2692 = vmatprep.subr.bf16.mxu0 %v2676
      %2693 = vmatpush1.bf16.msra.mxu0 %v2673
      %2694 = vmatprep.subr.bf16.mxu0 0
      %2695 = vmatpush2.bf16.msra.mxu0 0
      %2696 = vmatprep.subr.bf16.mxu0 0
      %2697 = vmatpush2.bf16.msra.mxu0 0
      %2698 = vmatprep.subr.bf16.mxu0 0
      %2699 = vmatpush2.bf16.msra.mxu0 0
      %2700 = vmatprep.subr.bf16.mxu0 0
      %2701 = vmatpush2.bf16.msra.mxu0 0
      %2702 = vmatprep.subr.bf16.mxu0 0
      %2703 = vmatpush2.bf16.msra.mxu0 0
      %2704 = vmatprep.subr.bf16.mxu0 0
      %2705 = vmatpush2.bf16.msra.mxu0 0
      %2706 = vmatprep.subr.bf16.mxu0 0
      %2707 = vmatpush2.bf16.msra.mxu0 0
      %2708 = vmatprep.subr.bf16.mxu0 0
      %2709 = vmatpush2.bf16.msra.mxu0 0
      %2710 = vmatprep.mubr.bf16.mxu0 0
      %2711 = vmatmul.mubr.bf16.gmra.mxu0 %v2670
      %v2712 = vpop.f32.mrf.mxu0
      %v2713 = vadd.f32 0.0, %v2712
      %v2714 = vpop.f32.mrf.mxu0
      %v2715 = vadd.f32 0.0, %v2714
      %v2716 = vpop.f32.mrf.mxu0
      %v2717 = vpop.f32.mrf.mxu0
      %2718 = vdwg.mxu0
      %v2719 = vadd.f32 %v2529, %v2713
      %v2720 = vadd.f32 %v2531, %v2715
      %v2721 = vmul.f32 %v609, %v2595
      %v2722 = vmul.f32 %v610, %v2596
      %v2723 = vadd.f32 %v2657, %v2721
      %v2724 = vadd.f32 %v2658, %v2722
      %v2725 = vmul.f32 %v615, %v2719
      %v2726 = vmul.f32 %v616, %v2720
      %v2727 = vadd.f32 %v2723, %v2725
      %v2728 = vadd.f32 %v2724, %v2726
      %s2729 = scalar_lea.vmem %s12, 16
      %v2730 = vld [vmem:[%s2729] sm:$0xff]
      %2732 = vset.pattern.permute.xlu0 0
      %2733 = vperm.xlu0 %2732, %v2730
      %v2734 = vpop.permute.xlu0 %2733
      %v2736 = vadd.f32 %v2727, %v2734
      %v2737 = vadd.f32 %v2728, %v2734
      %v2738 = vmax.f32 %v2736, 0.0
      %v2739 = vmax.f32 %v2737, 0.0
      %2740 = vst [vmem:[%s567] sm:$0xff] %v2738
      %2741 = vst [vmem:[%s567 + $0x8] sm:$0xff] %v2739
      %v2742 = vld [vmem:[%s13] sm:$0x1]
      %v2743 = vpack.c.bf16 %v2738, %v2738
      %v2744 = vpack.c.bf16 %v2739, %v2739
      %v2745 = vld [vmem:[#allocation3] sm:$0x1]
      %2747 = vset.pattern.permute.xlu0 0
      %2748 = vperm.xlu0 %2747, %v2745
      %v2749 = vpop.permute.xlu0 %2748
      %v2751 = vlaneseq
      %v2752 = vshrl.u32 %v2751, 7
      %v2753 = vsub.s32 0, %v2752
      %v2754 = vrot.slane %v2749, %v2753
      %v2756 = vsel %vm661, %v2742, 0
      %v2759 = vsel %vm665, %v2743, 0
      %v2762 = vsel %vm665, %v2744, 0
      %2764 = vmatprep.subr.bf16.mxu0 0
      %2765 = vmatpush1.bf16.msra.mxu0 0
      %2766 = vmatprep.subr.bf16.mxu0 0
      %2767 = vmatpush1.bf16.msra.mxu0 0
      %2768 = vmatprep.subr.bf16.mxu0 0
      %2769 = vmatpush1.bf16.msra.mxu0 0
      %2770 = vmatprep.subr.bf16.mxu0 0
      %2771 = vmatpush1.bf16.msra.mxu0 0
      %2772 = vmatprep.subr.bf16.mxu0 0
      %2773 = vmatpush1.bf16.msra.mxu0 0
      %2774 = vmatprep.subr.bf16.mxu0 0
      %2775 = vmatpush1.bf16.msra.mxu0 0
      %2776 = vmatprep.subr.bf16.mxu0 0
      %2777 = vmatpush1.bf16.msra.mxu0 0
      %2778 = vmatprep.subr.bf16.mxu0 %v2762
      %2779 = vmatpush1.bf16.msra.mxu0 %v2759
      %2780 = vmatprep.subr.bf16.mxu0 0
      %2781 = vmatpush2.bf16.msra.mxu0 0
      %2782 = vmatprep.subr.bf16.mxu0 0
      %2783 = vmatpush2.bf16.msra.mxu0 0
      %2784 = vmatprep.subr.bf16.mxu0 0
      %2785 = vmatpush2.bf16.msra.mxu0 0
      %2786 = vmatprep.subr.bf16.mxu0 0
      %2787 = vmatpush2.bf16.msra.mxu0 0
      %2788 = vmatprep.subr.bf16.mxu0 0
      %2789 = vmatpush2.bf16.msra.mxu0 0
      %2790 = vmatprep.subr.bf16.mxu0 0
      %2791 = vmatpush2.bf16.msra.mxu0 0
      %2792 = vmatprep.subr.bf16.mxu0 0
      %2793 = vmatpush2.bf16.msra.mxu0 0
      %2794 = vmatprep.subr.bf16.mxu0 0
      %2795 = vmatpush2.bf16.msra.mxu0 0
      %2796 = vmatprep.mubr.bf16.mxu0 0
      %2797 = vmatmul.mubr.bf16.gmra.mxu0 %v2756
      %v2798 = vpop.f32.mrf.mxu0
      %v2799 = vadd.f32 %v2754, %v2798
      %v2800 = vpop.f32.mrf.mxu0
      %v2801 = vadd.f32 %v2754, %v2800
      %v2802 = vpop.f32.mrf.mxu0
      %v2803 = vpop.f32.mrf.mxu0
      %2804 = vdwg.mxu0
      %v2806 = vlaneseq
      %v2807 = vshrl.u32 %v2806, 7
      %v2808 = vsub.s32 0, %v2807
      %v2809 = vrot.slane %v577, %v2808
      %v2810 = vlaneseq
      %v2811 = vshrl.u32 %v2810, 7
      %v2812 = vsub.s32 1, %v2811
      %v2813 = vrot.slane %v577, %v2812
      %v2816 = vadd.f32 %v2799, %v2809
      %v2817 = vadd.f32 %v2801, %v2813
      %v2820 = vcombine.low %v2816, %v2817
      %v2822 = vunpack.c.l.s4 1966171168
      %v2823 = vunpack.c.0.s8 %v2822
      %v2824 = vlaneseq
      %v2825 = vshrl.u32 %v2824, 7
      %v2826 = vsub.s32 %v2823, %v2825
      %v2827 = vrot.slane %v2820, %v2826
      %v2829 = vunpack.c.l.s4 1966171168
      %v2830 = vunpack.c.0.s8 %v2829
      %v2831 = vlaneseq
      %v2832 = vshrl.u32 %v2831, 7
      %v2833 = vsub.s32 %v2830, %v2832
      %v2834 = vrot.slane %v2827, %v2833
      %v2836 = vlaneseq
      %vm2837 = vcmp.ge.s32.totalorder %v2836, 0
      %vm2838 = vcmp.lt.s32.totalorder %v2836, 256
      %vm2839 = vmand %vm2837, %vm2838
      %2840 = vst.msk [vmem:[%s571] sm:$0x3] %vm2839, %v2834
      %p2841 = scmp.lt.s32.totalorder %s30, 1
      %s2842 = scalar_select %p2841, %s30, 1
      %s2843 = smul.addr %s2842, 2
      %s2844 = smul.addr %s2843, 8
      %s2845 = scalar_lea.vmem %s15, %s2844
      %p2846 = scmp.lt.s32.totalorder %s30, 1
      %s2847 = scalar_select %p2846, %s30, 1
      %s2848 = smul.addr %s2847, 2
      %s2849 = scalar_lea.vmem %s16, %s2848
      // Predicated region
      $region81: #{fore_attention_forward.1} parent=79 // pred_check
        %p2850 = pneg %p378
      $region82: #{fore_attention_forward.1} parent=79 // pred_check_branch
        %2852 = sbr.rel (%p2850) target = $region84
      $region83: #{fore_attention_forward.1} parent=79 // pred_region
        _
      $region84: #{fore_attention_forward.1} parent=79 // pred_fallthru
        _
      // Predicated region
      $region85: #{fore_attention_forward.1} parent=79 // pred_check
        %p2853 = pneg %p404
      $region86: #{fore_attention_forward.1} parent=79 // pred_check_branch
        %2855 = sbr.rel (%p2853) target = $region88
      $region87: #{fore_attention_forward.1} parent=79 // pred_region
        _
      $region88: #{fore_attention_forward.1} parent=79 // pred_fallthru
        _
    $region80: #{fore_attention_forward.1} parent=5 // pred_fallthru
      _
    %p2856 = scmp.le.s32.totalorder 2, %s25
    // Predicated region
    $region89: #{fore_attention_forward.1} parent=5 // pred_check
      %p2857 = pneg %p2856
    $region90: #{fore_attention_forward.1} parent=5 // pred_check_branch
      %2859 = sbr.rel (%p2857) target = $region92
    $region91: #{fore_attention_forward.1} parent=5 // pred_region
      %s2860 = ssub.s32 %s25, 2
      // Predicated region
      $region93: #{fore_attention_forward.1} parent=91 // pred_check
        %p2861 = pneg %p384
      $region94: #{fore_attention_forward.1} parent=91 // pred_check_branch
        %2863 = sbr.rel (%p2861) target = $region96
      $region95: #{fore_attention_forward.1} parent=91 // pred_region
        %p2864 = scmp.lt.s32.totalorder %s31, 1
        %s2865 = scalar_select %p2864, %s31, 1
        %s2866 = smul.addr %s2865, 2
        %s2867 = smul.addr %s2866, 8
        %s2868 = scalar_lea.vmem %s15, %s2867
      $region96: #{fore_attention_forward.1} parent=91 // pred_fallthru
        _
      // Predicated region
      $region97: #{fore_attention_forward.1} parent=91 // pred_check
        %p2869 = pneg %p410
      $region98: #{fore_attention_forward.1} parent=91 // pred_check_branch
        %2871 = sbr.rel (%p2869) target = $region100
      $region99: #{fore_attention_forward.1} parent=91 // pred_region
        %p2872 = scmp.lt.s32.totalorder %s31, 1
        %s2873 = scalar_select %p2872, %s31, 1
        %s2874 = smul.addr %s2873, 2
        %s2875 = scalar_lea.vmem %s16, %s2874
      $region100: #{fore_attention_forward.1} parent=91 // pred_fallthru
        _
    $region92: #{fore_attention_forward.1} parent=5 // pred_fallthru
      _
  $region6: #{fore_attention_forward.1} parent=0 // loop_footer
    %s29 = sadd.s32 1, %s25
  $region7: #{fore_attention_forward.1} parent=0 // loop_footer_branch
    %24 = sbr.rel target = $region3
  $region8: #{fore_attention_forward.1} parent=0 // loop_exit
    _

</llo_original>
